<compile_context>
chip_gen: v6e
topology: v6e:2x2x1
jax: 0.10.0
libtpu: 0.0.40
codegen_flags: <defaults>
</compile_context>

<pallas_src>
import jax
import jax.numpy as jnp
from jax.experimental import pallas as pl
from jax.experimental.pallas import tpu as pltpu


INPUT_SIZE = 384     # stand-in for get_feature_vector_size() (128-aligned)
HIDDEN1 = 512
HIDDEN2 = 512
HIDDEN3 = 256
MOVE_SPACE = 256     # stand-in for get_move_space_size() (128-aligned)
VPAD = 128           # value head padded to a full lane group (lane-dense store)
TM_MAX = 128 * 4     # max batch-tile rows per grid step (sweepable 256-1024)


def _giraffe_kernel(x_ref,
                    w1_ref, b1_ref,
                    w2_ref, b2_ref,
                    w3_ref, b3_ref,
                    wh_ref, bh_ref,
                    out_ref):
    """One batch tile: 3 fused Linear+ReLU layers, then a single combined
    head matmul producing [policy_logits | value_logit(+pad)].  Softmax on
    the policy columns, tanh on the value slab, one merged lane-dense store."""
    x = x_ref[...]  # already bf16 (cast in the wrapper)

    # fc1 + relu (bf16 MXU inputs, f32 accumulate, f32 elementwise)
    h = jnp.dot(x, w1_ref[...], preferred_element_type=jnp.float32) + b1_ref[...]
    h = jnp.maximum(h, 0.0)
    # fc2 + relu
    h = jnp.dot(h.astype(jnp.bfloat16), w2_ref[...],
                preferred_element_type=jnp.float32) + b2_ref[...]
    h = jnp.maximum(h, 0.0)
    # fc3 + relu
    h = jnp.dot(h.astype(jnp.bfloat16), w3_ref[...],
                preferred_element_type=jnp.float32) + b3_ref[...]
    h = jnp.maximum(h, 0.0)

    # combined head: one MXU pass -> (TM, MOVE_SPACE + VPAD) logits slab
    logits = jnp.dot(h.astype(jnp.bfloat16), wh_ref[...],
                     preferred_element_type=jnp.float32) + bh_ref[...]

    # policy: numerically-stable softmax over the move columns (exact recip)
    pol = logits[:, :MOVE_SPACE]
    m = jnp.max(pol, axis=1, keepdims=True)
    e = jnp.exp(pol - m)
    denom = jnp.sum(e, axis=1, keepdims=True)
    out_ref[:, :MOVE_SPACE] = e * pl.reciprocal(denom)

    # value: tanh over the padded value slab (column 0 is the real value,
    # padded columns are exactly 0 since their weights/biases are zero).
    out_ref[:, MOVE_SPACE:] = jnp.tanh(logits[:, MOVE_SPACE:])


def _choose_tm(batch):
    """Largest tile (multiple of 128, <= TM_MAX) that keeps >=2 grid steps
    when the batch allows it (megacore sharding on v7x); falls back to 128
    for tiny batches so we don't pad-compute garbage rows."""
    tm = TM_MAX
    while tm > 128 and -(-batch // tm) < 2:
        tm //= 2
    return tm


@jax.jit
def giraffe_forward(x, params):
    """x: (batch, INPUT_SIZE) float32.
    Returns (policy (batch, MOVE_SPACE), value (batch, 1)), both float32."""
    batch = x.shape[0]
    tm = _choose_tm(batch)
    pad = (-batch) % tm

    xp = x.astype(jnp.bfloat16)                       # halve x DMA bytes
    if pad:
        xp = jnp.pad(xp, ((0, pad), (0, 0)))
    padded_batch = xp.shape[0]
    grid = (padded_batch // tm,)

    def row(shape):     # per-batch-tile blocks
        return pl.BlockSpec(shape, lambda i: (i, 0))

    def pinned(shape):  # weights/biases: DMA'd once, resident across the grid
        return pl.BlockSpec(shape, lambda i: (0, 0))

    n_out = MOVE_SPACE + VPAD
    in_specs = [
        row((tm, INPUT_SIZE)),
        pinned((INPUT_SIZE, HIDDEN1)), pinned((1, HIDDEN1)),
        pinned((HIDDEN1, HIDDEN2)),    pinned((1, HIDDEN2)),
        pinned((HIDDEN2, HIDDEN3)),    pinned((1, HIDDEN3)),
        pinned((HIDDEN3, n_out)),      pinned((1, n_out)),
    ]
    out_specs = row((tm, n_out))

    # Advisory cost estimate for XLA's scheduler around the custom call.
    mac = (INPUT_SIZE * HIDDEN1 + HIDDEN1 * HIDDEN2
           + HIDDEN2 * HIDDEN3 + HIDDEN3 * n_out)
    weight_bytes = 2 * mac                                # bf16 weights
    bias_bytes = 4 * (HIDDEN1 + HIDDEN2 + HIDDEN3 + n_out)
    cost = pl.CostEstimate(
        flops=2 * mac * padded_batch,
        transcendentals=padded_batch * (MOVE_SPACE + VPAD + 1),
        bytes_accessed=(weight_bytes + bias_bytes
                        + padded_batch * INPUT_SIZE * 2   # bf16 x
                        + padded_batch * n_out * 4),      # f32 merged output
    )

    out = pl.pallas_call(
        _giraffe_kernel,
        grid=grid,
        in_specs=in_specs,
        out_specs=out_specs,
        out_shape=jax.ShapeDtypeStruct((padded_batch, n_out), jnp.float32),
        compiler_params=pltpu.CompilerParams(
            dimension_semantics=("parallel",),
            vmem_limit_bytes=32 << 20,
        ),
        cost_estimate=cost,
    )(xp,
      params["w1"], params["b1"],
      params["w2"], params["b2"],
      params["w3"], params["b3"],
      params["wh"], params["bh"])

    policy = out[:batch, :MOVE_SPACE]
    value = out[:batch, MOVE_SPACE:MOVE_SPACE + 1]
    return policy, value


def init_params(key):
    """Deterministic init mimicking PyTorch nn.Linear default
    U(-1/sqrt(fan_in), 1/sqrt(fan_in)).  Weights stored as (in, out) bf16;
    biases as (1, out) f32.  Policy and value heads are concatenated into one
    (HIDDEN3, MOVE_SPACE + VPAD) matrix (value weight in column MOVE_SPACE,
    remaining padded columns zero)."""
    def linear(k, fan_in, fan_out):
        kw, kb = jax.random.split(k)
        bound = 1.0 / jnp.sqrt(float(fan_in))
        w = jax.random.uniform(kw, (fan_in, fan_out), jnp.float32, -bound, bound)
        b = jax.random.uniform(kb, (1, fan_out), jnp.float32, -bound, bound)
        return w, b

    k1, k2, k3, k4, k5 = jax.random.split(key, 5)
    w1, b1 = linear(k1, INPUT_SIZE, HIDDEN1)
    w2, b2 = linear(k2, HIDDEN1, HIDDEN2)
    w3, b3 = linear(k3, HIDDEN2, HIDDEN3)
    wp, bp = linear(k4, HIDDEN3, MOVE_SPACE)
    wv, bv = linear(k5, HIDDEN3, 1)

    # Fuse heads: [policy | value, zero-padded to VPAD lanes].
    wv_pad = jnp.pad(wv, ((0, 0), (0, VPAD - 1)))
    bv_pad = jnp.pad(bv, ((0, 0), (0, VPAD - 1)))
    wh = jnp.concatenate([wp, wv_pad], axis=1)
    bh = jnp.concatenate([bp, bv_pad], axis=1)

    return dict(
        w1=w1.astype(jnp.bfloat16), b1=b1,
        w2=w2.astype(jnp.bfloat16), b2=b2,
        w3=w3.astype(jnp.bfloat16), b3=b3,
        wh=wh.astype(jnp.bfloat16), bh=bh,
    )


def _reference_forward(x, p):
    """Plain-JAX reference (f32 math on the same bf16-quantized weights/input)."""
    xb = x.astype(jnp.bfloat16).astype(jnp.float32)
    w1 = p["w1"].astype(jnp.float32)
    w2 = p["w2"].astype(jnp.float32)
    w3 = p["w3"].astype(jnp.float32)
    wh = p["wh"].astype(jnp.float32)
    h = jnp.maximum(xb @ w1 + p["b1"], 0.0)
    h = jnp.maximum(h @ w2 + p["b2"], 0.0)
    h = jnp.maximum(h @ w3 + p["b3"], 0.0)
    logits = h @ wh + p["bh"]
    policy = jax.nn.softmax(logits[:, :MOVE_SPACE], axis=1)
    value = jnp.tanh(logits[:, MOVE_SPACE:MOVE_SPACE + 1])
    return policy, value


if __name__ == "__main__":
    key = jax.random.PRNGKey(0)
    k_params, k_x = jax.random.split(key)
    params = init_params(k_params)

    batch = 2
    x = jax.random.normal(k_x, (batch, INPUT_SIZE), jnp.float32)

    policy, value = giraffe_forward(x, params)
    policy, value = jax.block_until_ready((policy, value))

    ref_policy, ref_value = _reference_forward(x, params)
    assert policy.shape == (batch, MOVE_SPACE)
    assert value.shape == (batch, 1)
    # bf16 matmul inputs -> tolerances loosened vs. a pure-f32 network.
    assert jnp.allclose(jnp.sum(policy, axis=1), 1.0, atol=1e-3)
    assert jnp.allclose(policy, ref_policy, rtol=5e-2, atol=2e-3)
    assert jnp.allclose(value, ref_value, rtol=5e-2, atol=2e-2)

    print("KERNEL_OK")
</pallas_src>

<mosaic_0001>
module attributes {stable_mosaic.version = 11 : i64} {
  func.func @_giraffe_kernel(%arg0: i32, %arg1: memref<128x384xbf16, #tpu.memory_space<vmem>>, %arg2: memref<384x512xbf16, #tpu.memory_space<vmem>>, %arg3: memref<1x512xf32, #tpu.memory_space<vmem>>, %arg4: memref<512x512xbf16, #tpu.memory_space<vmem>>, %arg5: memref<1x512xf32, #tpu.memory_space<vmem>>, %arg6: memref<512x256xbf16, #tpu.memory_space<vmem>>, %arg7: memref<1x256xf32, #tpu.memory_space<vmem>>, %arg8: memref<256x384xbf16, #tpu.memory_space<vmem>>, %arg9: memref<1x384xf32, #tpu.memory_space<vmem>>, %arg10: memref<128x384xf32, #tpu.memory_space<vmem>>) attributes {dimension_semantics = [#tpu.dimension_semantics<parallel>], iteration_bounds = array<i64: 1>, scalar_prefetch = 0 : i64, scratch_operands = 0 : i64, tpu.core_type = #tpu.core_type<tc>, window_params = [{transform_indices = @transform_0, window_bounds = array<i64: 128, 384>}, {pipeline_mode = #tpu.pipeline_mode<synchronous>, transform_indices = @transform_1, window_bounds = array<i64: 384, 512>}, {pipeline_mode = #tpu.pipeline_mode<synchronous>, transform_indices = @transform_2, window_bounds = array<i64: 1, 512>}, {pipeline_mode = #tpu.pipeline_mode<synchronous>, transform_indices = @transform_3, window_bounds = array<i64: 512, 512>}, {pipeline_mode = #tpu.pipeline_mode<synchronous>, transform_indices = @transform_4, window_bounds = array<i64: 1, 512>}, {pipeline_mode = #tpu.pipeline_mode<synchronous>, transform_indices = @transform_5, window_bounds = array<i64: 512, 256>}, {pipeline_mode = #tpu.pipeline_mode<synchronous>, transform_indices = @transform_6, window_bounds = array<i64: 1, 256>}, {pipeline_mode = #tpu.pipeline_mode<synchronous>, transform_indices = @transform_7, window_bounds = array<i64: 256, 384>}, {pipeline_mode = #tpu.pipeline_mode<synchronous>, transform_indices = @transform_8, window_bounds = array<i64: 1, 384>}, {transform_indices = @transform_9, window_bounds = array<i64: 128, 384>}]} {
    %c0 = arith.constant 0 : index
    %c0_0 = arith.constant 0 : index
    %0 = vector.load %arg1[%c0, %c0_0] : memref<128x384xbf16, #tpu.memory_space<vmem>>, vector<128x384xbf16>
    %c0_1 = arith.constant 0 : index
    %c0_2 = arith.constant 0 : index
    %1 = vector.load %arg2[%c0_1, %c0_2] : memref<384x512xbf16, #tpu.memory_space<vmem>>, vector<384x512xbf16>
    %cst = arith.constant dense<0.000000e+00> : vector<128x512xf32>
    %2 = tpu.matmul %0, %1, %cst {dimension_numbers = #tpu.dot_dimension_numbers<[1], [0], [0], [1], [0, 0, 1, 1], [], []>} : vector<128x384xbf16>, vector<384x512xbf16>, vector<128x512xf32> -> vector<128x512xf32>
    %c0_3 = arith.constant 0 : index
    %c0_4 = arith.constant 0 : index
    %3 = vector.load %arg3[%c0_3, %c0_4] : memref<1x512xf32, #tpu.memory_space<vmem>>, vector<1x512xf32>
    %4 = vector.broadcast %3 : vector<1x512xf32> to vector<128x512xf32>
    %5 = arith.addf %2, %4 : vector<128x512xf32>
    %cst_5 = arith.constant 0.000000e+00 : f32
    %6 = vector.broadcast %cst_5 : f32 to vector<128x512xf32>
    %7 = arith.maximumf %5, %6 : vector<128x512xf32>
    %8 = arith.truncf %7 : vector<128x512xf32> to vector<128x512xbf16>
    %c0_6 = arith.constant 0 : index
    %c0_7 = arith.constant 0 : index
    %9 = vector.load %arg4[%c0_6, %c0_7] : memref<512x512xbf16, #tpu.memory_space<vmem>>, vector<512x512xbf16>
    %cst_8 = arith.constant dense<0.000000e+00> : vector<128x512xf32>
    %10 = tpu.matmul %8, %9, %cst_8 {dimension_numbers = #tpu.dot_dimension_numbers<[1], [0], [0], [1], [0, 0, 1, 1], [], []>} : vector<128x512xbf16>, vector<512x512xbf16>, vector<128x512xf32> -> vector<128x512xf32>
    %c0_9 = arith.constant 0 : index
    %c0_10 = arith.constant 0 : index
    %11 = vector.load %arg5[%c0_9, %c0_10] : memref<1x512xf32, #tpu.memory_space<vmem>>, vector<1x512xf32>
    %12 = vector.broadcast %11 : vector<1x512xf32> to vector<128x512xf32>
    %13 = arith.addf %10, %12 : vector<128x512xf32>
    %cst_11 = arith.constant 0.000000e+00 : f32
    %14 = vector.broadcast %cst_11 : f32 to vector<128x512xf32>
    %15 = arith.maximumf %13, %14 : vector<128x512xf32>
    %16 = arith.truncf %15 : vector<128x512xf32> to vector<128x512xbf16>
    %c0_12 = arith.constant 0 : index
    %c0_13 = arith.constant 0 : index
    %17 = vector.load %arg6[%c0_12, %c0_13] : memref<512x256xbf16, #tpu.memory_space<vmem>>, vector<512x256xbf16>
    %cst_14 = arith.constant dense<0.000000e+00> : vector<128x256xf32>
    %18 = tpu.matmul %16, %17, %cst_14 {dimension_numbers = #tpu.dot_dimension_numbers<[1], [0], [0], [1], [0, 0, 1, 1], [], []>} : vector<128x512xbf16>, vector<512x256xbf16>, vector<128x256xf32> -> vector<128x256xf32>
    %c0_15 = arith.constant 0 : index
    %c0_16 = arith.constant 0 : index
    %19 = vector.load %arg7[%c0_15, %c0_16] : memref<1x256xf32, #tpu.memory_space<vmem>>, vector<1x256xf32>
    %20 = vector.broadcast %19 : vector<1x256xf32> to vector<128x256xf32>
    %21 = arith.addf %18, %20 : vector<128x256xf32>
    %cst_17 = arith.constant 0.000000e+00 : f32
    %22 = vector.broadcast %cst_17 : f32 to vector<128x256xf32>
    %23 = arith.maximumf %21, %22 : vector<128x256xf32>
    %24 = arith.truncf %23 : vector<128x256xf32> to vector<128x256xbf16>
    %c0_18 = arith.constant 0 : index
    %c0_19 = arith.constant 0 : index
    %25 = vector.load %arg8[%c0_18, %c0_19] : memref<256x384xbf16, #tpu.memory_space<vmem>>, vector<256x384xbf16>
    %cst_20 = arith.constant dense<0.000000e+00> : vector<128x384xf32>
    %26 = tpu.matmul %24, %25, %cst_20 {dimension_numbers = #tpu.dot_dimension_numbers<[1], [0], [0], [1], [0, 0, 1, 1], [], []>} : vector<128x256xbf16>, vector<256x384xbf16>, vector<128x384xf32> -> vector<128x384xf32>
    %c0_21 = arith.constant 0 : index
    %c0_22 = arith.constant 0 : index
    %27 = vector.load %arg9[%c0_21, %c0_22] : memref<1x384xf32, #tpu.memory_space<vmem>>, vector<1x384xf32>
    %28 = vector.broadcast %27 : vector<1x384xf32> to vector<128x384xf32>
    %29 = arith.addf %26, %28 : vector<128x384xf32>
    %30 = vector.extract_strided_slice %29 {offsets = [0, 0], sizes = [128, 256], strides = [1, 1]} : vector<128x384xf32> to vector<128x256xf32>
    %cst_23 = arith.constant dense<0xFF800000> : vector<128xf32>
    %31 = vector.multi_reduction <maximumf>, %30, %cst_23 [1] : vector<128x256xf32> to vector<128xf32>
    %32 = vector.shape_cast %31 : vector<128xf32> to vector<128x1xf32>
    %33 = vector.broadcast %32 : vector<128x1xf32> to vector<128x256xf32>
    %34 = arith.subf %30, %33 : vector<128x256xf32>
    %35 = math.exp %34 : vector<128x256xf32>
    %cst_24 = arith.constant dense<0.000000e+00> : vector<128xf32>
    %36 = vector.multi_reduction <add>, %35, %cst_24 [1] : vector<128x256xf32> to vector<128xf32>
    %37 = vector.shape_cast %36 : vector<128xf32> to vector<128x1xf32>
    %38 = tpu.reciprocal %37 : vector<128x1xf32> -> vector<128x1xf32>
    %39 = vector.broadcast %38 : vector<128x1xf32> to vector<128x256xf32>
    %40 = arith.mulf %35, %39 : vector<128x256xf32>
    %c0_25 = arith.constant 0 : index
    %c0_26 = arith.constant 0 : index
    %41 = vector.load %arg10[%c0_25, %c0_26] : memref<128x384xf32, #tpu.memory_space<vmem>>, vector<128x256xf32>
    tpu.vector_store %arg10[%c0_25, %c0_26], %40 {strides = array<i32>} : memref<128x384xf32, #tpu.memory_space<vmem>>, vector<128x256xf32>,
    %42 = vector.extract_strided_slice %29 {offsets = [0, 256], sizes = [128, 128], strides = [1, 1]} : vector<128x384xf32> to vector<128x128xf32>
    %43 = math.tanh %42 : vector<128x128xf32>
    %c0_27 = arith.constant 0 : index
    %c256 = arith.constant 256 : index
    %44 = vector.load %arg10[%c0_27, %c256] : memref<128x384xf32, #tpu.memory_space<vmem>>, vector<128x128xf32>
    tpu.vector_store %arg10[%c0_27, %c256], %43 {strides = array<i32>} : memref<128x384xf32, #tpu.memory_space<vmem>>, vector<128x128xf32>,
    return
  }
  func.func @transform_0(%arg0: i32) -> (i32, i32) {
    %c0_i32 = arith.constant 0 : i32
    %c0_i32_0 = arith.constant 0 : i32
    return %arg0, %c0_i32 : i32, i32
  }
  func.func @transform_1(%arg0: i32) -> (i32, i32) {
    %c0_i32 = arith.constant 0 : i32
    %c0_i32_0 = arith.constant 0 : i32
    %c0_i32_1 = arith.constant 0 : i32
    return %c0_i32, %c0_i32_0 : i32, i32
  }
  func.func @transform_2(%arg0: i32) -> (i32, i32) {
    %c0_i32 = arith.constant 0 : i32
    %c0_i32_0 = arith.constant 0 : i32
    %c0_i32_1 = arith.constant 0 : i32
    return %c0_i32, %c0_i32_0 : i32, i32
  }
  func.func @transform_3(%arg0: i32) -> (i32, i32) {
    %c0_i32 = arith.constant 0 : i32
    %c0_i32_0 = arith.constant 0 : i32
    %c0_i32_1 = arith.constant 0 : i32
    return %c0_i32, %c0_i32_0 : i32, i32
  }
  func.func @transform_4(%arg0: i32) -> (i32, i32) {
    %c0_i32 = arith.constant 0 : i32
    %c0_i32_0 = arith.constant 0 : i32
    %c0_i32_1 = arith.constant 0 : i32
    return %c0_i32, %c0_i32_0 : i32, i32
  }
  func.func @transform_5(%arg0: i32) -> (i32, i32) {
    %c0_i32 = arith.constant 0 : i32
    %c0_i32_0 = arith.constant 0 : i32
    %c0_i32_1 = arith.constant 0 : i32
    return %c0_i32, %c0_i32_0 : i32, i32
  }
  func.func @transform_6(%arg0: i32) -> (i32, i32) {
    %c0_i32 = arith.constant 0 : i32
    %c0_i32_0 = arith.constant 0 : i32
    %c0_i32_1 = arith.constant 0 : i32
    return %c0_i32, %c0_i32_0 : i32, i32
  }
  func.func @transform_7(%arg0: i32) -> (i32, i32) {
    %c0_i32 = arith.constant 0 : i32
    %c0_i32_0 = arith.constant 0 : i32
    %c0_i32_1 = arith.constant 0 : i32
    return %c0_i32, %c0_i32_0 : i32, i32
  }
  func.func @transform_8(%arg0: i32) -> (i32, i32) {
    %c0_i32 = arith.constant 0 : i32
    %c0_i32_0 = arith.constant 0 : i32
    %c0_i32_1 = arith.constant 0 : i32
    return %c0_i32, %c0_i32_0 : i32, i32
  }
  func.func @transform_9(%arg0: i32) -> (i32, i32) {
    %c0_i32 = arith.constant 0 : i32
    %c0_i32_0 = arith.constant 0 : i32
    return %arg0, %c0_i32 : i32, i32
  }
}

</mosaic_0001>

<llo_original>
// kernel: giraffe_forward.1
$region0: #{giraffe_forward.1}
  #allocation0 [shape = 'u32[]', space=smem, size = 0x4, offset = 0x4, fixed_abs, tag = 'smem constant byte address 0x4 - core index']
  #allocation1 [shape = 'u32[144,128]{1,0:T(1,128)}', space=vmem, size = 0x12000, scoped, tag = 'internal scratch']
  %s0 = inlined_call_operand.vmem [shape: bf16[128,384], index: 0, kind: input, shape index: {}]
  %s1 = inlined_call_operand.hbm [shape: bf16[384,512], index: 1, kind: input, shape index: {}]
  %s2 = inlined_call_operand.vmem [shape: f32[1,512], index: 2, kind: input, shape index: {}]
  %s3 = inlined_call_operand.hbm [shape: bf16[512,512], index: 3, kind: input, shape index: {}]
  %s4 = inlined_call_operand.vmem [shape: f32[1,512], index: 4, kind: input, shape index: {}]
  %s5 = inlined_call_operand.hbm [shape: bf16[512,256], index: 5, kind: input, shape index: {}]
  %s6 = inlined_call_operand.vmem [shape: f32[1,256], index: 6, kind: input, shape index: {}]
  %s7 = inlined_call_operand.hbm [shape: bf16[256,384], index: 7, kind: input, shape index: {}]
  %s8 = inlined_call_operand.vmem [shape: f32[1,384], index: 8, kind: input, shape index: {}]
  %s9 = inlined_call_operand.vmem [shape: f32[128,384], index: 9, kind: output, shape index: {}]
  %s10 = sld [smem:[#allocation0]]
  $region62: #{giraffe_forward.1} parent=0
    _
  %s12 = ssub.s32 1, %s10
  %s13 = scalar_select 0, %s12, %s10
  $region1: #{giraffe_forward.1} parent=0
    #allocation2 [shape = 'u8[393216]{0}', space=vmem, size = 0x60000, scoped, tag = 'input window, operand 1, single buffered']
    #allocation3 [shape = 's32[1]{0}', space=sflag, size = 0x4, scoped, tag = 'scoped memory for giraffe_forward.1']
    #allocation4 [shape = 'u8[524288]{0}', space=vmem, size = 0x80000, scoped, tag = 'input window, operand 3, single buffered']
    #allocation5 [shape = 's32[1]{0}', space=sflag, size = 0x4, scoped, tag = 'scoped memory for giraffe_forward.1']
    #allocation6 [shape = 'u8[262144]{0}', space=vmem, size = 0x40000, scoped, tag = 'input window, operand 5, single buffered']
    #allocation7 [shape = 'u8[196608]{0}', space=vmem, size = 0x30000, scoped, tag = 'input window, operand 7, single buffered']
    #allocation8 [shape = 's32[1]{0}', space=sflag, size = 0x4, scoped, tag = 'scoped memory for giraffe_forward.1']
    %14 = vsyncpa [#allocation3], 0
    %15 = vsyncpa [#allocation5], 0
    %16 = vsyncpa [#allocation8], 0
    // Predicated region
    $region2: #{giraffe_forward.1} parent=1 // pred_check
      _
    $region3: #{giraffe_forward.1} parent=1 // pred_check_branch
      %18 = sbr.rel (0) target = $region5
    $region4: #{giraffe_forward.1} parent=1 // pred_region
      _
    $region5: #{giraffe_forward.1} parent=1 // pred_fallthru
      _
    // Predicated region
    $region6: #{giraffe_forward.1} parent=1 // pred_check
      _
    $region7: #{giraffe_forward.1} parent=1 // pred_check_branch
      %20 = sbr.rel (0) target = $region9
    $region8: #{giraffe_forward.1} parent=1 // pred_region
      %s22 = ssub.s32 12288, 12288
      %23 = vsyncadd [#allocation3], %s22
      %s24 = sshll.u32 [#allocation2], 4
      %s25 = int_to_ptr.vmem [resolvable:$true] %s24
      %30 = dma.hbm_to_vmem [thread:$0]  %s1, 12288, %s25, [#allocation3], 256, 256, 16
    $region9: #{giraffe_forward.1} parent=1 // pred_fallthru
      _
    // Predicated region
    $region10: #{giraffe_forward.1} parent=1 // pred_check
      _
    $region11: #{giraffe_forward.1} parent=1 // pred_check_branch
      %32 = sbr.rel (0) target = $region13
    $region12: #{giraffe_forward.1} parent=1 // pred_region
      _
    $region13: #{giraffe_forward.1} parent=1 // pred_fallthru
      _
    // Predicated region
    $region14: #{giraffe_forward.1} parent=1 // pred_check
      _
    $region15: #{giraffe_forward.1} parent=1 // pred_check_branch
      %34 = sbr.rel (0) target = $region17
    $region16: #{giraffe_forward.1} parent=1 // pred_region
      %s36 = ssub.s32 16384, 16384
      %37 = vsyncadd [#allocation5], %s36
      %s38 = sshll.u32 [#allocation4], 4
      %s39 = int_to_ptr.vmem [resolvable:$true] %s38
      %44 = dma.hbm_to_vmem [thread:$0]  %s3, 16384, %s39, [#allocation5], 256, 256, 16
    $region17: #{giraffe_forward.1} parent=1 // pred_fallthru
      _
    // Predicated region
    $region18: #{giraffe_forward.1} parent=1 // pred_check
      _
    $region19: #{giraffe_forward.1} parent=1 // pred_check_branch
      %46 = sbr.rel (0) target = $region21
    $region20: #{giraffe_forward.1} parent=1 // pred_region
      _
    $region21: #{giraffe_forward.1} parent=1 // pred_fallthru
      _
    // Predicated region
    $region22: #{giraffe_forward.1} parent=1 // pred_check
      _
    $region23: #{giraffe_forward.1} parent=1 // pred_check_branch
      %48 = sbr.rel (0) target = $region25
    $region24: #{giraffe_forward.1} parent=1 // pred_region
      %s50 = ssub.s32 8192, 8192
      %51 = vsyncadd [#allocation5], %s50
      %s52 = sshll.u32 [#allocation6], 4
      %s53 = int_to_ptr.vmem [resolvable:$true] %s52
      %58 = dma.hbm_to_vmem [thread:$0]  %s5, 8192, %s53, [#allocation5], 128, 128, 8
    $region25: #{giraffe_forward.1} parent=1 // pred_fallthru
      _
    // Predicated region
    $region26: #{giraffe_forward.1} parent=1 // pred_check
      _
    $region27: #{giraffe_forward.1} parent=1 // pred_check_branch
      %60 = sbr.rel (0) target = $region29
    $region28: #{giraffe_forward.1} parent=1 // pred_region
      _
    $region29: #{giraffe_forward.1} parent=1 // pred_fallthru
      _
    // Predicated region
    $region30: #{giraffe_forward.1} parent=1 // pred_check
      _
    $region31: #{giraffe_forward.1} parent=1 // pred_check_branch
      %62 = sbr.rel (0) target = $region33
    $region32: #{giraffe_forward.1} parent=1 // pred_region
      %s64 = ssub.s32 6144, 6144
      %65 = vsyncadd [#allocation8], %s64
      %s66 = sshll.u32 [#allocation7], 4
      %s67 = int_to_ptr.vmem [resolvable:$true] %s66
      %72 = dma.hbm_to_vmem [thread:$0]  %s7, 6144, %s67, [#allocation8], 192, 192, 12
    $region33: #{giraffe_forward.1} parent=1 // pred_fallthru
      _
    // Predicated region
    $region34: #{giraffe_forward.1} parent=1 // pred_check
      _
    $region35: #{giraffe_forward.1} parent=1 // pred_check_branch
      %74 = sbr.rel (0) target = $region37
    $region36: #{giraffe_forward.1} parent=1 // pred_region
      _
    $region37: #{giraffe_forward.1} parent=1 // pred_fallthru
      _
    // Predicated region
    $region38: #{giraffe_forward.1} parent=1 // pred_check
      _
    $region39: #{giraffe_forward.1} parent=1 // pred_check_branch
      %76 = sbr.rel (0) target = $region41
    $region40: #{giraffe_forward.1} parent=1 // pred_region
      %77 = dma.done [#allocation3], 12288
    $region41: #{giraffe_forward.1} parent=1 // pred_fallthru
      _
    // Predicated region
    $region42: #{giraffe_forward.1} parent=1 // pred_check
      _
    $region43: #{giraffe_forward.1} parent=1 // pred_check_branch
      %79 = sbr.rel (0) target = $region45
    $region44: #{giraffe_forward.1} parent=1 // pred_region
      %80 = dma.done [#allocation5], 16384
    $region45: #{giraffe_forward.1} parent=1 // pred_fallthru
      _
    // Predicated region
    $region46: #{giraffe_forward.1} parent=1 // pred_check
      _
    $region47: #{giraffe_forward.1} parent=1 // pred_check_branch
      %82 = sbr.rel (0) target = $region49
    $region48: #{giraffe_forward.1} parent=1 // pred_region
      %83 = dma.done [#allocation5], 8192
    $region49: #{giraffe_forward.1} parent=1 // pred_fallthru
      _
    // Predicated region
    $region50: #{giraffe_forward.1} parent=1 // pred_check
      _
    $region51: #{giraffe_forward.1} parent=1 // pred_check_branch
      %85 = sbr.rel (0) target = $region53
    $region52: #{giraffe_forward.1} parent=1 // pred_region
      %86 = dma.done [#allocation8], 6144
    $region53: #{giraffe_forward.1} parent=1 // pred_fallthru
      _
    %v88 = vld [vmem:[%s0] sm:$0xff]
    %v89 = vld [vmem:[%s0 + $0x8] sm:$0xf]
    %v90 = vld [vmem:[%s0 + $0xc] sm:$0xff]
    %v91 = vld [vmem:[%s0 + $0x14] sm:$0xf]
    %v92 = vld [vmem:[%s0 + $0x18] sm:$0xff]
    %v93 = vld [vmem:[%s0 + $0x20] sm:$0xf]
    %v94 = vld [vmem:[%s0 + $0x24] sm:$0xff]
    %v95 = vld [vmem:[%s0 + $0x2c] sm:$0xf]
    %v96 = vld [vmem:[%s0 + $0x30] sm:$0xff]
    %v97 = vld [vmem:[%s0 + $0x38] sm:$0xf]
    %v98 = vld [vmem:[%s0 + $0x3c] sm:$0xff]
    %v99 = vld [vmem:[%s0 + $0x44] sm:$0xf]
    %v100 = vld [vmem:[%s0 + $0x48] sm:$0xff]
    %v101 = vld [vmem:[%s0 + $0x50] sm:$0xf]
    %v102 = vld [vmem:[%s0 + $0x54] sm:$0xff]
    %v103 = vld [vmem:[%s0 + $0x5c] sm:$0xf]
    %v104 = vld [vmem:[%s0 + $0x60] sm:$0xff]
    %v105 = vld [vmem:[%s0 + $0x68] sm:$0xf]
    %v106 = vld [vmem:[%s0 + $0x6c] sm:$0xff]
    %v107 = vld [vmem:[%s0 + $0x74] sm:$0xf]
    %v108 = vld [vmem:[%s0 + $0x78] sm:$0xff]
    %v109 = vld [vmem:[%s0 + $0x80] sm:$0xf]
    %v110 = vld [vmem:[%s0 + $0x84] sm:$0xff]
    %v111 = vld [vmem:[%s0 + $0x8c] sm:$0xf]
    %v112 = vld [vmem:[%s0 + $0x90] sm:$0xff]
    %v113 = vld [vmem:[%s0 + $0x98] sm:$0xf]
    %v114 = vld [vmem:[%s0 + $0x9c] sm:$0xff]
    %v115 = vld [vmem:[%s0 + $0xa4] sm:$0xf]
    %v116 = vld [vmem:[%s0 + $0xa8] sm:$0xff]
    %v117 = vld [vmem:[%s0 + $0xb0] sm:$0xf]
    %v118 = vld [vmem:[%s0 + $0xb4] sm:$0xff]
    %v119 = vld [vmem:[%s0 + $0xbc] sm:$0xf]
    %v120 = vld [vmem:[#allocation2] sm:$0xff]
    %v121 = vld [vmem:[#allocation2 + $0x8] sm:$0xff]
    %v122 = vld [vmem:[#allocation2 + $0x10] sm:$0xff]
    %v123 = vld [vmem:[#allocation2 + $0x18] sm:$0xff]
    %v124 = vld [vmem:[#allocation2 + $0x20] sm:$0xff]
    %v125 = vld [vmem:[#allocation2 + $0x28] sm:$0xff]
    %v126 = vld [vmem:[#allocation2 + $0x30] sm:$0xff]
    %v127 = vld [vmem:[#allocation2 + $0x38] sm:$0xff]
    %v128 = vld [vmem:[#allocation2 + $0x40] sm:$0xff]
    %v129 = vld [vmem:[#allocation2 + $0x48] sm:$0xff]
    %v130 = vld [vmem:[#allocation2 + $0x50] sm:$0xff]
    %v131 = vld [vmem:[#allocation2 + $0x58] sm:$0xff]
    %v132 = vld [vmem:[#allocation2 + $0x60] sm:$0xff]
    %v133 = vld [vmem:[#allocation2 + $0x68] sm:$0xff]
    %v134 = vld [vmem:[#allocation2 + $0x70] sm:$0xff]
    %v135 = vld [vmem:[#allocation2 + $0x78] sm:$0xff]
    %v136 = vld [vmem:[#allocation2 + $0x80] sm:$0xff]
    %v137 = vld [vmem:[#allocation2 + $0x88] sm:$0xff]
    %v138 = vld [vmem:[#allocation2 + $0x90] sm:$0xff]
    %v139 = vld [vmem:[#allocation2 + $0x98] sm:$0xff]
    %v140 = vld [vmem:[#allocation2 + $0xa0] sm:$0xff]
    %v141 = vld [vmem:[#allocation2 + $0xa8] sm:$0xff]
    %v142 = vld [vmem:[#allocation2 + $0xb0] sm:$0xff]
    %v143 = vld [vmem:[#allocation2 + $0xb8] sm:$0xff]
    %v144 = vld [vmem:[#allocation2 + $0xc0] sm:$0xff]
    %v145 = vld [vmem:[#allocation2 + $0xc8] sm:$0xff]
    %v146 = vld [vmem:[#allocation2 + $0xd0] sm:$0xff]
    %v147 = vld [vmem:[#allocation2 + $0xd8] sm:$0xff]
    %v148 = vld [vmem:[#allocation2 + $0xe0] sm:$0xff]
    %v149 = vld [vmem:[#allocation2 + $0xe8] sm:$0xff]
    %v150 = vld [vmem:[#allocation2 + $0xf0] sm:$0xff]
    %v151 = vld [vmem:[#allocation2 + $0xf8] sm:$0xff]
    %v152 = vld [vmem:[#allocation2 + $0x100] sm:$0xff]
    %v153 = vld [vmem:[#allocation2 + $0x108] sm:$0xff]
    %v154 = vld [vmem:[#allocation2 + $0x110] sm:$0xff]
    %v155 = vld [vmem:[#allocation2 + $0x118] sm:$0xff]
    %v156 = vld [vmem:[#allocation2 + $0x120] sm:$0xff]
    %v157 = vld [vmem:[#allocation2 + $0x128] sm:$0xff]
    %v158 = vld [vmem:[#allocation2 + $0x130] sm:$0xff]
    %v159 = vld [vmem:[#allocation2 + $0x138] sm:$0xff]
    %v160 = vld [vmem:[#allocation2 + $0x140] sm:$0xff]
    %v161 = vld [vmem:[#allocation2 + $0x148] sm:$0xff]
    %v162 = vld [vmem:[#allocation2 + $0x150] sm:$0xff]
    %v163 = vld [vmem:[#allocation2 + $0x158] sm:$0xff]
    %v164 = vld [vmem:[#allocation2 + $0x160] sm:$0xff]
    %v165 = vld [vmem:[#allocation2 + $0x168] sm:$0xff]
    %v166 = vld [vmem:[#allocation2 + $0x170] sm:$0xff]
    %v167 = vld [vmem:[#allocation2 + $0x178] sm:$0xff]
    %v168 = vld [vmem:[#allocation2 + $0x180] sm:$0xff]
    %v169 = vld [vmem:[#allocation2 + $0x188] sm:$0xff]
    %v170 = vld [vmem:[#allocation2 + $0x190] sm:$0xff]
    %v171 = vld [vmem:[#allocation2 + $0x198] sm:$0xff]
    %v172 = vld [vmem:[#allocation2 + $0x1a0] sm:$0xff]
    %v173 = vld [vmem:[#allocation2 + $0x1a8] sm:$0xff]
    %v174 = vld [vmem:[#allocation2 + $0x1b0] sm:$0xff]
    %v175 = vld [vmem:[#allocation2 + $0x1b8] sm:$0xff]
    %v176 = vld [vmem:[#allocation2 + $0x1c0] sm:$0xff]
    %v177 = vld [vmem:[#allocation2 + $0x1c8] sm:$0xff]
    %v178 = vld [vmem:[#allocation2 + $0x1d0] sm:$0xff]
    %v179 = vld [vmem:[#allocation2 + $0x1d8] sm:$0xff]
    %v180 = vld [vmem:[#allocation2 + $0x1e0] sm:$0xff]
    %v181 = vld [vmem:[#allocation2 + $0x1e8] sm:$0xff]
    %v182 = vld [vmem:[#allocation2 + $0x1f0] sm:$0xff]
    %v183 = vld [vmem:[#allocation2 + $0x1f8] sm:$0xff]
    %v184 = vld [vmem:[#allocation2 + $0x200] sm:$0xff]
    %v185 = vld [vmem:[#allocation2 + $0x208] sm:$0xff]
    %v186 = vld [vmem:[#allocation2 + $0x210] sm:$0xff]
    %v187 = vld [vmem:[#allocation2 + $0x218] sm:$0xff]
    %v188 = vld [vmem:[#allocation2 + $0x220] sm:$0xff]
    %v189 = vld [vmem:[#allocation2 + $0x228] sm:$0xff]
    %v190 = vld [vmem:[#allocation2 + $0x230] sm:$0xff]
    %v191 = vld [vmem:[#allocation2 + $0x238] sm:$0xff]
    %v192 = vld [vmem:[#allocation2 + $0x240] sm:$0xff]
    %v193 = vld [vmem:[#allocation2 + $0x248] sm:$0xff]
    %v194 = vld [vmem:[#allocation2 + $0x250] sm:$0xff]
    %v195 = vld [vmem:[#allocation2 + $0x258] sm:$0xff]
    %v196 = vld [vmem:[#allocation2 + $0x260] sm:$0xff]
    %v197 = vld [vmem:[#allocation2 + $0x268] sm:$0xff]
    %v198 = vld [vmem:[#allocation2 + $0x270] sm:$0xff]
    %v199 = vld [vmem:[#allocation2 + $0x278] sm:$0xff]
    %v200 = vld [vmem:[#allocation2 + $0x280] sm:$0xff]
    %v201 = vld [vmem:[#allocation2 + $0x288] sm:$0xff]
    %v202 = vld [vmem:[#allocation2 + $0x290] sm:$0xff]
    %v203 = vld [vmem:[#allocation2 + $0x298] sm:$0xff]
    %v204 = vld [vmem:[#allocation2 + $0x2a0] sm:$0xff]
    %v205 = vld [vmem:[#allocation2 + $0x2a8] sm:$0xff]
    %v206 = vld [vmem:[#allocation2 + $0x2b0] sm:$0xff]
    %v207 = vld [vmem:[#allocation2 + $0x2b8] sm:$0xff]
    %v208 = vld [vmem:[#allocation2 + $0x2c0] sm:$0xff]
    %v209 = vld [vmem:[#allocation2 + $0x2c8] sm:$0xff]
    %v210 = vld [vmem:[#allocation2 + $0x2d0] sm:$0xff]
    %v211 = vld [vmem:[#allocation2 + $0x2d8] sm:$0xff]
    %v212 = vld [vmem:[#allocation2 + $0x2e0] sm:$0xff]
    %v213 = vld [vmem:[#allocation2 + $0x2e8] sm:$0xff]
    %v214 = vld [vmem:[#allocation2 + $0x2f0] sm:$0xff]
    %v215 = vld [vmem:[#allocation2 + $0x2f8] sm:$0xff]
    %v216 = vld [vmem:[%s2] sm:$0xf]
    %v218 = vlaneseq
    %v219 = vshrl.u32 %v218, 7
    %v220 = vsub.s32 0, %v219
    %v221 = vrot.slane %v216, %v220
    %v222 = vlaneseq
    %v223 = vshrl.u32 %v222, 7
    %v224 = vsub.s32 1, %v223
    %v225 = vrot.slane %v216, %v224
    %v226 = vlaneseq
    %v227 = vshrl.u32 %v226, 7
    %v228 = vsub.s32 2, %v227
    %v229 = vrot.slane %v216, %v228
    %v230 = vlaneseq
    %v231 = vshrl.u32 %v230, 7
    %v232 = vsub.s32 3, %v231
    %v233 = vrot.slane %v216, %v232
    %v270 = vunpack.c.l.b16 %v88
    %v271 = vunpack.c.h.b16 %v88
    %v272 = vunpack.c.l.b16 %v89
    %v273 = vunpack.c.l.b16 %v90
    %v274 = vunpack.c.h.b16 %v90
    %v275 = vunpack.c.l.b16 %v91
    %v276 = vunpack.c.l.b16 %v92
    %v277 = vunpack.c.h.b16 %v92
    %v278 = vunpack.c.l.b16 %v93
    %v279 = vunpack.c.l.b16 %v94
    %v280 = vunpack.c.h.b16 %v94
    %v281 = vunpack.c.l.b16 %v95
    %v282 = vunpack.c.l.b16 %v96
    %v283 = vunpack.c.h.b16 %v96
    %v284 = vunpack.c.l.b16 %v97
    %v285 = vunpack.c.l.b16 %v98
    %v286 = vunpack.c.h.b16 %v98
    %v287 = vunpack.c.l.b16 %v99
    %v288 = vunpack.c.l.b16 %v100
    %v289 = vunpack.c.h.b16 %v100
    %v290 = vunpack.c.l.b16 %v101
    %v291 = vunpack.c.l.b16 %v102
    %v292 = vunpack.c.h.b16 %v102
    %v293 = vunpack.c.l.b16 %v103
    %v294 = vunpack.c.l.b16 %v104
    %v295 = vunpack.c.h.b16 %v104
    %v296 = vunpack.c.l.b16 %v105
    %v297 = vunpack.c.l.b16 %v106
    %v298 = vunpack.c.h.b16 %v106
    %v299 = vunpack.c.l.b16 %v107
    %v300 = vunpack.c.l.b16 %v108
    %v301 = vunpack.c.h.b16 %v108
    %v302 = vunpack.c.l.b16 %v109
    %v303 = vunpack.c.l.b16 %v110
    %v304 = vunpack.c.h.b16 %v110
    %v305 = vunpack.c.l.b16 %v111
    %v306 = vunpack.c.l.b16 %v112
    %v307 = vunpack.c.h.b16 %v112
    %v308 = vunpack.c.l.b16 %v113
    %v309 = vunpack.c.l.b16 %v114
    %v310 = vunpack.c.h.b16 %v114
    %v311 = vunpack.c.l.b16 %v115
    %v312 = vunpack.c.l.b16 %v116
    %v313 = vunpack.c.h.b16 %v116
    %v314 = vunpack.c.l.b16 %v117
    %v315 = vunpack.c.l.b16 %v118
    %v316 = vunpack.c.h.b16 %v118
    %v317 = vunpack.c.l.b16 %v119
    %v318 = vpack.c.b16 %v273, %v270
    %v319 = vpack.c.b16 %v274, %v271
    %v320 = vpack.c.b16 %v275, %v272
    %v321 = vpack.c.b16 %v279, %v276
    %v322 = vpack.c.b16 %v280, %v277
    %v323 = vpack.c.b16 %v281, %v278
    %v324 = vpack.c.b16 %v285, %v282
    %v325 = vpack.c.b16 %v286, %v283
    %v326 = vpack.c.b16 %v287, %v284
    %v327 = vpack.c.b16 %v291, %v288
    %v328 = vpack.c.b16 %v292, %v289
    %v329 = vpack.c.b16 %v293, %v290
    %v330 = vpack.c.b16 %v297, %v294
    %v331 = vpack.c.b16 %v298, %v295
    %v332 = vpack.c.b16 %v299, %v296
    %v333 = vpack.c.b16 %v303, %v300
    %v334 = vpack.c.b16 %v304, %v301
    %v335 = vpack.c.b16 %v305, %v302
    %v336 = vpack.c.b16 %v309, %v306
    %v337 = vpack.c.b16 %v310, %v307
    %v338 = vpack.c.b16 %v311, %v308
    %v339 = vpack.c.b16 %v315, %v312
    %v340 = vpack.c.b16 %v316, %v313
    %v341 = vpack.c.b16 %v317, %v314
    %v462 = vunpack.c.l.b16 %v120
    %v463 = vunpack.c.h.b16 %v120
    %v464 = vunpack.c.l.b16 %v121
    %v465 = vunpack.c.h.b16 %v121
    %v466 = vunpack.c.l.b16 %v122
    %v467 = vunpack.c.h.b16 %v122
    %v468 = vunpack.c.l.b16 %v123
    %v469 = vunpack.c.h.b16 %v123
    %v470 = vunpack.c.l.b16 %v124
    %v471 = vunpack.c.h.b16 %v124
    %v472 = vunpack.c.l.b16 %v125
    %v473 = vunpack.c.h.b16 %v125
    %v474 = vunpack.c.l.b16 %v126
    %v475 = vunpack.c.h.b16 %v126
    %v476 = vunpack.c.l.b16 %v127
    %v477 = vunpack.c.h.b16 %v127
    %v478 = vunpack.c.l.b16 %v128
    %v479 = vunpack.c.h.b16 %v128
    %v480 = vunpack.c.l.b16 %v129
    %v481 = vunpack.c.h.b16 %v129
    %v482 = vunpack.c.l.b16 %v130
    %v483 = vunpack.c.h.b16 %v130
    %v484 = vunpack.c.l.b16 %v131
    %v485 = vunpack.c.h.b16 %v131
    %v486 = vunpack.c.l.b16 %v132
    %v487 = vunpack.c.h.b16 %v132
    %v488 = vunpack.c.l.b16 %v133
    %v489 = vunpack.c.h.b16 %v133
    %v490 = vunpack.c.l.b16 %v134
    %v491 = vunpack.c.h.b16 %v134
    %v492 = vunpack.c.l.b16 %v135
    %v493 = vunpack.c.h.b16 %v135
    %v494 = vunpack.c.l.b16 %v136
    %v495 = vunpack.c.h.b16 %v136
    %v496 = vunpack.c.l.b16 %v137
    %v497 = vunpack.c.h.b16 %v137
    %v498 = vunpack.c.l.b16 %v138
    %v499 = vunpack.c.h.b16 %v138
    %v500 = vunpack.c.l.b16 %v139
    %v501 = vunpack.c.h.b16 %v139
    %v502 = vunpack.c.l.b16 %v140
    %v503 = vunpack.c.h.b16 %v140
    %v504 = vunpack.c.l.b16 %v141
    %v505 = vunpack.c.h.b16 %v141
    %v506 = vunpack.c.l.b16 %v142
    %v507 = vunpack.c.h.b16 %v142
    %v508 = vunpack.c.l.b16 %v143
    %v509 = vunpack.c.h.b16 %v143
    %v510 = vunpack.c.l.b16 %v144
    %v511 = vunpack.c.h.b16 %v144
    %v512 = vunpack.c.l.b16 %v145
    %v513 = vunpack.c.h.b16 %v145
    %v514 = vunpack.c.l.b16 %v146
    %v515 = vunpack.c.h.b16 %v146
    %v516 = vunpack.c.l.b16 %v147
    %v517 = vunpack.c.h.b16 %v147
    %v518 = vunpack.c.l.b16 %v148
    %v519 = vunpack.c.h.b16 %v148
    %v520 = vunpack.c.l.b16 %v149
    %v521 = vunpack.c.h.b16 %v149
    %v522 = vunpack.c.l.b16 %v150
    %v523 = vunpack.c.h.b16 %v150
    %v524 = vunpack.c.l.b16 %v151
    %v525 = vunpack.c.h.b16 %v151
    %v526 = vunpack.c.l.b16 %v152
    %v527 = vunpack.c.h.b16 %v152
    %v528 = vunpack.c.l.b16 %v153
    %v529 = vunpack.c.h.b16 %v153
    %v530 = vunpack.c.l.b16 %v154
    %v531 = vunpack.c.h.b16 %v154
    %v532 = vunpack.c.l.b16 %v155
    %v533 = vunpack.c.h.b16 %v155
    %v534 = vunpack.c.l.b16 %v156
    %v535 = vunpack.c.h.b16 %v156
    %v536 = vunpack.c.l.b16 %v157
    %v537 = vunpack.c.h.b16 %v157
    %v538 = vunpack.c.l.b16 %v158
    %v539 = vunpack.c.h.b16 %v158
    %v540 = vunpack.c.l.b16 %v159
    %v541 = vunpack.c.h.b16 %v159
    %v542 = vunpack.c.l.b16 %v160
    %v543 = vunpack.c.h.b16 %v160
    %v544 = vunpack.c.l.b16 %v161
    %v545 = vunpack.c.h.b16 %v161
    %v546 = vunpack.c.l.b16 %v162
    %v547 = vunpack.c.h.b16 %v162
    %v548 = vunpack.c.l.b16 %v163
    %v549 = vunpack.c.h.b16 %v163
    %v550 = vunpack.c.l.b16 %v164
    %v551 = vunpack.c.h.b16 %v164
    %v552 = vunpack.c.l.b16 %v165
    %v553 = vunpack.c.h.b16 %v165
    %v554 = vunpack.c.l.b16 %v166
    %v555 = vunpack.c.h.b16 %v166
    %v556 = vunpack.c.l.b16 %v167
    %v557 = vunpack.c.h.b16 %v167
    %v558 = vunpack.c.l.b16 %v168
    %v559 = vunpack.c.h.b16 %v168
    %v560 = vunpack.c.l.b16 %v169
    %v561 = vunpack.c.h.b16 %v169
    %v562 = vunpack.c.l.b16 %v170
    %v563 = vunpack.c.h.b16 %v170
    %v564 = vunpack.c.l.b16 %v171
    %v565 = vunpack.c.h.b16 %v171
    %v566 = vunpack.c.l.b16 %v172
    %v567 = vunpack.c.h.b16 %v172
    %v568 = vunpack.c.l.b16 %v173
    %v569 = vunpack.c.h.b16 %v173
    %v570 = vunpack.c.l.b16 %v174
    %v571 = vunpack.c.h.b16 %v174
    %v572 = vunpack.c.l.b16 %v175
    %v573 = vunpack.c.h.b16 %v175
    %v574 = vunpack.c.l.b16 %v176
    %v575 = vunpack.c.h.b16 %v176
    %v576 = vunpack.c.l.b16 %v177
    %v577 = vunpack.c.h.b16 %v177
    %v578 = vunpack.c.l.b16 %v178
    %v579 = vunpack.c.h.b16 %v178
    %v580 = vunpack.c.l.b16 %v179
    %v581 = vunpack.c.h.b16 %v179
    %v582 = vunpack.c.l.b16 %v180
    %v583 = vunpack.c.h.b16 %v180
    %v584 = vunpack.c.l.b16 %v181
    %v585 = vunpack.c.h.b16 %v181
    %v586 = vunpack.c.l.b16 %v182
    %v587 = vunpack.c.h.b16 %v182
    %v588 = vunpack.c.l.b16 %v183
    %v589 = vunpack.c.h.b16 %v183
    %v590 = vunpack.c.l.b16 %v184
    %v591 = vunpack.c.h.b16 %v184
    %v592 = vunpack.c.l.b16 %v185
    %v593 = vunpack.c.h.b16 %v185
    %v594 = vunpack.c.l.b16 %v186
    %v595 = vunpack.c.h.b16 %v186
    %v596 = vunpack.c.l.b16 %v187
    %v597 = vunpack.c.h.b16 %v187
    %v598 = vunpack.c.l.b16 %v188
    %v599 = vunpack.c.h.b16 %v188
    %v600 = vunpack.c.l.b16 %v189
    %v601 = vunpack.c.h.b16 %v189
    %v602 = vunpack.c.l.b16 %v190
    %v603 = vunpack.c.h.b16 %v190
    %v604 = vunpack.c.l.b16 %v191
    %v605 = vunpack.c.h.b16 %v191
    %v606 = vunpack.c.l.b16 %v192
    %v607 = vunpack.c.h.b16 %v192
    %v608 = vunpack.c.l.b16 %v193
    %v609 = vunpack.c.h.b16 %v193
    %v610 = vunpack.c.l.b16 %v194
    %v611 = vunpack.c.h.b16 %v194
    %v612 = vunpack.c.l.b16 %v195
    %v613 = vunpack.c.h.b16 %v195
    %v614 = vunpack.c.l.b16 %v196
    %v615 = vunpack.c.h.b16 %v196
    %v616 = vunpack.c.l.b16 %v197
    %v617 = vunpack.c.h.b16 %v197
    %v618 = vunpack.c.l.b16 %v198
    %v619 = vunpack.c.h.b16 %v198
    %v620 = vunpack.c.l.b16 %v199
    %v621 = vunpack.c.h.b16 %v199
    %v622 = vunpack.c.l.b16 %v200
    %v623 = vunpack.c.h.b16 %v200
    %v624 = vunpack.c.l.b16 %v201
    %v625 = vunpack.c.h.b16 %v201
    %v626 = vunpack.c.l.b16 %v202
    %v627 = vunpack.c.h.b16 %v202
    %v628 = vunpack.c.l.b16 %v203
    %v629 = vunpack.c.h.b16 %v203
    %v630 = vunpack.c.l.b16 %v204
    %v631 = vunpack.c.h.b16 %v204
    %v632 = vunpack.c.l.b16 %v205
    %v633 = vunpack.c.h.b16 %v205
    %v634 = vunpack.c.l.b16 %v206
    %v635 = vunpack.c.h.b16 %v206
    %v636 = vunpack.c.l.b16 %v207
    %v637 = vunpack.c.h.b16 %v207
    %v638 = vunpack.c.l.b16 %v208
    %v639 = vunpack.c.h.b16 %v208
    %v640 = vunpack.c.l.b16 %v209
    %v641 = vunpack.c.h.b16 %v209
    %v642 = vunpack.c.l.b16 %v210
    %v643 = vunpack.c.h.b16 %v210
    %v644 = vunpack.c.l.b16 %v211
    %v645 = vunpack.c.h.b16 %v211
    %v646 = vunpack.c.l.b16 %v212
    %v647 = vunpack.c.h.b16 %v212
    %v648 = vunpack.c.l.b16 %v213
    %v649 = vunpack.c.h.b16 %v213
    %v650 = vunpack.c.l.b16 %v214
    %v651 = vunpack.c.h.b16 %v214
    %v652 = vunpack.c.l.b16 %v215
    %v653 = vunpack.c.h.b16 %v215
    %v654 = vpack.c.b16 %v466, %v462
    %v655 = vpack.c.b16 %v467, %v463
    %v656 = vpack.c.b16 %v468, %v464
    %v657 = vpack.c.b16 %v469, %v465
    %v658 = vpack.c.b16 %v474, %v470
    %v659 = vpack.c.b16 %v475, %v471
    %v660 = vpack.c.b16 %v476, %v472
    %v661 = vpack.c.b16 %v477, %v473
    %v662 = vpack.c.b16 %v482, %v478
    %v663 = vpack.c.b16 %v483, %v479
    %v664 = vpack.c.b16 %v484, %v480
    %v665 = vpack.c.b16 %v485, %v481
    %v666 = vpack.c.b16 %v490, %v486
    %v667 = vpack.c.b16 %v491, %v487
    %v668 = vpack.c.b16 %v492, %v488
    %v669 = vpack.c.b16 %v493, %v489
    %v670 = vpack.c.b16 %v498, %v494
    %v671 = vpack.c.b16 %v499, %v495
    %v672 = vpack.c.b16 %v500, %v496
    %v673 = vpack.c.b16 %v501, %v497
    %v674 = vpack.c.b16 %v506, %v502
    %v675 = vpack.c.b16 %v507, %v503
    %v676 = vpack.c.b16 %v508, %v504
    %v677 = vpack.c.b16 %v509, %v505
    %v678 = vpack.c.b16 %v514, %v510
    %v679 = vpack.c.b16 %v515, %v511
    %v680 = vpack.c.b16 %v516, %v512
    %v681 = vpack.c.b16 %v517, %v513
    %v682 = vpack.c.b16 %v522, %v518
    %v683 = vpack.c.b16 %v523, %v519
    %v684 = vpack.c.b16 %v524, %v520
    %v685 = vpack.c.b16 %v525, %v521
    %v686 = vpack.c.b16 %v530, %v526
    %v687 = vpack.c.b16 %v531, %v527
    %v688 = vpack.c.b16 %v532, %v528
    %v689 = vpack.c.b16 %v533, %v529
    %v690 = vpack.c.b16 %v538, %v534
    %v691 = vpack.c.b16 %v539, %v535
    %v692 = vpack.c.b16 %v540, %v536
    %v693 = vpack.c.b16 %v541, %v537
    %v694 = vpack.c.b16 %v546, %v542
    %v695 = vpack.c.b16 %v547, %v543
    %v696 = vpack.c.b16 %v548, %v544
    %v697 = vpack.c.b16 %v549, %v545
    %v698 = vpack.c.b16 %v554, %v550
    %v699 = vpack.c.b16 %v555, %v551
    %v700 = vpack.c.b16 %v556, %v552
    %v701 = vpack.c.b16 %v557, %v553
    %v702 = vpack.c.b16 %v562, %v558
    %v703 = vpack.c.b16 %v563, %v559
    %v704 = vpack.c.b16 %v564, %v560
    %v705 = vpack.c.b16 %v565, %v561
    %v706 = vpack.c.b16 %v570, %v566
    %v707 = vpack.c.b16 %v571, %v567
    %v708 = vpack.c.b16 %v572, %v568
    %v709 = vpack.c.b16 %v573, %v569
    %v710 = vpack.c.b16 %v578, %v574
    %v711 = vpack.c.b16 %v579, %v575
    %v712 = vpack.c.b16 %v580, %v576
    %v713 = vpack.c.b16 %v581, %v577
    %v714 = vpack.c.b16 %v586, %v582
    %v715 = vpack.c.b16 %v587, %v583
    %v716 = vpack.c.b16 %v588, %v584
    %v717 = vpack.c.b16 %v589, %v585
    %v718 = vpack.c.b16 %v594, %v590
    %v719 = vpack.c.b16 %v595, %v591
    %v720 = vpack.c.b16 %v596, %v592
    %v721 = vpack.c.b16 %v597, %v593
    %v722 = vpack.c.b16 %v602, %v598
    %v723 = vpack.c.b16 %v603, %v599
    %v724 = vpack.c.b16 %v604, %v600
    %v725 = vpack.c.b16 %v605, %v601
    %v726 = vpack.c.b16 %v610, %v606
    %v727 = vpack.c.b16 %v611, %v607
    %v728 = vpack.c.b16 %v612, %v608
    %v729 = vpack.c.b16 %v613, %v609
    %v730 = vpack.c.b16 %v618, %v614
    %v731 = vpack.c.b16 %v619, %v615
    %v732 = vpack.c.b16 %v620, %v616
    %v733 = vpack.c.b16 %v621, %v617
    %v734 = vpack.c.b16 %v626, %v622
    %v735 = vpack.c.b16 %v627, %v623
    %v736 = vpack.c.b16 %v628, %v624
    %v737 = vpack.c.b16 %v629, %v625
    %v738 = vpack.c.b16 %v634, %v630
    %v739 = vpack.c.b16 %v635, %v631
    %v740 = vpack.c.b16 %v636, %v632
    %v741 = vpack.c.b16 %v637, %v633
    %v742 = vpack.c.b16 %v642, %v638
    %v743 = vpack.c.b16 %v643, %v639
    %v744 = vpack.c.b16 %v644, %v640
    %v745 = vpack.c.b16 %v645, %v641
    %v746 = vpack.c.b16 %v650, %v646
    %v747 = vpack.c.b16 %v651, %v647
    %v748 = vpack.c.b16 %v652, %v648
    %v749 = vpack.c.b16 %v653, %v649
    %846 = vmatprep.subr.bf16.mxu0 %v683
    %847 = vmatpush1.bf16.msra.mxu0 %v682
    %848 = vmatprep.subr.bf16.mxu0 %v679
    %849 = vmatpush1.bf16.msra.mxu0 %v678
    %850 = vmatprep.subr.bf16.mxu0 %v675
    %851 = vmatpush1.bf16.msra.mxu0 %v674
    %852 = vmatprep.subr.bf16.mxu0 %v671
    %853 = vmatpush1.bf16.msra.mxu0 %v670
    %854 = vmatprep.subr.bf16.mxu0 %v667
    %855 = vmatpush1.bf16.msra.mxu0 %v666
    %856 = vmatprep.subr.bf16.mxu0 %v663
    %857 = vmatpush1.bf16.msra.mxu0 %v662
    %858 = vmatprep.subr.bf16.mxu0 %v659
    %859 = vmatpush1.bf16.msra.mxu0 %v658
    %860 = vmatprep.subr.bf16.mxu0 %v655
    %861 = vmatpush1.bf16.msra.mxu0 %v654
    %862 = vmatprep.subr.bf16.mxu0 %v715
    %863 = vmatpush2.bf16.msra.mxu0 %v714
    %864 = vmatprep.subr.bf16.mxu0 %v711
    %865 = vmatpush2.bf16.msra.mxu0 %v710
    %866 = vmatprep.subr.bf16.mxu0 %v707
    %867 = vmatpush2.bf16.msra.mxu0 %v706
    %868 = vmatprep.subr.bf16.mxu0 %v703
    %869 = vmatpush2.bf16.msra.mxu0 %v702
    %870 = vmatprep.subr.bf16.mxu0 %v699
    %871 = vmatpush2.bf16.msra.mxu0 %v698
    %872 = vmatprep.subr.bf16.mxu0 %v695
    %873 = vmatpush2.bf16.msra.mxu0 %v694
    %874 = vmatprep.subr.bf16.mxu0 %v691
    %875 = vmatpush2.bf16.msra.mxu0 %v690
    %876 = vmatprep.subr.bf16.mxu0 %v687
    %877 = vmatpush2.bf16.msra.mxu0 %v686
    %878 = vmatprep.mubr.bf16.mxu0 %v319
    %879 = vmatmul.mubr.bf16.gmra.mxu0 %v318
    %v880 = vpop.f32.mrf.mxu0
    %v881 = vadd.f32 %v221, %v880
    %v882 = vpop.f32.mrf.mxu0
    %v883 = vadd.f32 %v225, %v882
    %v884 = vpop.f32.mrf.mxu0
    %v885 = vadd.f32 %v221, %v884
    %v886 = vpop.f32.mrf.mxu0
    %v887 = vadd.f32 %v225, %v886
    %888 = vmatprep.mubr.bf16.mxu0 %v322
    %889 = vmatmul.mubr.bf16.gmra.mxu0 %v321
    %v890 = vpop.f32.mrf.mxu0
    %v891 = vadd.f32 %v221, %v890
    %v892 = vpop.f32.mrf.mxu0
    %v893 = vadd.f32 %v225, %v892
    %v894 = vpop.f32.mrf.mxu0
    %v895 = vadd.f32 %v221, %v894
    %v896 = vpop.f32.mrf.mxu0
    %v897 = vadd.f32 %v225, %v896
    %898 = vmatprep.mubr.bf16.mxu0 %v325
    %899 = vmatmul.mubr.bf16.gmra.mxu0 %v324
    %v900 = vpop.f32.mrf.mxu0
    %v901 = vadd.f32 %v221, %v900
    %v902 = vpop.f32.mrf.mxu0
    %v903 = vadd.f32 %v225, %v902
    %v904 = vpop.f32.mrf.mxu0
    %v905 = vadd.f32 %v221, %v904
    %v906 = vpop.f32.mrf.mxu0
    %v907 = vadd.f32 %v225, %v906
    %908 = vmatprep.mubr.bf16.mxu0 %v328
    %909 = vmatmul.mubr.bf16.gmra.mxu0 %v327
    %v910 = vpop.f32.mrf.mxu0
    %v911 = vadd.f32 %v221, %v910
    %v912 = vpop.f32.mrf.mxu0
    %v913 = vadd.f32 %v225, %v912
    %v914 = vpop.f32.mrf.mxu0
    %v915 = vadd.f32 %v221, %v914
    %v916 = vpop.f32.mrf.mxu0
    %v917 = vadd.f32 %v225, %v916
    %918 = vmatprep.mubr.bf16.mxu0 %v331
    %919 = vmatmul.mubr.bf16.gmra.mxu0 %v330
    %v920 = vpop.f32.mrf.mxu0
    %v921 = vadd.f32 %v221, %v920
    %v922 = vpop.f32.mrf.mxu0
    %v923 = vadd.f32 %v225, %v922
    %v924 = vpop.f32.mrf.mxu0
    %v925 = vadd.f32 %v221, %v924
    %v926 = vpop.f32.mrf.mxu0
    %v927 = vadd.f32 %v225, %v926
    %928 = vmatprep.mubr.bf16.mxu0 %v334
    %929 = vmatmul.mubr.bf16.gmra.mxu0 %v333
    %v930 = vpop.f32.mrf.mxu0
    %v931 = vadd.f32 %v221, %v930
    %v932 = vpop.f32.mrf.mxu0
    %v933 = vadd.f32 %v225, %v932
    %v934 = vpop.f32.mrf.mxu0
    %v935 = vadd.f32 %v221, %v934
    %v936 = vpop.f32.mrf.mxu0
    %v937 = vadd.f32 %v225, %v936
    %938 = vmatprep.mubr.bf16.mxu0 %v337
    %939 = vmatmul.mubr.bf16.gmra.mxu0 %v336
    %v940 = vpop.f32.mrf.mxu0
    %v941 = vadd.f32 %v221, %v940
    %v942 = vpop.f32.mrf.mxu0
    %v943 = vadd.f32 %v225, %v942
    %v944 = vpop.f32.mrf.mxu0
    %v945 = vadd.f32 %v221, %v944
    %v946 = vpop.f32.mrf.mxu0
    %v947 = vadd.f32 %v225, %v946
    %948 = vmatprep.mubr.bf16.mxu0 %v340
    %949 = vmatmul.mubr.bf16.gmra.mxu0 %v339
    %v950 = vpop.f32.mrf.mxu0
    %v951 = vadd.f32 %v221, %v950
    %v952 = vpop.f32.mrf.mxu0
    %v953 = vadd.f32 %v225, %v952
    %v954 = vpop.f32.mrf.mxu0
    %v955 = vadd.f32 %v221, %v954
    %v956 = vpop.f32.mrf.mxu0
    %v957 = vadd.f32 %v225, %v956
    %958 = vdwg.mxu0
    %959 = vmatprep.subr.bf16.mxu0 %v747
    %960 = vmatpush1.bf16.msra.mxu0 %v746
    %961 = vmatprep.subr.bf16.mxu0 %v743
    %962 = vmatpush1.bf16.msra.mxu0 %v742
    %963 = vmatprep.subr.bf16.mxu0 %v739
    %964 = vmatpush1.bf16.msra.mxu0 %v738
    %965 = vmatprep.subr.bf16.mxu0 %v735
    %966 = vmatpush1.bf16.msra.mxu0 %v734
    %967 = vmatprep.subr.bf16.mxu0 %v731
    %968 = vmatpush1.bf16.msra.mxu0 %v730
    %969 = vmatprep.subr.bf16.mxu0 %v727
    %970 = vmatpush1.bf16.msra.mxu0 %v726
    %971 = vmatprep.subr.bf16.mxu0 %v723
    %972 = vmatpush1.bf16.msra.mxu0 %v722
    %973 = vmatprep.subr.bf16.mxu0 %v719
    %974 = vmatpush1.bf16.msra.mxu0 %v718
    %975 = vmatprep.subr.bf16.mxu0 0
    %976 = vmatpush2.bf16.msra.mxu0 0
    %977 = vmatprep.subr.bf16.mxu0 0
    %978 = vmatpush2.bf16.msra.mxu0 0
    %979 = vmatprep.subr.bf16.mxu0 0
    %980 = vmatpush2.bf16.msra.mxu0 0
    %981 = vmatprep.subr.bf16.mxu0 0
    %982 = vmatpush2.bf16.msra.mxu0 0
    %983 = vmatprep.subr.bf16.mxu0 0
    %984 = vmatpush2.bf16.msra.mxu0 0
    %985 = vmatprep.subr.bf16.mxu0 0
    %986 = vmatpush2.bf16.msra.mxu0 0
    %987 = vmatprep.subr.bf16.mxu0 0
    %988 = vmatpush2.bf16.msra.mxu0 0
    %989 = vmatprep.subr.bf16.mxu0 0
    %990 = vmatpush2.bf16.msra.mxu0 0
    %991 = vmatprep.mubr.bf16.mxu0 0
    %992 = vmatmul.mubr.bf16.gmra.mxu0 %v320
    %v993 = vpop.f32.mrf.mxu0
    %v994 = vadd.f32 %v881, %v993
    %v995 = vpop.f32.mrf.mxu0
    %v996 = vadd.f32 %v883, %v995
    %v997 = vpop.f32.mrf.mxu0
    %v998 = vadd.f32 %v885, %v997
    %v999 = vpop.f32.mrf.mxu0
    %v1000 = vadd.f32 %v887, %v999
    %1001 = vmatprep.mubr.bf16.mxu0 0
    %1002 = vmatmul.mubr.bf16.gmra.mxu0 %v323
    %v1003 = vpop.f32.mrf.mxu0
    %v1004 = vadd.f32 %v891, %v1003
    %v1005 = vpop.f32.mrf.mxu0
    %v1006 = vadd.f32 %v893, %v1005
    %v1007 = vpop.f32.mrf.mxu0
    %v1008 = vadd.f32 %v895, %v1007
    %v1009 = vpop.f32.mrf.mxu0
    %v1010 = vadd.f32 %v897, %v1009
    %1011 = vmatprep.mubr.bf16.mxu0 0
    %1012 = vmatmul.mubr.bf16.gmra.mxu0 %v326
    %v1013 = vpop.f32.mrf.mxu0
    %v1014 = vadd.f32 %v901, %v1013
    %v1015 = vpop.f32.mrf.mxu0
    %v1016 = vadd.f32 %v903, %v1015
    %v1017 = vpop.f32.mrf.mxu0
    %v1018 = vadd.f32 %v905, %v1017
    %v1019 = vpop.f32.mrf.mxu0
    %v1020 = vadd.f32 %v907, %v1019
    %1021 = vmatprep.mubr.bf16.mxu0 0
    %1022 = vmatmul.mubr.bf16.gmra.mxu0 %v329
    %v1023 = vpop.f32.mrf.mxu0
    %v1024 = vadd.f32 %v911, %v1023
    %v1025 = vpop.f32.mrf.mxu0
    %v1026 = vadd.f32 %v913, %v1025
    %v1027 = vpop.f32.mrf.mxu0
    %v1028 = vadd.f32 %v915, %v1027
    %v1029 = vpop.f32.mrf.mxu0
    %v1030 = vadd.f32 %v917, %v1029
    %1031 = vmatprep.mubr.bf16.mxu0 0
    %1032 = vmatmul.mubr.bf16.gmra.mxu0 %v332
    %v1033 = vpop.f32.mrf.mxu0
    %v1034 = vadd.f32 %v921, %v1033
    %v1035 = vpop.f32.mrf.mxu0
    %v1036 = vadd.f32 %v923, %v1035
    %v1037 = vpop.f32.mrf.mxu0
    %v1038 = vadd.f32 %v925, %v1037
    %v1039 = vpop.f32.mrf.mxu0
    %v1040 = vadd.f32 %v927, %v1039
    %1041 = vmatprep.mubr.bf16.mxu0 0
    %1042 = vmatmul.mubr.bf16.gmra.mxu0 %v335
    %v1043 = vpop.f32.mrf.mxu0
    %v1044 = vadd.f32 %v931, %v1043
    %v1045 = vpop.f32.mrf.mxu0
    %v1046 = vadd.f32 %v933, %v1045
    %v1047 = vpop.f32.mrf.mxu0
    %v1048 = vadd.f32 %v935, %v1047
    %v1049 = vpop.f32.mrf.mxu0
    %v1050 = vadd.f32 %v937, %v1049
    %1051 = vmatprep.mubr.bf16.mxu0 0
    %1052 = vmatmul.mubr.bf16.gmra.mxu0 %v338
    %v1053 = vpop.f32.mrf.mxu0
    %v1054 = vadd.f32 %v941, %v1053
    %v1055 = vpop.f32.mrf.mxu0
    %v1056 = vadd.f32 %v943, %v1055
    %v1057 = vpop.f32.mrf.mxu0
    %v1058 = vadd.f32 %v945, %v1057
    %v1059 = vpop.f32.mrf.mxu0
    %v1060 = vadd.f32 %v947, %v1059
    %1061 = vmatprep.mubr.bf16.mxu0 0
    %1062 = vmatmul.mubr.bf16.gmra.mxu0 %v341
    %v1063 = vpop.f32.mrf.mxu0
    %v1064 = vadd.f32 %v951, %v1063
    %v1065 = vpop.f32.mrf.mxu0
    %v1066 = vadd.f32 %v953, %v1065
    %v1067 = vpop.f32.mrf.mxu0
    %v1068 = vadd.f32 %v955, %v1067
    %v1069 = vpop.f32.mrf.mxu0
    %v1070 = vadd.f32 %v957, %v1069
    %1071 = vdwg.mxu0
    %1072 = vmatprep.subr.bf16.mxu0 %v685
    %1073 = vmatpush1.bf16.msra.mxu0 %v684
    %1074 = vmatprep.subr.bf16.mxu0 %v681
    %1075 = vmatpush1.bf16.msra.mxu0 %v680
    %1076 = vmatprep.subr.bf16.mxu0 %v677
    %1077 = vmatpush1.bf16.msra.mxu0 %v676
    %1078 = vmatprep.subr.bf16.mxu0 %v673
    %1079 = vmatpush1.bf16.msra.mxu0 %v672
    %1080 = vmatprep.subr.bf16.mxu0 %v669
    %1081 = vmatpush1.bf16.msra.mxu0 %v668
    %1082 = vmatprep.subr.bf16.mxu0 %v665
    %1083 = vmatpush1.bf16.msra.mxu0 %v664
    %1084 = vmatprep.subr.bf16.mxu0 %v661
    %1085 = vmatpush1.bf16.msra.mxu0 %v660
    %1086 = vmatprep.subr.bf16.mxu0 %v657
    %1087 = vmatpush1.bf16.msra.mxu0 %v656
    %1088 = vmatprep.subr.bf16.mxu0 %v717
    %1089 = vmatpush2.bf16.msra.mxu0 %v716
    %1090 = vmatprep.subr.bf16.mxu0 %v713
    %1091 = vmatpush2.bf16.msra.mxu0 %v712
    %1092 = vmatprep.subr.bf16.mxu0 %v709
    %1093 = vmatpush2.bf16.msra.mxu0 %v708
    %1094 = vmatprep.subr.bf16.mxu0 %v705
    %1095 = vmatpush2.bf16.msra.mxu0 %v704
    %1096 = vmatprep.subr.bf16.mxu0 %v701
    %1097 = vmatpush2.bf16.msra.mxu0 %v700
    %1098 = vmatprep.subr.bf16.mxu0 %v697
    %1099 = vmatpush2.bf16.msra.mxu0 %v696
    %1100 = vmatprep.subr.bf16.mxu0 %v693
    %1101 = vmatpush2.bf16.msra.mxu0 %v692
    %1102 = vmatprep.subr.bf16.mxu0 %v689
    %1103 = vmatpush2.bf16.msra.mxu0 %v688
    %1104 = vmatprep.mubr.bf16.mxu0 %v319
    %1105 = vmatmul.mubr.bf16.gmra.mxu0 %v318
    %v1106 = vpop.f32.mrf.mxu0
    %v1107 = vadd.f32 %v229, %v1106
    %v1108 = vpop.f32.mrf.mxu0
    %v1109 = vadd.f32 %v233, %v1108
    %v1110 = vpop.f32.mrf.mxu0
    %v1111 = vadd.f32 %v229, %v1110
    %v1112 = vpop.f32.mrf.mxu0
    %v1113 = vadd.f32 %v233, %v1112
    %1114 = vmatprep.mubr.bf16.mxu0 %v322
    %1115 = vmatmul.mubr.bf16.gmra.mxu0 %v321
    %v1116 = vpop.f32.mrf.mxu0
    %v1117 = vadd.f32 %v229, %v1116
    %v1118 = vpop.f32.mrf.mxu0
    %v1119 = vadd.f32 %v233, %v1118
    %v1120 = vpop.f32.mrf.mxu0
    %v1121 = vadd.f32 %v229, %v1120
    %v1122 = vpop.f32.mrf.mxu0
    %v1123 = vadd.f32 %v233, %v1122
    %1124 = vmatprep.mubr.bf16.mxu0 %v325
    %1125 = vmatmul.mubr.bf16.gmra.mxu0 %v324
    %v1126 = vpop.f32.mrf.mxu0
    %v1127 = vadd.f32 %v229, %v1126
    %v1128 = vpop.f32.mrf.mxu0
    %v1129 = vadd.f32 %v233, %v1128
    %v1130 = vpop.f32.mrf.mxu0
    %v1131 = vadd.f32 %v229, %v1130
    %v1132 = vpop.f32.mrf.mxu0
    %v1133 = vadd.f32 %v233, %v1132
    %1134 = vmatprep.mubr.bf16.mxu0 %v328
    %1135 = vmatmul.mubr.bf16.gmra.mxu0 %v327
    %v1136 = vpop.f32.mrf.mxu0
    %v1137 = vadd.f32 %v229, %v1136
    %v1138 = vpop.f32.mrf.mxu0
    %v1139 = vadd.f32 %v233, %v1138
    %v1140 = vpop.f32.mrf.mxu0
    %v1141 = vadd.f32 %v229, %v1140
    %v1142 = vpop.f32.mrf.mxu0
    %v1143 = vadd.f32 %v233, %v1142
    %1144 = vmatprep.mubr.bf16.mxu0 %v331
    %1145 = vmatmul.mubr.bf16.gmra.mxu0 %v330
    %v1146 = vpop.f32.mrf.mxu0
    %v1147 = vadd.f32 %v229, %v1146
    %v1148 = vpop.f32.mrf.mxu0
    %v1149 = vadd.f32 %v233, %v1148
    %v1150 = vpop.f32.mrf.mxu0
    %v1151 = vadd.f32 %v229, %v1150
    %v1152 = vpop.f32.mrf.mxu0
    %v1153 = vadd.f32 %v233, %v1152
    %1154 = vmatprep.mubr.bf16.mxu0 %v334
    %1155 = vmatmul.mubr.bf16.gmra.mxu0 %v333
    %v1156 = vpop.f32.mrf.mxu0
    %v1157 = vadd.f32 %v229, %v1156
    %v1158 = vpop.f32.mrf.mxu0
    %v1159 = vadd.f32 %v233, %v1158
    %v1160 = vpop.f32.mrf.mxu0
    %v1161 = vadd.f32 %v229, %v1160
    %v1162 = vpop.f32.mrf.mxu0
    %v1163 = vadd.f32 %v233, %v1162
    %1164 = vmatprep.mubr.bf16.mxu0 %v337
    %1165 = vmatmul.mubr.bf16.gmra.mxu0 %v336
    %v1166 = vpop.f32.mrf.mxu0
    %v1167 = vadd.f32 %v229, %v1166
    %v1168 = vpop.f32.mrf.mxu0
    %v1169 = vadd.f32 %v233, %v1168
    %v1170 = vpop.f32.mrf.mxu0
    %v1171 = vadd.f32 %v229, %v1170
    %v1172 = vpop.f32.mrf.mxu0
    %v1173 = vadd.f32 %v233, %v1172
    %1174 = vmatprep.mubr.bf16.mxu0 %v340
    %1175 = vmatmul.mubr.bf16.gmra.mxu0 %v339
    %v1176 = vpop.f32.mrf.mxu0
    %v1177 = vadd.f32 %v229, %v1176
    %v1178 = vpop.f32.mrf.mxu0
    %v1179 = vadd.f32 %v233, %v1178
    %v1180 = vpop.f32.mrf.mxu0
    %v1181 = vadd.f32 %v229, %v1180
    %v1182 = vpop.f32.mrf.mxu0
    %v1183 = vadd.f32 %v233, %v1182
    %1184 = vdwg.mxu0
    %1185 = vmatprep.subr.bf16.mxu0 %v749
    %1186 = vmatpush1.bf16.msra.mxu0 %v748
    %1187 = vmatprep.subr.bf16.mxu0 %v745
    %1188 = vmatpush1.bf16.msra.mxu0 %v744
    %1189 = vmatprep.subr.bf16.mxu0 %v741
    %1190 = vmatpush1.bf16.msra.mxu0 %v740
    %1191 = vmatprep.subr.bf16.mxu0 %v737
    %1192 = vmatpush1.bf16.msra.mxu0 %v736
    %1193 = vmatprep.subr.bf16.mxu0 %v733
    %1194 = vmatpush1.bf16.msra.mxu0 %v732
    %1195 = vmatprep.subr.bf16.mxu0 %v729
    %1196 = vmatpush1.bf16.msra.mxu0 %v728
    %1197 = vmatprep.subr.bf16.mxu0 %v725
    %1198 = vmatpush1.bf16.msra.mxu0 %v724
    %1199 = vmatprep.subr.bf16.mxu0 %v721
    %1200 = vmatpush1.bf16.msra.mxu0 %v720
    %1201 = vmatprep.subr.bf16.mxu0 0
    %1202 = vmatpush2.bf16.msra.mxu0 0
    %1203 = vmatprep.subr.bf16.mxu0 0
    %1204 = vmatpush2.bf16.msra.mxu0 0
    %1205 = vmatprep.subr.bf16.mxu0 0
    %1206 = vmatpush2.bf16.msra.mxu0 0
    %1207 = vmatprep.subr.bf16.mxu0 0
    %1208 = vmatpush2.bf16.msra.mxu0 0
    %1209 = vmatprep.subr.bf16.mxu0 0
    %1210 = vmatpush2.bf16.msra.mxu0 0
    %1211 = vmatprep.subr.bf16.mxu0 0
    %1212 = vmatpush2.bf16.msra.mxu0 0
    %1213 = vmatprep.subr.bf16.mxu0 0
    %1214 = vmatpush2.bf16.msra.mxu0 0
    %1215 = vmatprep.subr.bf16.mxu0 0
    %1216 = vmatpush2.bf16.msra.mxu0 0
    %1217 = vmatprep.mubr.bf16.mxu0 0
    %1218 = vmatmul.mubr.bf16.gmra.mxu0 %v320
    %v1219 = vpop.f32.mrf.mxu0
    %v1220 = vadd.f32 %v1107, %v1219
    %v1221 = vpop.f32.mrf.mxu0
    %v1222 = vadd.f32 %v1109, %v1221
    %v1223 = vpop.f32.mrf.mxu0
    %v1224 = vadd.f32 %v1111, %v1223
    %v1225 = vpop.f32.mrf.mxu0
    %v1226 = vadd.f32 %v1113, %v1225
    %1227 = vmatprep.mubr.bf16.mxu0 0
    %1228 = vmatmul.mubr.bf16.gmra.mxu0 %v323
    %v1229 = vpop.f32.mrf.mxu0
    %v1230 = vadd.f32 %v1117, %v1229
    %v1231 = vpop.f32.mrf.mxu0
    %v1232 = vadd.f32 %v1119, %v1231
    %v1233 = vpop.f32.mrf.mxu0
    %v1234 = vadd.f32 %v1121, %v1233
    %v1235 = vpop.f32.mrf.mxu0
    %v1236 = vadd.f32 %v1123, %v1235
    %1237 = vmatprep.mubr.bf16.mxu0 0
    %1238 = vmatmul.mubr.bf16.gmra.mxu0 %v326
    %v1239 = vpop.f32.mrf.mxu0
    %v1240 = vadd.f32 %v1127, %v1239
    %v1241 = vpop.f32.mrf.mxu0
    %v1242 = vadd.f32 %v1129, %v1241
    %v1243 = vpop.f32.mrf.mxu0
    %v1244 = vadd.f32 %v1131, %v1243
    %v1245 = vpop.f32.mrf.mxu0
    %v1246 = vadd.f32 %v1133, %v1245
    %1247 = vmatprep.mubr.bf16.mxu0 0
    %1248 = vmatmul.mubr.bf16.gmra.mxu0 %v329
    %v1249 = vpop.f32.mrf.mxu0
    %v1250 = vadd.f32 %v1137, %v1249
    %v1251 = vpop.f32.mrf.mxu0
    %v1252 = vadd.f32 %v1139, %v1251
    %v1253 = vpop.f32.mrf.mxu0
    %v1254 = vadd.f32 %v1141, %v1253
    %v1255 = vpop.f32.mrf.mxu0
    %v1256 = vadd.f32 %v1143, %v1255
    %1257 = vmatprep.mubr.bf16.mxu0 0
    %1258 = vmatmul.mubr.bf16.gmra.mxu0 %v332
    %v1259 = vpop.f32.mrf.mxu0
    %v1260 = vadd.f32 %v1147, %v1259
    %v1261 = vpop.f32.mrf.mxu0
    %v1262 = vadd.f32 %v1149, %v1261
    %v1263 = vpop.f32.mrf.mxu0
    %v1264 = vadd.f32 %v1151, %v1263
    %v1265 = vpop.f32.mrf.mxu0
    %v1266 = vadd.f32 %v1153, %v1265
    %1267 = vmatprep.mubr.bf16.mxu0 0
    %1268 = vmatmul.mubr.bf16.gmra.mxu0 %v335
    %v1269 = vpop.f32.mrf.mxu0
    %v1270 = vadd.f32 %v1157, %v1269
    %v1271 = vpop.f32.mrf.mxu0
    %v1272 = vadd.f32 %v1159, %v1271
    %v1273 = vpop.f32.mrf.mxu0
    %v1274 = vadd.f32 %v1161, %v1273
    %v1275 = vpop.f32.mrf.mxu0
    %v1276 = vadd.f32 %v1163, %v1275
    %1277 = vmatprep.mubr.bf16.mxu0 0
    %1278 = vmatmul.mubr.bf16.gmra.mxu0 %v338
    %v1279 = vpop.f32.mrf.mxu0
    %v1280 = vadd.f32 %v1167, %v1279
    %v1281 = vpop.f32.mrf.mxu0
    %v1282 = vadd.f32 %v1169, %v1281
    %v1283 = vpop.f32.mrf.mxu0
    %v1284 = vadd.f32 %v1171, %v1283
    %v1285 = vpop.f32.mrf.mxu0
    %v1286 = vadd.f32 %v1173, %v1285
    %1287 = vmatprep.mubr.bf16.mxu0 0
    %1288 = vmatmul.mubr.bf16.gmra.mxu0 %v341
    %v1289 = vpop.f32.mrf.mxu0
    %v1290 = vadd.f32 %v1177, %v1289
    %v1291 = vpop.f32.mrf.mxu0
    %v1292 = vadd.f32 %v1179, %v1291
    %v1293 = vpop.f32.mrf.mxu0
    %v1294 = vadd.f32 %v1181, %v1293
    %v1295 = vpop.f32.mrf.mxu0
    %v1296 = vadd.f32 %v1183, %v1295
    %1297 = vdwg.mxu0
    %v1298 = vmax.f32 %v994, 0.0
    %v1299 = vmax.f32 %v996, 0.0
    %v1300 = vmax.f32 %v1220, 0.0
    %v1301 = vmax.f32 %v1222, 0.0
    %v1302 = vmax.f32 %v998, 0.0
    %v1303 = vmax.f32 %v1000, 0.0
    %v1304 = vmax.f32 %v1224, 0.0
    %v1305 = vmax.f32 %v1226, 0.0
    %v1306 = vmax.f32 %v1004, 0.0
    %v1307 = vmax.f32 %v1006, 0.0
    %v1308 = vmax.f32 %v1230, 0.0
    %v1309 = vmax.f32 %v1232, 0.0
    %v1310 = vmax.f32 %v1008, 0.0
    %v1311 = vmax.f32 %v1010, 0.0
    %v1312 = vmax.f32 %v1234, 0.0
    %v1313 = vmax.f32 %v1236, 0.0
    %v1314 = vmax.f32 %v1014, 0.0
    %v1315 = vmax.f32 %v1016, 0.0
    %v1316 = vmax.f32 %v1240, 0.0
    %v1317 = vmax.f32 %v1242, 0.0
    %v1318 = vmax.f32 %v1018, 0.0
    %v1319 = vmax.f32 %v1020, 0.0
    %v1320 = vmax.f32 %v1244, 0.0
    %v1321 = vmax.f32 %v1246, 0.0
    %v1322 = vmax.f32 %v1024, 0.0
    %v1323 = vmax.f32 %v1026, 0.0
    %v1324 = vmax.f32 %v1250, 0.0
    %v1325 = vmax.f32 %v1252, 0.0
    %v1326 = vmax.f32 %v1028, 0.0
    %v1327 = vmax.f32 %v1030, 0.0
    %v1328 = vmax.f32 %v1254, 0.0
    %v1329 = vmax.f32 %v1256, 0.0
    %v1330 = vmax.f32 %v1034, 0.0
    %v1331 = vmax.f32 %v1036, 0.0
    %v1332 = vmax.f32 %v1260, 0.0
    %v1333 = vmax.f32 %v1262, 0.0
    %v1334 = vmax.f32 %v1038, 0.0
    %v1335 = vmax.f32 %v1040, 0.0
    %v1336 = vmax.f32 %v1264, 0.0
    %v1337 = vmax.f32 %v1266, 0.0
    %v1338 = vmax.f32 %v1044, 0.0
    %v1339 = vmax.f32 %v1046, 0.0
    %v1340 = vmax.f32 %v1270, 0.0
    %v1341 = vmax.f32 %v1272, 0.0
    %v1342 = vmax.f32 %v1048, 0.0
    %v1343 = vmax.f32 %v1050, 0.0
    %v1344 = vmax.f32 %v1274, 0.0
    %v1345 = vmax.f32 %v1276, 0.0
    %v1346 = vmax.f32 %v1054, 0.0
    %v1347 = vmax.f32 %v1056, 0.0
    %v1348 = vmax.f32 %v1280, 0.0
    %v1349 = vmax.f32 %v1282, 0.0
    %v1350 = vmax.f32 %v1058, 0.0
    %v1351 = vmax.f32 %v1060, 0.0
    %v1352 = vmax.f32 %v1284, 0.0
    %v1353 = vmax.f32 %v1286, 0.0
    %v1354 = vmax.f32 %v1064, 0.0
    %v1355 = vmax.f32 %v1066, 0.0
    %v1356 = vmax.f32 %v1290, 0.0
    %v1357 = vmax.f32 %v1292, 0.0
    %v1358 = vmax.f32 %v1068, 0.0
    %v1359 = vmax.f32 %v1070, 0.0
    %v1360 = vmax.f32 %v1294, 0.0
    %v1361 = vmax.f32 %v1296, 0.0
    %v1362 = vpack.c.bf16 %v1302, %v1298
    %v1363 = vpack.c.bf16 %v1303, %v1299
    %v1364 = vpack.c.bf16 %v1304, %v1300
    %v1365 = vpack.c.bf16 %v1305, %v1301
    %v1366 = vpack.c.bf16 %v1310, %v1306
    %v1367 = vpack.c.bf16 %v1311, %v1307
    %v1368 = vpack.c.bf16 %v1312, %v1308
    %v1369 = vpack.c.bf16 %v1313, %v1309
    %v1370 = vpack.c.bf16 %v1318, %v1314
    %v1371 = vpack.c.bf16 %v1319, %v1315
    %v1372 = vpack.c.bf16 %v1320, %v1316
    %v1373 = vpack.c.bf16 %v1321, %v1317
    %v1374 = vpack.c.bf16 %v1326, %v1322
    %v1375 = vpack.c.bf16 %v1327, %v1323
    %v1376 = vpack.c.bf16 %v1328, %v1324
    %v1377 = vpack.c.bf16 %v1329, %v1325
    %v1378 = vpack.c.bf16 %v1334, %v1330
    %v1379 = vpack.c.bf16 %v1335, %v1331
    %v1380 = vpack.c.bf16 %v1336, %v1332
    %v1381 = vpack.c.bf16 %v1337, %v1333
    %v1382 = vpack.c.bf16 %v1342, %v1338
    %v1383 = vpack.c.bf16 %v1343, %v1339
    %v1384 = vpack.c.bf16 %v1344, %v1340
    %v1385 = vpack.c.bf16 %v1345, %v1341
    %v1386 = vpack.c.bf16 %v1350, %v1346
    %v1387 = vpack.c.bf16 %v1351, %v1347
    %v1388 = vpack.c.bf16 %v1352, %v1348
    %v1389 = vpack.c.bf16 %v1353, %v1349
    %v1390 = vpack.c.bf16 %v1358, %v1354
    %v1391 = vpack.c.bf16 %v1359, %v1355
    %v1392 = vpack.c.bf16 %v1360, %v1356
    %v1393 = vpack.c.bf16 %v1361, %v1357
    %v1394 = vld [vmem:[#allocation4] sm:$0xff]
    %v1395 = vld [vmem:[#allocation4 + $0x8] sm:$0xff]
    %v1396 = vld [vmem:[#allocation4 + $0x10] sm:$0xff]
    %v1397 = vld [vmem:[#allocation4 + $0x18] sm:$0xff]
    %v1398 = vld [vmem:[#allocation4 + $0x20] sm:$0xff]
    %v1399 = vld [vmem:[#allocation4 + $0x28] sm:$0xff]
    %v1400 = vld [vmem:[#allocation4 + $0x30] sm:$0xff]
    %v1401 = vld [vmem:[#allocation4 + $0x38] sm:$0xff]
    %v1402 = vld [vmem:[#allocation4 + $0x40] sm:$0xff]
    %v1403 = vld [vmem:[#allocation4 + $0x48] sm:$0xff]
    %v1404 = vld [vmem:[#allocation4 + $0x50] sm:$0xff]
    %v1405 = vld [vmem:[#allocation4 + $0x58] sm:$0xff]
    %v1406 = vld [vmem:[#allocation4 + $0x60] sm:$0xff]
    %v1407 = vld [vmem:[#allocation4 + $0x68] sm:$0xff]
    %v1408 = vld [vmem:[#allocation4 + $0x70] sm:$0xff]
    %v1409 = vld [vmem:[#allocation4 + $0x78] sm:$0xff]
    %v1410 = vld [vmem:[#allocation4 + $0x80] sm:$0xff]
    %v1411 = vld [vmem:[#allocation4 + $0x88] sm:$0xff]
    %v1412 = vld [vmem:[#allocation4 + $0x90] sm:$0xff]
    %v1413 = vld [vmem:[#allocation4 + $0x98] sm:$0xff]
    %v1414 = vld [vmem:[#allocation4 + $0xa0] sm:$0xff]
    %v1415 = vld [vmem:[#allocation4 + $0xa8] sm:$0xff]
    %v1416 = vld [vmem:[#allocation4 + $0xb0] sm:$0xff]
    %v1417 = vld [vmem:[#allocation4 + $0xb8] sm:$0xff]
    %v1418 = vld [vmem:[#allocation4 + $0xc0] sm:$0xff]
    %v1419 = vld [vmem:[#allocation4 + $0xc8] sm:$0xff]
    %v1420 = vld [vmem:[#allocation4 + $0xd0] sm:$0xff]
    %v1421 = vld [vmem:[#allocation4 + $0xd8] sm:$0xff]
    %v1422 = vld [vmem:[#allocation4 + $0xe0] sm:$0xff]
    %v1423 = vld [vmem:[#allocation4 + $0xe8] sm:$0xff]
    %v1424 = vld [vmem:[#allocation4 + $0xf0] sm:$0xff]
    %v1425 = vld [vmem:[#allocation4 + $0xf8] sm:$0xff]
    %v1426 = vld [vmem:[#allocation4 + $0x100] sm:$0xff]
    %v1427 = vld [vmem:[#allocation4 + $0x108] sm:$0xff]
    %v1428 = vld [vmem:[#allocation4 + $0x110] sm:$0xff]
    %v1429 = vld [vmem:[#allocation4 + $0x118] sm:$0xff]
    %v1430 = vld [vmem:[#allocation4 + $0x120] sm:$0xff]
    %v1431 = vld [vmem:[#allocation4 + $0x128] sm:$0xff]
    %v1432 = vld [vmem:[#allocation4 + $0x130] sm:$0xff]
    %v1433 = vld [vmem:[#allocation4 + $0x138] sm:$0xff]
    %v1434 = vld [vmem:[#allocation4 + $0x140] sm:$0xff]
    %v1435 = vld [vmem:[#allocation4 + $0x148] sm:$0xff]
    %v1436 = vld [vmem:[#allocation4 + $0x150] sm:$0xff]
    %v1437 = vld [vmem:[#allocation4 + $0x158] sm:$0xff]
    %v1438 = vld [vmem:[#allocation4 + $0x160] sm:$0xff]
    %v1439 = vld [vmem:[#allocation4 + $0x168] sm:$0xff]
    %v1440 = vld [vmem:[#allocation4 + $0x170] sm:$0xff]
    %v1441 = vld [vmem:[#allocation4 + $0x178] sm:$0xff]
    %v1442 = vld [vmem:[#allocation4 + $0x180] sm:$0xff]
    %v1443 = vld [vmem:[#allocation4 + $0x188] sm:$0xff]
    %v1444 = vld [vmem:[#allocation4 + $0x190] sm:$0xff]
    %v1445 = vld [vmem:[#allocation4 + $0x198] sm:$0xff]
    %v1446 = vld [vmem:[#allocation4 + $0x1a0] sm:$0xff]
    %v1447 = vld [vmem:[#allocation4 + $0x1a8] sm:$0xff]
    %v1448 = vld [vmem:[#allocation4 + $0x1b0] sm:$0xff]
    %v1449 = vld [vmem:[#allocation4 + $0x1b8] sm:$0xff]
    %v1450 = vld [vmem:[#allocation4 + $0x1c0] sm:$0xff]
    %v1451 = vld [vmem:[#allocation4 + $0x1c8] sm:$0xff]
    %v1452 = vld [vmem:[#allocation4 + $0x1d0] sm:$0xff]
    %v1453 = vld [vmem:[#allocation4 + $0x1d8] sm:$0xff]
    %v1454 = vld [vmem:[#allocation4 + $0x1e0] sm:$0xff]
    %v1455 = vld [vmem:[#allocation4 + $0x1e8] sm:$0xff]
    %v1456 = vld [vmem:[#allocation4 + $0x1f0] sm:$0xff]
    %v1457 = vld [vmem:[#allocation4 + $0x1f8] sm:$0xff]
    %v1458 = vld [vmem:[#allocation4 + $0x200] sm:$0xff]
    %v1459 = vld [vmem:[#allocation4 + $0x208] sm:$0xff]
    %v1460 = vld [vmem:[#allocation4 + $0x210] sm:$0xff]
    %v1461 = vld [vmem:[#allocation4 + $0x218] sm:$0xff]
    %v1462 = vld [vmem:[#allocation4 + $0x220] sm:$0xff]
    %v1463 = vld [vmem:[#allocation4 + $0x228] sm:$0xff]
    %v1464 = vld [vmem:[#allocation4 + $0x230] sm:$0xff]
    %v1465 = vld [vmem:[#allocation4 + $0x238] sm:$0xff]
    %v1466 = vld [vmem:[#allocation4 + $0x240] sm:$0xff]
    %v1467 = vld [vmem:[#allocation4 + $0x248] sm:$0xff]
    %v1468 = vld [vmem:[#allocation4 + $0x250] sm:$0xff]
    %v1469 = vld [vmem:[#allocation4 + $0x258] sm:$0xff]
    %v1470 = vld [vmem:[#allocation4 + $0x260] sm:$0xff]
    %v1471 = vld [vmem:[#allocation4 + $0x268] sm:$0xff]
    %v1472 = vld [vmem:[#allocation4 + $0x270] sm:$0xff]
    %v1473 = vld [vmem:[#allocation4 + $0x278] sm:$0xff]
    %v1474 = vld [vmem:[#allocation4 + $0x280] sm:$0xff]
    %v1475 = vld [vmem:[#allocation4 + $0x288] sm:$0xff]
    %v1476 = vld [vmem:[#allocation4 + $0x290] sm:$0xff]
    %v1477 = vld [vmem:[#allocation4 + $0x298] sm:$0xff]
    %v1478 = vld [vmem:[#allocation4 + $0x2a0] sm:$0xff]
    %v1479 = vld [vmem:[#allocation4 + $0x2a8] sm:$0xff]
    %v1480 = vld [vmem:[#allocation4 + $0x2b0] sm:$0xff]
    %v1481 = vld [vmem:[#allocation4 + $0x2b8] sm:$0xff]
    %v1482 = vld [vmem:[#allocation4 + $0x2c0] sm:$0xff]
    %v1483 = vld [vmem:[#allocation4 + $0x2c8] sm:$0xff]
    %v1484 = vld [vmem:[#allocation4 + $0x2d0] sm:$0xff]
    %v1485 = vld [vmem:[#allocation4 + $0x2d8] sm:$0xff]
    %v1486 = vld [vmem:[#allocation4 + $0x2e0] sm:$0xff]
    %v1487 = vld [vmem:[#allocation4 + $0x2e8] sm:$0xff]
    %v1488 = vld [vmem:[#allocation4 + $0x2f0] sm:$0xff]
    %v1489 = vld [vmem:[#allocation4 + $0x2f8] sm:$0xff]
    %v1490 = vld [vmem:[#allocation4 + $0x300] sm:$0xff]
    %v1491 = vld [vmem:[#allocation4 + $0x308] sm:$0xff]
    %v1492 = vld [vmem:[#allocation4 + $0x310] sm:$0xff]
    %v1493 = vld [vmem:[#allocation4 + $0x318] sm:$0xff]
    %v1494 = vld [vmem:[#allocation4 + $0x320] sm:$0xff]
    %v1495 = vld [vmem:[#allocation4 + $0x328] sm:$0xff]
    %v1496 = vld [vmem:[#allocation4 + $0x330] sm:$0xff]
    %v1497 = vld [vmem:[#allocation4 + $0x338] sm:$0xff]
    %v1498 = vld [vmem:[#allocation4 + $0x340] sm:$0xff]
    %v1499 = vld [vmem:[#allocation4 + $0x348] sm:$0xff]
    %v1500 = vld [vmem:[#allocation4 + $0x350] sm:$0xff]
    %v1501 = vld [vmem:[#allocation4 + $0x358] sm:$0xff]
    %v1502 = vld [vmem:[#allocation4 + $0x360] sm:$0xff]
    %v1503 = vld [vmem:[#allocation4 + $0x368] sm:$0xff]
    %v1504 = vld [vmem:[#allocation4 + $0x370] sm:$0xff]
    %v1505 = vld [vmem:[#allocation4 + $0x378] sm:$0xff]
    %v1506 = vld [vmem:[#allocation4 + $0x380] sm:$0xff]
    %v1507 = vld [vmem:[#allocation4 + $0x388] sm:$0xff]
    %v1508 = vld [vmem:[#allocation4 + $0x390] sm:$0xff]
    %v1509 = vld [vmem:[#allocation4 + $0x398] sm:$0xff]
    %v1510 = vld [vmem:[#allocation4 + $0x3a0] sm:$0xff]
    %v1511 = vld [vmem:[#allocation4 + $0x3a8] sm:$0xff]
    %v1512 = vld [vmem:[#allocation4 + $0x3b0] sm:$0xff]
    %v1513 = vld [vmem:[#allocation4 + $0x3b8] sm:$0xff]
    %v1514 = vld [vmem:[#allocation4 + $0x3c0] sm:$0xff]
    %v1515 = vld [vmem:[#allocation4 + $0x3c8] sm:$0xff]
    %v1516 = vld [vmem:[#allocation4 + $0x3d0] sm:$0xff]
    %v1517 = vld [vmem:[#allocation4 + $0x3d8] sm:$0xff]
    %v1518 = vld [vmem:[#allocation4 + $0x3e0] sm:$0xff]
    %v1519 = vld [vmem:[#allocation4 + $0x3e8] sm:$0xff]
    %v1520 = vld [vmem:[#allocation4 + $0x3f0] sm:$0xff]
    %v1521 = vld [vmem:[#allocation4 + $0x3f8] sm:$0xff]
    %v1522 = vld [vmem:[%s4] sm:$0xf]
    %v1524 = vlaneseq
    %v1525 = vshrl.u32 %v1524, 7
    %v1526 = vsub.s32 0, %v1525
    %v1527 = vrot.slane %v1522, %v1526
    %v1528 = vlaneseq
    %v1529 = vshrl.u32 %v1528, 7
    %v1530 = vsub.s32 1, %v1529
    %v1531 = vrot.slane %v1522, %v1530
    %v1532 = vlaneseq
    %v1533 = vshrl.u32 %v1532, 7
    %v1534 = vsub.s32 2, %v1533
    %v1535 = vrot.slane %v1522, %v1534
    %v1536 = vlaneseq
    %v1537 = vshrl.u32 %v1536, 7
    %v1538 = vsub.s32 3, %v1537
    %v1539 = vrot.slane %v1522, %v1538
    %v1672 = vunpack.c.l.b16 %v1394
    %v1673 = vunpack.c.h.b16 %v1394
    %v1674 = vunpack.c.l.b16 %v1395
    %v1675 = vunpack.c.h.b16 %v1395
    %v1676 = vunpack.c.l.b16 %v1396
    %v1677 = vunpack.c.h.b16 %v1396
    %v1678 = vunpack.c.l.b16 %v1397
    %v1679 = vunpack.c.h.b16 %v1397
    %v1680 = vunpack.c.l.b16 %v1398
    %v1681 = vunpack.c.h.b16 %v1398
    %v1682 = vunpack.c.l.b16 %v1399
    %v1683 = vunpack.c.h.b16 %v1399
    %v1684 = vunpack.c.l.b16 %v1400
    %v1685 = vunpack.c.h.b16 %v1400
    %v1686 = vunpack.c.l.b16 %v1401
    %v1687 = vunpack.c.h.b16 %v1401
    %v1688 = vunpack.c.l.b16 %v1402
    %v1689 = vunpack.c.h.b16 %v1402
    %v1690 = vunpack.c.l.b16 %v1403
    %v1691 = vunpack.c.h.b16 %v1403
    %v1692 = vunpack.c.l.b16 %v1404
    %v1693 = vunpack.c.h.b16 %v1404
    %v1694 = vunpack.c.l.b16 %v1405
    %v1695 = vunpack.c.h.b16 %v1405
    %v1696 = vunpack.c.l.b16 %v1406
    %v1697 = vunpack.c.h.b16 %v1406
    %v1698 = vunpack.c.l.b16 %v1407
    %v1699 = vunpack.c.h.b16 %v1407
    %v1700 = vunpack.c.l.b16 %v1408
    %v1701 = vunpack.c.h.b16 %v1408
    %v1702 = vunpack.c.l.b16 %v1409
    %v1703 = vunpack.c.h.b16 %v1409
    %v1704 = vunpack.c.l.b16 %v1410
    %v1705 = vunpack.c.h.b16 %v1410
    %v1706 = vunpack.c.l.b16 %v1411
    %v1707 = vunpack.c.h.b16 %v1411
    %v1708 = vunpack.c.l.b16 %v1412
    %v1709 = vunpack.c.h.b16 %v1412
    %v1710 = vunpack.c.l.b16 %v1413
    %v1711 = vunpack.c.h.b16 %v1413
    %v1712 = vunpack.c.l.b16 %v1414
    %v1713 = vunpack.c.h.b16 %v1414
    %v1714 = vunpack.c.l.b16 %v1415
    %v1715 = vunpack.c.h.b16 %v1415
    %v1716 = vunpack.c.l.b16 %v1416
    %v1717 = vunpack.c.h.b16 %v1416
    %v1718 = vunpack.c.l.b16 %v1417
    %v1719 = vunpack.c.h.b16 %v1417
    %v1720 = vunpack.c.l.b16 %v1418
    %v1721 = vunpack.c.h.b16 %v1418
    %v1722 = vunpack.c.l.b16 %v1419
    %v1723 = vunpack.c.h.b16 %v1419
    %v1724 = vunpack.c.l.b16 %v1420
    %v1725 = vunpack.c.h.b16 %v1420
    %v1726 = vunpack.c.l.b16 %v1421
    %v1727 = vunpack.c.h.b16 %v1421
    %v1728 = vunpack.c.l.b16 %v1422
    %v1729 = vunpack.c.h.b16 %v1422
    %v1730 = vunpack.c.l.b16 %v1423
    %v1731 = vunpack.c.h.b16 %v1423
    %v1732 = vunpack.c.l.b16 %v1424
    %v1733 = vunpack.c.h.b16 %v1424
    %v1734 = vunpack.c.l.b16 %v1425
    %v1735 = vunpack.c.h.b16 %v1425
    %v1736 = vunpack.c.l.b16 %v1426
    %v1737 = vunpack.c.h.b16 %v1426
    %v1738 = vunpack.c.l.b16 %v1427
    %v1739 = vunpack.c.h.b16 %v1427
    %v1740 = vunpack.c.l.b16 %v1428
    %v1741 = vunpack.c.h.b16 %v1428
    %v1742 = vunpack.c.l.b16 %v1429
    %v1743 = vunpack.c.h.b16 %v1429
    %v1744 = vunpack.c.l.b16 %v1430
    %v1745 = vunpack.c.h.b16 %v1430
    %v1746 = vunpack.c.l.b16 %v1431
    %v1747 = vunpack.c.h.b16 %v1431
    %v1748 = vunpack.c.l.b16 %v1432
    %v1749 = vunpack.c.h.b16 %v1432
    %v1750 = vunpack.c.l.b16 %v1433
    %v1751 = vunpack.c.h.b16 %v1433
    %v1752 = vunpack.c.l.b16 %v1434
    %v1753 = vunpack.c.h.b16 %v1434
    %v1754 = vunpack.c.l.b16 %v1435
    %v1755 = vunpack.c.h.b16 %v1435
    %v1756 = vunpack.c.l.b16 %v1436
    %v1757 = vunpack.c.h.b16 %v1436
    %v1758 = vunpack.c.l.b16 %v1437
    %v1759 = vunpack.c.h.b16 %v1437
    %v1760 = vunpack.c.l.b16 %v1438
    %v1761 = vunpack.c.h.b16 %v1438
    %v1762 = vunpack.c.l.b16 %v1439
    %v1763 = vunpack.c.h.b16 %v1439
    %v1764 = vunpack.c.l.b16 %v1440
    %v1765 = vunpack.c.h.b16 %v1440
    %v1766 = vunpack.c.l.b16 %v1441
    %v1767 = vunpack.c.h.b16 %v1441
    %v1768 = vunpack.c.l.b16 %v1442
    %v1769 = vunpack.c.h.b16 %v1442
    %v1770 = vunpack.c.l.b16 %v1443
    %v1771 = vunpack.c.h.b16 %v1443
    %v1772 = vunpack.c.l.b16 %v1444
    %v1773 = vunpack.c.h.b16 %v1444
    %v1774 = vunpack.c.l.b16 %v1445
    %v1775 = vunpack.c.h.b16 %v1445
    %v1776 = vunpack.c.l.b16 %v1446
    %v1777 = vunpack.c.h.b16 %v1446
    %v1778 = vunpack.c.l.b16 %v1447
    %v1779 = vunpack.c.h.b16 %v1447
    %v1780 = vunpack.c.l.b16 %v1448
    %v1781 = vunpack.c.h.b16 %v1448
    %v1782 = vunpack.c.l.b16 %v1449
    %v1783 = vunpack.c.h.b16 %v1449
    %v1784 = vunpack.c.l.b16 %v1450
    %v1785 = vunpack.c.h.b16 %v1450
    %v1786 = vunpack.c.l.b16 %v1451
    %v1787 = vunpack.c.h.b16 %v1451
    %v1788 = vunpack.c.l.b16 %v1452
    %v1789 = vunpack.c.h.b16 %v1452
    %v1790 = vunpack.c.l.b16 %v1453
    %v1791 = vunpack.c.h.b16 %v1453
    %v1792 = vunpack.c.l.b16 %v1454
    %v1793 = vunpack.c.h.b16 %v1454
    %v1794 = vunpack.c.l.b16 %v1455
    %v1795 = vunpack.c.h.b16 %v1455
    %v1796 = vunpack.c.l.b16 %v1456
    %v1797 = vunpack.c.h.b16 %v1456
    %v1798 = vunpack.c.l.b16 %v1457
    %v1799 = vunpack.c.h.b16 %v1457
    %v1800 = vunpack.c.l.b16 %v1458
    %v1801 = vunpack.c.h.b16 %v1458
    %v1802 = vunpack.c.l.b16 %v1459
    %v1803 = vunpack.c.h.b16 %v1459
    %v1804 = vunpack.c.l.b16 %v1460
    %v1805 = vunpack.c.h.b16 %v1460
    %v1806 = vunpack.c.l.b16 %v1461
    %v1807 = vunpack.c.h.b16 %v1461
    %v1808 = vunpack.c.l.b16 %v1462
    %v1809 = vunpack.c.h.b16 %v1462
    %v1810 = vunpack.c.l.b16 %v1463
    %v1811 = vunpack.c.h.b16 %v1463
    %v1812 = vunpack.c.l.b16 %v1464
    %v1813 = vunpack.c.h.b16 %v1464
    %v1814 = vunpack.c.l.b16 %v1465
    %v1815 = vunpack.c.h.b16 %v1465
    %v1816 = vunpack.c.l.b16 %v1466
    %v1817 = vunpack.c.h.b16 %v1466
    %v1818 = vunpack.c.l.b16 %v1467
    %v1819 = vunpack.c.h.b16 %v1467
    %v1820 = vunpack.c.l.b16 %v1468
    %v1821 = vunpack.c.h.b16 %v1468
    %v1822 = vunpack.c.l.b16 %v1469
    %v1823 = vunpack.c.h.b16 %v1469
    %v1824 = vunpack.c.l.b16 %v1470
    %v1825 = vunpack.c.h.b16 %v1470
    %v1826 = vunpack.c.l.b16 %v1471
    %v1827 = vunpack.c.h.b16 %v1471
    %v1828 = vunpack.c.l.b16 %v1472
    %v1829 = vunpack.c.h.b16 %v1472
    %v1830 = vunpack.c.l.b16 %v1473
    %v1831 = vunpack.c.h.b16 %v1473
    %v1832 = vunpack.c.l.b16 %v1474
    %v1833 = vunpack.c.h.b16 %v1474
    %v1834 = vunpack.c.l.b16 %v1475
    %v1835 = vunpack.c.h.b16 %v1475
    %v1836 = vunpack.c.l.b16 %v1476
    %v1837 = vunpack.c.h.b16 %v1476
    %v1838 = vunpack.c.l.b16 %v1477
    %v1839 = vunpack.c.h.b16 %v1477
    %v1840 = vunpack.c.l.b16 %v1478
    %v1841 = vunpack.c.h.b16 %v1478
    %v1842 = vunpack.c.l.b16 %v1479
    %v1843 = vunpack.c.h.b16 %v1479
    %v1844 = vunpack.c.l.b16 %v1480
    %v1845 = vunpack.c.h.b16 %v1480
    %v1846 = vunpack.c.l.b16 %v1481
    %v1847 = vunpack.c.h.b16 %v1481
    %v1848 = vunpack.c.l.b16 %v1482
    %v1849 = vunpack.c.h.b16 %v1482
    %v1850 = vunpack.c.l.b16 %v1483
    %v1851 = vunpack.c.h.b16 %v1483
    %v1852 = vunpack.c.l.b16 %v1484
    %v1853 = vunpack.c.h.b16 %v1484
    %v1854 = vunpack.c.l.b16 %v1485
    %v1855 = vunpack.c.h.b16 %v1485
    %v1856 = vunpack.c.l.b16 %v1486
    %v1857 = vunpack.c.h.b16 %v1486
    %v1858 = vunpack.c.l.b16 %v1487
    %v1859 = vunpack.c.h.b16 %v1487
    %v1860 = vunpack.c.l.b16 %v1488
    %v1861 = vunpack.c.h.b16 %v1488
    %v1862 = vunpack.c.l.b16 %v1489
    %v1863 = vunpack.c.h.b16 %v1489
    %v1864 = vunpack.c.l.b16 %v1490
    %v1865 = vunpack.c.h.b16 %v1490
    %v1866 = vunpack.c.l.b16 %v1491
    %v1867 = vunpack.c.h.b16 %v1491
    %v1868 = vunpack.c.l.b16 %v1492
    %v1869 = vunpack.c.h.b16 %v1492
    %v1870 = vunpack.c.l.b16 %v1493
    %v1871 = vunpack.c.h.b16 %v1493
    %v1872 = vunpack.c.l.b16 %v1494
    %v1873 = vunpack.c.h.b16 %v1494
    %v1874 = vunpack.c.l.b16 %v1495
    %v1875 = vunpack.c.h.b16 %v1495
    %v1876 = vunpack.c.l.b16 %v1496
    %v1877 = vunpack.c.h.b16 %v1496
    %v1878 = vunpack.c.l.b16 %v1497
    %v1879 = vunpack.c.h.b16 %v1497
    %v1880 = vunpack.c.l.b16 %v1498
    %v1881 = vunpack.c.h.b16 %v1498
    %v1882 = vunpack.c.l.b16 %v1499
    %v1883 = vunpack.c.h.b16 %v1499
    %v1884 = vunpack.c.l.b16 %v1500
    %v1885 = vunpack.c.h.b16 %v1500
    %v1886 = vunpack.c.l.b16 %v1501
    %v1887 = vunpack.c.h.b16 %v1501
    %v1888 = vunpack.c.l.b16 %v1502
    %v1889 = vunpack.c.h.b16 %v1502
    %v1890 = vunpack.c.l.b16 %v1503
    %v1891 = vunpack.c.h.b16 %v1503
    %v1892 = vunpack.c.l.b16 %v1504
    %v1893 = vunpack.c.h.b16 %v1504
    %v1894 = vunpack.c.l.b16 %v1505
    %v1895 = vunpack.c.h.b16 %v1505
    %v1896 = vunpack.c.l.b16 %v1506
    %v1897 = vunpack.c.h.b16 %v1506
    %v1898 = vunpack.c.l.b16 %v1507
    %v1899 = vunpack.c.h.b16 %v1507
    %v1900 = vunpack.c.l.b16 %v1508
    %v1901 = vunpack.c.h.b16 %v1508
    %v1902 = vunpack.c.l.b16 %v1509
    %v1903 = vunpack.c.h.b16 %v1509
    %v1904 = vunpack.c.l.b16 %v1510
    %v1905 = vunpack.c.h.b16 %v1510
    %v1906 = vunpack.c.l.b16 %v1511
    %v1907 = vunpack.c.h.b16 %v1511
    %v1908 = vunpack.c.l.b16 %v1512
    %v1909 = vunpack.c.h.b16 %v1512
    %v1910 = vunpack.c.l.b16 %v1513
    %v1911 = vunpack.c.h.b16 %v1513
    %v1912 = vunpack.c.l.b16 %v1514
    %v1913 = vunpack.c.h.b16 %v1514
    %v1914 = vunpack.c.l.b16 %v1515
    %v1915 = vunpack.c.h.b16 %v1515
    %v1916 = vunpack.c.l.b16 %v1516
    %v1917 = vunpack.c.h.b16 %v1516
    %v1918 = vunpack.c.l.b16 %v1517
    %v1919 = vunpack.c.h.b16 %v1517
    %v1920 = vunpack.c.l.b16 %v1518
    %v1921 = vunpack.c.h.b16 %v1518
    %v1922 = vunpack.c.l.b16 %v1519
    %v1923 = vunpack.c.h.b16 %v1519
    %v1924 = vunpack.c.l.b16 %v1520
    %v1925 = vunpack.c.h.b16 %v1520
    %v1926 = vunpack.c.l.b16 %v1521
    %v1927 = vunpack.c.h.b16 %v1521
    %v1928 = vpack.c.b16 %v1676, %v1672
    %v1929 = vpack.c.b16 %v1677, %v1673
    %v1930 = vpack.c.b16 %v1678, %v1674
    %v1931 = vpack.c.b16 %v1679, %v1675
    %v1932 = vpack.c.b16 %v1684, %v1680
    %v1933 = vpack.c.b16 %v1685, %v1681
    %v1934 = vpack.c.b16 %v1686, %v1682
    %v1935 = vpack.c.b16 %v1687, %v1683
    %v1936 = vpack.c.b16 %v1692, %v1688
    %v1937 = vpack.c.b16 %v1693, %v1689
    %v1938 = vpack.c.b16 %v1694, %v1690
    %v1939 = vpack.c.b16 %v1695, %v1691
    %v1940 = vpack.c.b16 %v1700, %v1696
    %v1941 = vpack.c.b16 %v1701, %v1697
    %v1942 = vpack.c.b16 %v1702, %v1698
    %v1943 = vpack.c.b16 %v1703, %v1699
    %v1944 = vpack.c.b16 %v1708, %v1704
    %v1945 = vpack.c.b16 %v1709, %v1705
    %v1946 = vpack.c.b16 %v1710, %v1706
    %v1947 = vpack.c.b16 %v1711, %v1707
    %v1948 = vpack.c.b16 %v1716, %v1712
    %v1949 = vpack.c.b16 %v1717, %v1713
    %v1950 = vpack.c.b16 %v1718, %v1714
    %v1951 = vpack.c.b16 %v1719, %v1715
    %v1952 = vpack.c.b16 %v1724, %v1720
    %v1953 = vpack.c.b16 %v1725, %v1721
    %v1954 = vpack.c.b16 %v1726, %v1722
    %v1955 = vpack.c.b16 %v1727, %v1723
    %v1956 = vpack.c.b16 %v1732, %v1728
    %v1957 = vpack.c.b16 %v1733, %v1729
    %v1958 = vpack.c.b16 %v1734, %v1730
    %v1959 = vpack.c.b16 %v1735, %v1731
    %v1960 = vpack.c.b16 %v1740, %v1736
    %v1961 = vpack.c.b16 %v1741, %v1737
    %v1962 = vpack.c.b16 %v1742, %v1738
    %v1963 = vpack.c.b16 %v1743, %v1739
    %v1964 = vpack.c.b16 %v1748, %v1744
    %v1965 = vpack.c.b16 %v1749, %v1745
    %v1966 = vpack.c.b16 %v1750, %v1746
    %v1967 = vpack.c.b16 %v1751, %v1747
    %v1968 = vpack.c.b16 %v1756, %v1752
    %v1969 = vpack.c.b16 %v1757, %v1753
    %v1970 = vpack.c.b16 %v1758, %v1754
    %v1971 = vpack.c.b16 %v1759, %v1755
    %v1972 = vpack.c.b16 %v1764, %v1760
    %v1973 = vpack.c.b16 %v1765, %v1761
    %v1974 = vpack.c.b16 %v1766, %v1762
    %v1975 = vpack.c.b16 %v1767, %v1763
    %v1976 = vpack.c.b16 %v1772, %v1768
    %v1977 = vpack.c.b16 %v1773, %v1769
    %v1978 = vpack.c.b16 %v1774, %v1770
    %v1979 = vpack.c.b16 %v1775, %v1771
    %v1980 = vpack.c.b16 %v1780, %v1776
    %v1981 = vpack.c.b16 %v1781, %v1777
    %v1982 = vpack.c.b16 %v1782, %v1778
    %v1983 = vpack.c.b16 %v1783, %v1779
    %v1984 = vpack.c.b16 %v1788, %v1784
    %v1985 = vpack.c.b16 %v1789, %v1785
    %v1986 = vpack.c.b16 %v1790, %v1786
    %v1987 = vpack.c.b16 %v1791, %v1787
    %v1988 = vpack.c.b16 %v1796, %v1792
    %v1989 = vpack.c.b16 %v1797, %v1793
    %v1990 = vpack.c.b16 %v1798, %v1794
    %v1991 = vpack.c.b16 %v1799, %v1795
    %v1992 = vpack.c.b16 %v1804, %v1800
    %v1993 = vpack.c.b16 %v1805, %v1801
    %v1994 = vpack.c.b16 %v1806, %v1802
    %v1995 = vpack.c.b16 %v1807, %v1803
    %v1996 = vpack.c.b16 %v1812, %v1808
    %v1997 = vpack.c.b16 %v1813, %v1809
    %v1998 = vpack.c.b16 %v1814, %v1810
    %v1999 = vpack.c.b16 %v1815, %v1811
    %v2000 = vpack.c.b16 %v1820, %v1816
    %v2001 = vpack.c.b16 %v1821, %v1817
    %v2002 = vpack.c.b16 %v1822, %v1818
    %v2003 = vpack.c.b16 %v1823, %v1819
    %v2004 = vpack.c.b16 %v1828, %v1824
    %v2005 = vpack.c.b16 %v1829, %v1825
    %v2006 = vpack.c.b16 %v1830, %v1826
    %v2007 = vpack.c.b16 %v1831, %v1827
    %v2008 = vpack.c.b16 %v1836, %v1832
    %v2009 = vpack.c.b16 %v1837, %v1833
    %v2010 = vpack.c.b16 %v1838, %v1834
    %v2011 = vpack.c.b16 %v1839, %v1835
    %v2012 = vpack.c.b16 %v1844, %v1840
    %v2013 = vpack.c.b16 %v1845, %v1841
    %v2014 = vpack.c.b16 %v1846, %v1842
    %v2015 = vpack.c.b16 %v1847, %v1843
    %v2016 = vpack.c.b16 %v1852, %v1848
    %v2017 = vpack.c.b16 %v1853, %v1849
    %v2018 = vpack.c.b16 %v1854, %v1850
    %v2019 = vpack.c.b16 %v1855, %v1851
    %v2020 = vpack.c.b16 %v1860, %v1856
    %v2021 = vpack.c.b16 %v1861, %v1857
    %v2022 = vpack.c.b16 %v1862, %v1858
    %v2023 = vpack.c.b16 %v1863, %v1859
    %v2024 = vpack.c.b16 %v1868, %v1864
    %v2025 = vpack.c.b16 %v1869, %v1865
    %v2026 = vpack.c.b16 %v1870, %v1866
    %v2027 = vpack.c.b16 %v1871, %v1867
    %v2028 = vpack.c.b16 %v1876, %v1872
    %v2029 = vpack.c.b16 %v1877, %v1873
    %v2030 = vpack.c.b16 %v1878, %v1874
    %v2031 = vpack.c.b16 %v1879, %v1875
    %v2032 = vpack.c.b16 %v1884, %v1880
    %v2033 = vpack.c.b16 %v1885, %v1881
    %v2034 = vpack.c.b16 %v1886, %v1882
    %v2035 = vpack.c.b16 %v1887, %v1883
    %v2036 = vpack.c.b16 %v1892, %v1888
    %v2037 = vpack.c.b16 %v1893, %v1889
    %v2038 = vpack.c.b16 %v1894, %v1890
    %v2039 = vpack.c.b16 %v1895, %v1891
    %v2040 = vpack.c.b16 %v1900, %v1896
    %v2041 = vpack.c.b16 %v1901, %v1897
    %v2042 = vpack.c.b16 %v1902, %v1898
    %v2043 = vpack.c.b16 %v1903, %v1899
    %v2044 = vpack.c.b16 %v1908, %v1904
    %v2045 = vpack.c.b16 %v1909, %v1905
    %v2046 = vpack.c.b16 %v1910, %v1906
    %v2047 = vpack.c.b16 %v1911, %v1907
    %v2048 = vpack.c.b16 %v1916, %v1912
    %v2049 = vpack.c.b16 %v1917, %v1913
    %v2050 = vpack.c.b16 %v1918, %v1914
    %v2051 = vpack.c.b16 %v1919, %v1915
    %v2052 = vpack.c.b16 %v1924, %v1920
    %v2053 = vpack.c.b16 %v1925, %v1921
    %v2054 = vpack.c.b16 %v1926, %v1922
    %v2055 = vpack.c.b16 %v1927, %v1923
    %2184 = vmatprep.subr.bf16.mxu0 %v1957
    %2185 = vmatpush1.bf16.msra.mxu0 %v1956
    %2186 = vmatprep.subr.bf16.mxu0 %v1953
    %2187 = vmatpush1.bf16.msra.mxu0 %v1952
    %2188 = vmatprep.subr.bf16.mxu0 %v1949
    %2189 = vmatpush1.bf16.msra.mxu0 %v1948
    %2190 = vmatprep.subr.bf16.mxu0 %v1945
    %2191 = vmatpush1.bf16.msra.mxu0 %v1944
    %2192 = vmatprep.subr.bf16.mxu0 %v1941
    %2193 = vmatpush1.bf16.msra.mxu0 %v1940
    %2194 = vmatprep.subr.bf16.mxu0 %v1937
    %2195 = vmatpush1.bf16.msra.mxu0 %v1936
    %2196 = vmatprep.subr.bf16.mxu0 %v1933
    %2197 = vmatpush1.bf16.msra.mxu0 %v1932
    %2198 = vmatprep.subr.bf16.mxu0 %v1929
    %2199 = vmatpush1.bf16.msra.mxu0 %v1928
    %2200 = vmatprep.subr.bf16.mxu0 %v1989
    %2201 = vmatpush2.bf16.msra.mxu0 %v1988
    %2202 = vmatprep.subr.bf16.mxu0 %v1985
    %2203 = vmatpush2.bf16.msra.mxu0 %v1984
    %2204 = vmatprep.subr.bf16.mxu0 %v1981
    %2205 = vmatpush2.bf16.msra.mxu0 %v1980
    %2206 = vmatprep.subr.bf16.mxu0 %v1977
    %2207 = vmatpush2.bf16.msra.mxu0 %v1976
    %2208 = vmatprep.subr.bf16.mxu0 %v1973
    %2209 = vmatpush2.bf16.msra.mxu0 %v1972
    %2210 = vmatprep.subr.bf16.mxu0 %v1969
    %2211 = vmatpush2.bf16.msra.mxu0 %v1968
    %2212 = vmatprep.subr.bf16.mxu0 %v1965
    %2213 = vmatpush2.bf16.msra.mxu0 %v1964
    %2214 = vmatprep.subr.bf16.mxu0 %v1961
    %2215 = vmatpush2.bf16.msra.mxu0 %v1960
    %2216 = vmatprep.mubr.bf16.mxu0 %v1363
    %2217 = vmatmul.mubr.bf16.gmra.mxu0 %v1362
    %v2218 = vpop.f32.mrf.mxu0
    %v2219 = vadd.f32 %v1527, %v2218
    %v2220 = vpop.f32.mrf.mxu0
    %v2221 = vadd.f32 %v1531, %v2220
    %v2222 = vpop.f32.mrf.mxu0
    %v2223 = vadd.f32 %v1527, %v2222
    %v2224 = vpop.f32.mrf.mxu0
    %v2225 = vadd.f32 %v1531, %v2224
    %2226 = vmatprep.mubr.bf16.mxu0 %v1367
    %2227 = vmatmul.mubr.bf16.gmra.mxu0 %v1366
    %v2228 = vpop.f32.mrf.mxu0
    %v2229 = vadd.f32 %v1527, %v2228
    %v2230 = vpop.f32.mrf.mxu0
    %v2231 = vadd.f32 %v1531, %v2230
    %v2232 = vpop.f32.mrf.mxu0
    %v2233 = vadd.f32 %v1527, %v2232
    %v2234 = vpop.f32.mrf.mxu0
    %v2235 = vadd.f32 %v1531, %v2234
    %2236 = vmatprep.mubr.bf16.mxu0 %v1371
    %2237 = vmatmul.mubr.bf16.gmra.mxu0 %v1370
    %v2238 = vpop.f32.mrf.mxu0
    %v2239 = vadd.f32 %v1527, %v2238
    %v2240 = vpop.f32.mrf.mxu0
    %v2241 = vadd.f32 %v1531, %v2240
    %v2242 = vpop.f32.mrf.mxu0
    %v2243 = vadd.f32 %v1527, %v2242
    %v2244 = vpop.f32.mrf.mxu0
    %v2245 = vadd.f32 %v1531, %v2244
    %2246 = vmatprep.mubr.bf16.mxu0 %v1375
    %2247 = vmatmul.mubr.bf16.gmra.mxu0 %v1374
    %v2248 = vpop.f32.mrf.mxu0
    %v2249 = vadd.f32 %v1527, %v2248
    %v2250 = vpop.f32.mrf.mxu0
    %v2251 = vadd.f32 %v1531, %v2250
    %v2252 = vpop.f32.mrf.mxu0
    %v2253 = vadd.f32 %v1527, %v2252
    %v2254 = vpop.f32.mrf.mxu0
    %v2255 = vadd.f32 %v1531, %v2254
    %2256 = vmatprep.mubr.bf16.mxu0 %v1379
    %2257 = vmatmul.mubr.bf16.gmra.mxu0 %v1378
    %v2258 = vpop.f32.mrf.mxu0
    %v2259 = vadd.f32 %v1527, %v2258
    %v2260 = vpop.f32.mrf.mxu0
    %v2261 = vadd.f32 %v1531, %v2260
    %v2262 = vpop.f32.mrf.mxu0
    %v2263 = vadd.f32 %v1527, %v2262
    %v2264 = vpop.f32.mrf.mxu0
    %v2265 = vadd.f32 %v1531, %v2264
    %2266 = vmatprep.mubr.bf16.mxu0 %v1383
    %2267 = vmatmul.mubr.bf16.gmra.mxu0 %v1382
    %v2268 = vpop.f32.mrf.mxu0
    %v2269 = vadd.f32 %v1527, %v2268
    %v2270 = vpop.f32.mrf.mxu0
    %v2271 = vadd.f32 %v1531, %v2270
    %v2272 = vpop.f32.mrf.mxu0
    %v2273 = vadd.f32 %v1527, %v2272
    %v2274 = vpop.f32.mrf.mxu0
    %v2275 = vadd.f32 %v1531, %v2274
    %2276 = vmatprep.mubr.bf16.mxu0 %v1387
    %2277 = vmatmul.mubr.bf16.gmra.mxu0 %v1386
    %v2278 = vpop.f32.mrf.mxu0
    %v2279 = vadd.f32 %v1527, %v2278
    %v2280 = vpop.f32.mrf.mxu0
    %v2281 = vadd.f32 %v1531, %v2280
    %v2282 = vpop.f32.mrf.mxu0
    %v2283 = vadd.f32 %v1527, %v2282
    %v2284 = vpop.f32.mrf.mxu0
    %v2285 = vadd.f32 %v1531, %v2284
    %2286 = vmatprep.mubr.bf16.mxu0 %v1391
    %2287 = vmatmul.mubr.bf16.gmra.mxu0 %v1390
    %v2288 = vpop.f32.mrf.mxu0
    %v2289 = vadd.f32 %v1527, %v2288
    %v2290 = vpop.f32.mrf.mxu0
    %v2291 = vadd.f32 %v1531, %v2290
    %v2292 = vpop.f32.mrf.mxu0
    %v2293 = vadd.f32 %v1527, %v2292
    %v2294 = vpop.f32.mrf.mxu0
    %v2295 = vadd.f32 %v1531, %v2294
    %2296 = vdwg.mxu0
    %2297 = vmatprep.subr.bf16.mxu0 %v2021
    %2298 = vmatpush1.bf16.msra.mxu0 %v2020
    %2299 = vmatprep.subr.bf16.mxu0 %v2017
    %2300 = vmatpush1.bf16.msra.mxu0 %v2016
    %2301 = vmatprep.subr.bf16.mxu0 %v2013
    %2302 = vmatpush1.bf16.msra.mxu0 %v2012
    %2303 = vmatprep.subr.bf16.mxu0 %v2009
    %2304 = vmatpush1.bf16.msra.mxu0 %v2008
    %2305 = vmatprep.subr.bf16.mxu0 %v2005
    %2306 = vmatpush1.bf16.msra.mxu0 %v2004
    %2307 = vmatprep.subr.bf16.mxu0 %v2001
    %2308 = vmatpush1.bf16.msra.mxu0 %v2000
    %2309 = vmatprep.subr.bf16.mxu0 %v1997
    %2310 = vmatpush1.bf16.msra.mxu0 %v1996
    %2311 = vmatprep.subr.bf16.mxu0 %v1993
    %2312 = vmatpush1.bf16.msra.mxu0 %v1992
    %2313 = vmatprep.subr.bf16.mxu0 %v2053
    %2314 = vmatpush2.bf16.msra.mxu0 %v2052
    %2315 = vmatprep.subr.bf16.mxu0 %v2049
    %2316 = vmatpush2.bf16.msra.mxu0 %v2048
    %2317 = vmatprep.subr.bf16.mxu0 %v2045
    %2318 = vmatpush2.bf16.msra.mxu0 %v2044
    %2319 = vmatprep.subr.bf16.mxu0 %v2041
    %2320 = vmatpush2.bf16.msra.mxu0 %v2040
    %2321 = vmatprep.subr.bf16.mxu0 %v2037
    %2322 = vmatpush2.bf16.msra.mxu0 %v2036
    %2323 = vmatprep.subr.bf16.mxu0 %v2033
    %2324 = vmatpush2.bf16.msra.mxu0 %v2032
    %2325 = vmatprep.subr.bf16.mxu0 %v2029
    %2326 = vmatpush2.bf16.msra.mxu0 %v2028
    %2327 = vmatprep.subr.bf16.mxu0 %v2025
    %2328 = vmatpush2.bf16.msra.mxu0 %v2024
    %2329 = vmatprep.mubr.bf16.mxu0 %v1365
    %2330 = vmatmul.mubr.bf16.gmra.mxu0 %v1364
    %v2331 = vpop.f32.mrf.mxu0
    %v2332 = vadd.f32 %v2219, %v2331
    %v2333 = vpop.f32.mrf.mxu0
    %v2334 = vadd.f32 %v2221, %v2333
    %v2335 = vpop.f32.mrf.mxu0
    %v2336 = vadd.f32 %v2223, %v2335
    %v2337 = vpop.f32.mrf.mxu0
    %v2338 = vadd.f32 %v2225, %v2337
    %2339 = vmatprep.mubr.bf16.mxu0 %v1369
    %2340 = vmatmul.mubr.bf16.gmra.mxu0 %v1368
    %v2341 = vpop.f32.mrf.mxu0
    %v2342 = vadd.f32 %v2229, %v2341
    %v2343 = vpop.f32.mrf.mxu0
    %v2344 = vadd.f32 %v2231, %v2343
    %v2345 = vpop.f32.mrf.mxu0
    %v2346 = vadd.f32 %v2233, %v2345
    %v2347 = vpop.f32.mrf.mxu0
    %v2348 = vadd.f32 %v2235, %v2347
    %2349 = vmatprep.mubr.bf16.mxu0 %v1373
    %2350 = vmatmul.mubr.bf16.gmra.mxu0 %v1372
    %v2351 = vpop.f32.mrf.mxu0
    %v2352 = vadd.f32 %v2239, %v2351
    %v2353 = vpop.f32.mrf.mxu0
    %v2354 = vadd.f32 %v2241, %v2353
    %v2355 = vpop.f32.mrf.mxu0
    %v2356 = vadd.f32 %v2243, %v2355
    %v2357 = vpop.f32.mrf.mxu0
    %v2358 = vadd.f32 %v2245, %v2357
    %2359 = vmatprep.mubr.bf16.mxu0 %v1377
    %2360 = vmatmul.mubr.bf16.gmra.mxu0 %v1376
    %v2361 = vpop.f32.mrf.mxu0
    %v2362 = vadd.f32 %v2249, %v2361
    %v2363 = vpop.f32.mrf.mxu0
    %v2364 = vadd.f32 %v2251, %v2363
    %v2365 = vpop.f32.mrf.mxu0
    %v2366 = vadd.f32 %v2253, %v2365
    %v2367 = vpop.f32.mrf.mxu0
    %v2368 = vadd.f32 %v2255, %v2367
    %2369 = vmatprep.mubr.bf16.mxu0 %v1381
    %2370 = vmatmul.mubr.bf16.gmra.mxu0 %v1380
    %v2371 = vpop.f32.mrf.mxu0
    %v2372 = vadd.f32 %v2259, %v2371
    %v2373 = vpop.f32.mrf.mxu0
    %v2374 = vadd.f32 %v2261, %v2373
    %v2375 = vpop.f32.mrf.mxu0
    %v2376 = vadd.f32 %v2263, %v2375
    %v2377 = vpop.f32.mrf.mxu0
    %v2378 = vadd.f32 %v2265, %v2377
    %2379 = vmatprep.mubr.bf16.mxu0 %v1385
    %2380 = vmatmul.mubr.bf16.gmra.mxu0 %v1384
    %v2381 = vpop.f32.mrf.mxu0
    %v2382 = vadd.f32 %v2269, %v2381
    %v2383 = vpop.f32.mrf.mxu0
    %v2384 = vadd.f32 %v2271, %v2383
    %v2385 = vpop.f32.mrf.mxu0
    %v2386 = vadd.f32 %v2273, %v2385
    %v2387 = vpop.f32.mrf.mxu0
    %v2388 = vadd.f32 %v2275, %v2387
    %2389 = vmatprep.mubr.bf16.mxu0 %v1389
    %2390 = vmatmul.mubr.bf16.gmra.mxu0 %v1388
    %v2391 = vpop.f32.mrf.mxu0
    %v2392 = vadd.f32 %v2279, %v2391
    %v2393 = vpop.f32.mrf.mxu0
    %v2394 = vadd.f32 %v2281, %v2393
    %v2395 = vpop.f32.mrf.mxu0
    %v2396 = vadd.f32 %v2283, %v2395
    %v2397 = vpop.f32.mrf.mxu0
    %v2398 = vadd.f32 %v2285, %v2397
    %2399 = vmatprep.mubr.bf16.mxu0 %v1393
    %2400 = vmatmul.mubr.bf16.gmra.mxu0 %v1392
    %v2401 = vpop.f32.mrf.mxu0
    %v2402 = vadd.f32 %v2289, %v2401
    %v2403 = vpop.f32.mrf.mxu0
    %v2404 = vadd.f32 %v2291, %v2403
    %v2405 = vpop.f32.mrf.mxu0
    %v2406 = vadd.f32 %v2293, %v2405
    %v2407 = vpop.f32.mrf.mxu0
    %v2408 = vadd.f32 %v2295, %v2407
    %2409 = vdwg.mxu0
    %2410 = vmatprep.subr.bf16.mxu0 %v1959
    %2411 = vmatpush1.bf16.msra.mxu0 %v1958
    %2412 = vmatprep.subr.bf16.mxu0 %v1955
    %2413 = vmatpush1.bf16.msra.mxu0 %v1954
    %2414 = vmatprep.subr.bf16.mxu0 %v1951
    %2415 = vmatpush1.bf16.msra.mxu0 %v1950
    %2416 = vmatprep.subr.bf16.mxu0 %v1947
    %2417 = vmatpush1.bf16.msra.mxu0 %v1946
    %2418 = vmatprep.subr.bf16.mxu0 %v1943
    %2419 = vmatpush1.bf16.msra.mxu0 %v1942
    %2420 = vmatprep.subr.bf16.mxu0 %v1939
    %2421 = vmatpush1.bf16.msra.mxu0 %v1938
    %2422 = vmatprep.subr.bf16.mxu0 %v1935
    %2423 = vmatpush1.bf16.msra.mxu0 %v1934
    %2424 = vmatprep.subr.bf16.mxu0 %v1931
    %2425 = vmatpush1.bf16.msra.mxu0 %v1930
    %2426 = vmatprep.subr.bf16.mxu0 %v1991
    %2427 = vmatpush2.bf16.msra.mxu0 %v1990
    %2428 = vmatprep.subr.bf16.mxu0 %v1987
    %2429 = vmatpush2.bf16.msra.mxu0 %v1986
    %2430 = vmatprep.subr.bf16.mxu0 %v1983
    %2431 = vmatpush2.bf16.msra.mxu0 %v1982
    %2432 = vmatprep.subr.bf16.mxu0 %v1979
    %2433 = vmatpush2.bf16.msra.mxu0 %v1978
    %2434 = vmatprep.subr.bf16.mxu0 %v1975
    %2435 = vmatpush2.bf16.msra.mxu0 %v1974
    %2436 = vmatprep.subr.bf16.mxu0 %v1971
    %2437 = vmatpush2.bf16.msra.mxu0 %v1970
    %2438 = vmatprep.subr.bf16.mxu0 %v1967
    %2439 = vmatpush2.bf16.msra.mxu0 %v1966
    %2440 = vmatprep.subr.bf16.mxu0 %v1963
    %2441 = vmatpush2.bf16.msra.mxu0 %v1962
    %2442 = vmatprep.mubr.bf16.mxu0 %v1363
    %2443 = vmatmul.mubr.bf16.gmra.mxu0 %v1362
    %v2444 = vpop.f32.mrf.mxu0
    %v2445 = vadd.f32 %v1535, %v2444
    %v2446 = vpop.f32.mrf.mxu0
    %v2447 = vadd.f32 %v1539, %v2446
    %v2448 = vpop.f32.mrf.mxu0
    %v2449 = vadd.f32 %v1535, %v2448
    %v2450 = vpop.f32.mrf.mxu0
    %v2451 = vadd.f32 %v1539, %v2450
    %2452 = vmatprep.mubr.bf16.mxu0 %v1367
    %2453 = vmatmul.mubr.bf16.gmra.mxu0 %v1366
    %v2454 = vpop.f32.mrf.mxu0
    %v2455 = vadd.f32 %v1535, %v2454
    %v2456 = vpop.f32.mrf.mxu0
    %v2457 = vadd.f32 %v1539, %v2456
    %v2458 = vpop.f32.mrf.mxu0
    %v2459 = vadd.f32 %v1535, %v2458
    %v2460 = vpop.f32.mrf.mxu0
    %v2461 = vadd.f32 %v1539, %v2460
    %2462 = vmatprep.mubr.bf16.mxu0 %v1371
    %2463 = vmatmul.mubr.bf16.gmra.mxu0 %v1370
    %v2464 = vpop.f32.mrf.mxu0
    %v2465 = vadd.f32 %v1535, %v2464
    %v2466 = vpop.f32.mrf.mxu0
    %v2467 = vadd.f32 %v1539, %v2466
    %v2468 = vpop.f32.mrf.mxu0
    %v2469 = vadd.f32 %v1535, %v2468
    %v2470 = vpop.f32.mrf.mxu0
    %v2471 = vadd.f32 %v1539, %v2470
    %2472 = vmatprep.mubr.bf16.mxu0 %v1375
    %2473 = vmatmul.mubr.bf16.gmra.mxu0 %v1374
    %v2474 = vpop.f32.mrf.mxu0
    %v2475 = vadd.f32 %v1535, %v2474
    %v2476 = vpop.f32.mrf.mxu0
    %v2477 = vadd.f32 %v1539, %v2476
    %v2478 = vpop.f32.mrf.mxu0
    %v2479 = vadd.f32 %v1535, %v2478
    %v2480 = vpop.f32.mrf.mxu0
    %v2481 = vadd.f32 %v1539, %v2480
    %2482 = vmatprep.mubr.bf16.mxu0 %v1379
    %2483 = vmatmul.mubr.bf16.gmra.mxu0 %v1378
    %v2484 = vpop.f32.mrf.mxu0
    %v2485 = vadd.f32 %v1535, %v2484
    %v2486 = vpop.f32.mrf.mxu0
    %v2487 = vadd.f32 %v1539, %v2486
    %v2488 = vpop.f32.mrf.mxu0
    %v2489 = vadd.f32 %v1535, %v2488
    %v2490 = vpop.f32.mrf.mxu0
    %v2491 = vadd.f32 %v1539, %v2490
    %2492 = vmatprep.mubr.bf16.mxu0 %v1383
    %2493 = vmatmul.mubr.bf16.gmra.mxu0 %v1382
    %v2494 = vpop.f32.mrf.mxu0
    %v2495 = vadd.f32 %v1535, %v2494
    %v2496 = vpop.f32.mrf.mxu0
    %v2497 = vadd.f32 %v1539, %v2496
    %v2498 = vpop.f32.mrf.mxu0
    %v2499 = vadd.f32 %v1535, %v2498
    %v2500 = vpop.f32.mrf.mxu0
    %v2501 = vadd.f32 %v1539, %v2500
    %2502 = vmatprep.mubr.bf16.mxu0 %v1387
    %2503 = vmatmul.mubr.bf16.gmra.mxu0 %v1386
    %v2504 = vpop.f32.mrf.mxu0
    %v2505 = vadd.f32 %v1535, %v2504
    %v2506 = vpop.f32.mrf.mxu0
    %v2507 = vadd.f32 %v1539, %v2506
    %v2508 = vpop.f32.mrf.mxu0
    %v2509 = vadd.f32 %v1535, %v2508
    %v2510 = vpop.f32.mrf.mxu0
    %v2511 = vadd.f32 %v1539, %v2510
    %2512 = vmatprep.mubr.bf16.mxu0 %v1391
    %2513 = vmatmul.mubr.bf16.gmra.mxu0 %v1390
    %v2514 = vpop.f32.mrf.mxu0
    %v2515 = vadd.f32 %v1535, %v2514
    %v2516 = vpop.f32.mrf.mxu0
    %v2517 = vadd.f32 %v1539, %v2516
    %v2518 = vpop.f32.mrf.mxu0
    %v2519 = vadd.f32 %v1535, %v2518
    %v2520 = vpop.f32.mrf.mxu0
    %v2521 = vadd.f32 %v1539, %v2520
    %2522 = vdwg.mxu0
    %2523 = vmatprep.subr.bf16.mxu0 %v2023
    %2524 = vmatpush1.bf16.msra.mxu0 %v2022
    %2525 = vmatprep.subr.bf16.mxu0 %v2019
    %2526 = vmatpush1.bf16.msra.mxu0 %v2018
    %2527 = vmatprep.subr.bf16.mxu0 %v2015
    %2528 = vmatpush1.bf16.msra.mxu0 %v2014
    %2529 = vmatprep.subr.bf16.mxu0 %v2011
    %2530 = vmatpush1.bf16.msra.mxu0 %v2010
    %2531 = vmatprep.subr.bf16.mxu0 %v2007
    %2532 = vmatpush1.bf16.msra.mxu0 %v2006
    %2533 = vmatprep.subr.bf16.mxu0 %v2003
    %2534 = vmatpush1.bf16.msra.mxu0 %v2002
    %2535 = vmatprep.subr.bf16.mxu0 %v1999
    %2536 = vmatpush1.bf16.msra.mxu0 %v1998
    %2537 = vmatprep.subr.bf16.mxu0 %v1995
    %2538 = vmatpush1.bf16.msra.mxu0 %v1994
    %2539 = vmatprep.subr.bf16.mxu0 %v2055
    %2540 = vmatpush2.bf16.msra.mxu0 %v2054
    %2541 = vmatprep.subr.bf16.mxu0 %v2051
    %2542 = vmatpush2.bf16.msra.mxu0 %v2050
    %2543 = vmatprep.subr.bf16.mxu0 %v2047
    %2544 = vmatpush2.bf16.msra.mxu0 %v2046
    %2545 = vmatprep.subr.bf16.mxu0 %v2043
    %2546 = vmatpush2.bf16.msra.mxu0 %v2042
    %2547 = vmatprep.subr.bf16.mxu0 %v2039
    %2548 = vmatpush2.bf16.msra.mxu0 %v2038
    %2549 = vmatprep.subr.bf16.mxu0 %v2035
    %2550 = vmatpush2.bf16.msra.mxu0 %v2034
    %2551 = vmatprep.subr.bf16.mxu0 %v2031
    %2552 = vmatpush2.bf16.msra.mxu0 %v2030
    %2553 = vmatprep.subr.bf16.mxu0 %v2027
    %2554 = vmatpush2.bf16.msra.mxu0 %v2026
    %2555 = vmatprep.mubr.bf16.mxu0 %v1365
    %2556 = vmatmul.mubr.bf16.gmra.mxu0 %v1364
    %v2557 = vpop.f32.mrf.mxu0
    %v2558 = vadd.f32 %v2445, %v2557
    %v2559 = vpop.f32.mrf.mxu0
    %v2560 = vadd.f32 %v2447, %v2559
    %v2561 = vpop.f32.mrf.mxu0
    %v2562 = vadd.f32 %v2449, %v2561
    %v2563 = vpop.f32.mrf.mxu0
    %v2564 = vadd.f32 %v2451, %v2563
    %2565 = vmatprep.mubr.bf16.mxu0 %v1369
    %2566 = vmatmul.mubr.bf16.gmra.mxu0 %v1368
    %v2567 = vpop.f32.mrf.mxu0
    %v2568 = vadd.f32 %v2455, %v2567
    %v2569 = vpop.f32.mrf.mxu0
    %v2570 = vadd.f32 %v2457, %v2569
    %v2571 = vpop.f32.mrf.mxu0
    %v2572 = vadd.f32 %v2459, %v2571
    %v2573 = vpop.f32.mrf.mxu0
    %v2574 = vadd.f32 %v2461, %v2573
    %2575 = vmatprep.mubr.bf16.mxu0 %v1373
    %2576 = vmatmul.mubr.bf16.gmra.mxu0 %v1372
    %v2577 = vpop.f32.mrf.mxu0
    %v2578 = vadd.f32 %v2465, %v2577
    %v2579 = vpop.f32.mrf.mxu0
    %v2580 = vadd.f32 %v2467, %v2579
    %v2581 = vpop.f32.mrf.mxu0
    %v2582 = vadd.f32 %v2469, %v2581
    %v2583 = vpop.f32.mrf.mxu0
    %v2584 = vadd.f32 %v2471, %v2583
    %2585 = vmatprep.mubr.bf16.mxu0 %v1377
    %2586 = vmatmul.mubr.bf16.gmra.mxu0 %v1376
    %v2587 = vpop.f32.mrf.mxu0
    %v2588 = vadd.f32 %v2475, %v2587
    %v2589 = vpop.f32.mrf.mxu0
    %v2590 = vadd.f32 %v2477, %v2589
    %v2591 = vpop.f32.mrf.mxu0
    %v2592 = vadd.f32 %v2479, %v2591
    %v2593 = vpop.f32.mrf.mxu0
    %v2594 = vadd.f32 %v2481, %v2593
    %2595 = vmatprep.mubr.bf16.mxu0 %v1381
    %2596 = vmatmul.mubr.bf16.gmra.mxu0 %v1380
    %v2597 = vpop.f32.mrf.mxu0
    %v2598 = vadd.f32 %v2485, %v2597
    %v2599 = vpop.f32.mrf.mxu0
    %v2600 = vadd.f32 %v2487, %v2599
    %v2601 = vpop.f32.mrf.mxu0
    %v2602 = vadd.f32 %v2489, %v2601
    %v2603 = vpop.f32.mrf.mxu0
    %v2604 = vadd.f32 %v2491, %v2603
    %2605 = vmatprep.mubr.bf16.mxu0 %v1385
    %2606 = vmatmul.mubr.bf16.gmra.mxu0 %v1384
    %v2607 = vpop.f32.mrf.mxu0
    %v2608 = vadd.f32 %v2495, %v2607
    %v2609 = vpop.f32.mrf.mxu0
    %v2610 = vadd.f32 %v2497, %v2609
    %v2611 = vpop.f32.mrf.mxu0
    %v2612 = vadd.f32 %v2499, %v2611
    %v2613 = vpop.f32.mrf.mxu0
    %v2614 = vadd.f32 %v2501, %v2613
    %2615 = vmatprep.mubr.bf16.mxu0 %v1389
    %2616 = vmatmul.mubr.bf16.gmra.mxu0 %v1388
    %v2617 = vpop.f32.mrf.mxu0
    %v2618 = vadd.f32 %v2505, %v2617
    %v2619 = vpop.f32.mrf.mxu0
    %v2620 = vadd.f32 %v2507, %v2619
    %v2621 = vpop.f32.mrf.mxu0
    %v2622 = vadd.f32 %v2509, %v2621
    %v2623 = vpop.f32.mrf.mxu0
    %v2624 = vadd.f32 %v2511, %v2623
    %2625 = vmatprep.mubr.bf16.mxu0 %v1393
    %2626 = vmatmul.mubr.bf16.gmra.mxu0 %v1392
    %v2627 = vpop.f32.mrf.mxu0
    %v2628 = vadd.f32 %v2515, %v2627
    %v2629 = vpop.f32.mrf.mxu0
    %v2630 = vadd.f32 %v2517, %v2629
    %v2631 = vpop.f32.mrf.mxu0
    %v2632 = vadd.f32 %v2519, %v2631
    %v2633 = vpop.f32.mrf.mxu0
    %v2634 = vadd.f32 %v2521, %v2633
    %2635 = vdwg.mxu0
    %v2636 = vmax.f32 %v2332, 0.0
    %v2637 = vmax.f32 %v2334, 0.0
    %v2638 = vmax.f32 %v2558, 0.0
    %v2639 = vmax.f32 %v2560, 0.0
    %v2640 = vmax.f32 %v2336, 0.0
    %v2641 = vmax.f32 %v2338, 0.0
    %v2642 = vmax.f32 %v2562, 0.0
    %v2643 = vmax.f32 %v2564, 0.0
    %v2644 = vmax.f32 %v2342, 0.0
    %v2645 = vmax.f32 %v2344, 0.0
    %v2646 = vmax.f32 %v2568, 0.0
    %v2647 = vmax.f32 %v2570, 0.0
    %v2648 = vmax.f32 %v2346, 0.0
    %v2649 = vmax.f32 %v2348, 0.0
    %v2650 = vmax.f32 %v2572, 0.0
    %v2651 = vmax.f32 %v2574, 0.0
    %v2652 = vmax.f32 %v2352, 0.0
    %v2653 = vmax.f32 %v2354, 0.0
    %v2654 = vmax.f32 %v2578, 0.0
    %v2655 = vmax.f32 %v2580, 0.0
    %v2656 = vmax.f32 %v2356, 0.0
    %v2657 = vmax.f32 %v2358, 0.0
    %v2658 = vmax.f32 %v2582, 0.0
    %v2659 = vmax.f32 %v2584, 0.0
    %v2660 = vmax.f32 %v2362, 0.0
    %v2661 = vmax.f32 %v2364, 0.0
    %v2662 = vmax.f32 %v2588, 0.0
    %v2663 = vmax.f32 %v2590, 0.0
    %v2664 = vmax.f32 %v2366, 0.0
    %v2665 = vmax.f32 %v2368, 0.0
    %v2666 = vmax.f32 %v2592, 0.0
    %v2667 = vmax.f32 %v2594, 0.0
    %v2668 = vmax.f32 %v2372, 0.0
    %v2669 = vmax.f32 %v2374, 0.0
    %v2670 = vmax.f32 %v2598, 0.0
    %v2671 = vmax.f32 %v2600, 0.0
    %v2672 = vmax.f32 %v2376, 0.0
    %v2673 = vmax.f32 %v2378, 0.0
    %v2674 = vmax.f32 %v2602, 0.0
    %v2675 = vmax.f32 %v2604, 0.0
    %v2676 = vmax.f32 %v2382, 0.0
    %v2677 = vmax.f32 %v2384, 0.0
    %v2678 = vmax.f32 %v2608, 0.0
    %v2679 = vmax.f32 %v2610, 0.0
    %v2680 = vmax.f32 %v2386, 0.0
    %v2681 = vmax.f32 %v2388, 0.0
    %v2682 = vmax.f32 %v2612, 0.0
    %v2683 = vmax.f32 %v2614, 0.0
    %v2684 = vmax.f32 %v2392, 0.0
    %v2685 = vmax.f32 %v2394, 0.0
    %v2686 = vmax.f32 %v2618, 0.0
    %v2687 = vmax.f32 %v2620, 0.0
    %v2688 = vmax.f32 %v2396, 0.0
    %v2689 = vmax.f32 %v2398, 0.0
    %v2690 = vmax.f32 %v2622, 0.0
    %v2691 = vmax.f32 %v2624, 0.0
    %v2692 = vmax.f32 %v2402, 0.0
    %v2693 = vmax.f32 %v2404, 0.0
    %v2694 = vmax.f32 %v2628, 0.0
    %v2695 = vmax.f32 %v2630, 0.0
    %v2696 = vmax.f32 %v2406, 0.0
    %v2697 = vmax.f32 %v2408, 0.0
    %v2698 = vmax.f32 %v2632, 0.0
    %v2699 = vmax.f32 %v2634, 0.0
    %v2700 = vpack.c.bf16 %v2640, %v2636
    %v2701 = vpack.c.bf16 %v2641, %v2637
    %v2702 = vpack.c.bf16 %v2642, %v2638
    %v2703 = vpack.c.bf16 %v2643, %v2639
    %v2704 = vpack.c.bf16 %v2648, %v2644
    %v2705 = vpack.c.bf16 %v2649, %v2645
    %v2706 = vpack.c.bf16 %v2650, %v2646
    %v2707 = vpack.c.bf16 %v2651, %v2647
    %v2708 = vpack.c.bf16 %v2656, %v2652
    %v2709 = vpack.c.bf16 %v2657, %v2653
    %v2710 = vpack.c.bf16 %v2658, %v2654
    %v2711 = vpack.c.bf16 %v2659, %v2655
    %v2712 = vpack.c.bf16 %v2664, %v2660
    %v2713 = vpack.c.bf16 %v2665, %v2661
    %v2714 = vpack.c.bf16 %v2666, %v2662
    %v2715 = vpack.c.bf16 %v2667, %v2663
    %v2716 = vpack.c.bf16 %v2672, %v2668
    %v2717 = vpack.c.bf16 %v2673, %v2669
    %v2718 = vpack.c.bf16 %v2674, %v2670
    %v2719 = vpack.c.bf16 %v2675, %v2671
    %v2720 = vpack.c.bf16 %v2680, %v2676
    %v2721 = vpack.c.bf16 %v2681, %v2677
    %v2722 = vpack.c.bf16 %v2682, %v2678
    %v2723 = vpack.c.bf16 %v2683, %v2679
    %v2724 = vpack.c.bf16 %v2688, %v2684
    %v2725 = vpack.c.bf16 %v2689, %v2685
    %v2726 = vpack.c.bf16 %v2690, %v2686
    %v2727 = vpack.c.bf16 %v2691, %v2687
    %v2728 = vpack.c.bf16 %v2696, %v2692
    %v2729 = vpack.c.bf16 %v2697, %v2693
    %v2730 = vpack.c.bf16 %v2698, %v2694
    %v2731 = vpack.c.bf16 %v2699, %v2695
    %v2732 = vld [vmem:[#allocation6] sm:$0xff]
    %v2733 = vld [vmem:[#allocation6 + $0x8] sm:$0xff]
    %v2734 = vld [vmem:[#allocation6 + $0x10] sm:$0xff]
    %v2735 = vld [vmem:[#allocation6 + $0x18] sm:$0xff]
    %v2736 = vld [vmem:[#allocation6 + $0x20] sm:$0xff]
    %v2737 = vld [vmem:[#allocation6 + $0x28] sm:$0xff]
    %v2738 = vld [vmem:[#allocation6 + $0x30] sm:$0xff]
    %v2739 = vld [vmem:[#allocation6 + $0x38] sm:$0xff]
    %v2740 = vld [vmem:[#allocation6 + $0x40] sm:$0xff]
    %v2741 = vld [vmem:[#allocation6 + $0x48] sm:$0xff]
    %v2742 = vld [vmem:[#allocation6 + $0x50] sm:$0xff]
    %v2743 = vld [vmem:[#allocation6 + $0x58] sm:$0xff]
    %v2744 = vld [vmem:[#allocation6 + $0x60] sm:$0xff]
    %v2745 = vld [vmem:[#allocation6 + $0x68] sm:$0xff]
    %v2746 = vld [vmem:[#allocation6 + $0x70] sm:$0xff]
    %v2747 = vld [vmem:[#allocation6 + $0x78] sm:$0xff]
    %v2748 = vld [vmem:[#allocation6 + $0x80] sm:$0xff]
    %v2749 = vld [vmem:[#allocation6 + $0x88] sm:$0xff]
    %v2750 = vld [vmem:[#allocation6 + $0x90] sm:$0xff]
    %v2751 = vld [vmem:[#allocation6 + $0x98] sm:$0xff]
    %v2752 = vld [vmem:[#allocation6 + $0xa0] sm:$0xff]
    %v2753 = vld [vmem:[#allocation6 + $0xa8] sm:$0xff]
    %v2754 = vld [vmem:[#allocation6 + $0xb0] sm:$0xff]
    %v2755 = vld [vmem:[#allocation6 + $0xb8] sm:$0xff]
    %v2756 = vld [vmem:[#allocation6 + $0xc0] sm:$0xff]
    %v2757 = vld [vmem:[#allocation6 + $0xc8] sm:$0xff]
    %v2758 = vld [vmem:[#allocation6 + $0xd0] sm:$0xff]
    %v2759 = vld [vmem:[#allocation6 + $0xd8] sm:$0xff]
    %v2760 = vld [vmem:[#allocation6 + $0xe0] sm:$0xff]
    %v2761 = vld [vmem:[#allocation6 + $0xe8] sm:$0xff]
    %v2762 = vld [vmem:[#allocation6 + $0xf0] sm:$0xff]
    %v2763 = vld [vmem:[#allocation6 + $0xf8] sm:$0xff]
    %v2764 = vld [vmem:[#allocation6 + $0x100] sm:$0xff]
    %v2765 = vld [vmem:[#allocation6 + $0x108] sm:$0xff]
    %v2766 = vld [vmem:[#allocation6 + $0x110] sm:$0xff]
    %v2767 = vld [vmem:[#allocation6 + $0x118] sm:$0xff]
    %v2768 = vld [vmem:[#allocation6 + $0x120] sm:$0xff]
    %v2769 = vld [vmem:[#allocation6 + $0x128] sm:$0xff]
    %v2770 = vld [vmem:[#allocation6 + $0x130] sm:$0xff]
    %v2771 = vld [vmem:[#allocation6 + $0x138] sm:$0xff]
    %v2772 = vld [vmem:[#allocation6 + $0x140] sm:$0xff]
    %v2773 = vld [vmem:[#allocation6 + $0x148] sm:$0xff]
    %v2774 = vld [vmem:[#allocation6 + $0x150] sm:$0xff]
    %v2775 = vld [vmem:[#allocation6 + $0x158] sm:$0xff]
    %v2776 = vld [vmem:[#allocation6 + $0x160] sm:$0xff]
    %v2777 = vld [vmem:[#allocation6 + $0x168] sm:$0xff]
    %v2778 = vld [vmem:[#allocation6 + $0x170] sm:$0xff]
    %v2779 = vld [vmem:[#allocation6 + $0x178] sm:$0xff]
    %v2780 = vld [vmem:[#allocation6 + $0x180] sm:$0xff]
    %v2781 = vld [vmem:[#allocation6 + $0x188] sm:$0xff]
    %v2782 = vld [vmem:[#allocation6 + $0x190] sm:$0xff]
    %v2783 = vld [vmem:[#allocation6 + $0x198] sm:$0xff]
    %v2784 = vld [vmem:[#allocation6 + $0x1a0] sm:$0xff]
    %v2785 = vld [vmem:[#allocation6 + $0x1a8] sm:$0xff]
    %v2786 = vld [vmem:[#allocation6 + $0x1b0] sm:$0xff]
    %v2787 = vld [vmem:[#allocation6 + $0x1b8] sm:$0xff]
    %v2788 = vld [vmem:[#allocation6 + $0x1c0] sm:$0xff]
    %v2789 = vld [vmem:[#allocation6 + $0x1c8] sm:$0xff]
    %v2790 = vld [vmem:[#allocation6 + $0x1d0] sm:$0xff]
    %v2791 = vld [vmem:[#allocation6 + $0x1d8] sm:$0xff]
    %v2792 = vld [vmem:[#allocation6 + $0x1e0] sm:$0xff]
    %v2793 = vld [vmem:[#allocation6 + $0x1e8] sm:$0xff]
    %v2794 = vld [vmem:[#allocation6 + $0x1f0] sm:$0xff]
    %v2795 = vld [vmem:[#allocation6 + $0x1f8] sm:$0xff]
    %v2796 = vld [vmem:[%s6] sm:$0x3]
    %v2798 = vlaneseq
    %v2799 = vshrl.u32 %v2798, 7
    %v2800 = vsub.s32 0, %v2799
    %v2801 = vrot.slane %v2796, %v2800
    %v2802 = vlaneseq
    %v2803 = vshrl.u32 %v2802, 7
    %v2804 = vsub.s32 1, %v2803
    %v2805 = vrot.slane %v2796, %v2804
    %v2872 = vunpack.c.l.b16 %v2732
    %v2873 = vunpack.c.h.b16 %v2732
    %v2874 = vunpack.c.l.b16 %v2733
    %v2875 = vunpack.c.h.b16 %v2733
    %v2876 = vunpack.c.l.b16 %v2734
    %v2877 = vunpack.c.h.b16 %v2734
    %v2878 = vunpack.c.l.b16 %v2735
    %v2879 = vunpack.c.h.b16 %v2735
    %v2880 = vunpack.c.l.b16 %v2736
    %v2881 = vunpack.c.h.b16 %v2736
    %v2882 = vunpack.c.l.b16 %v2737
    %v2883 = vunpack.c.h.b16 %v2737
    %v2884 = vunpack.c.l.b16 %v2738
    %v2885 = vunpack.c.h.b16 %v2738
    %v2886 = vunpack.c.l.b16 %v2739
    %v2887 = vunpack.c.h.b16 %v2739
    %v2888 = vunpack.c.l.b16 %v2740
    %v2889 = vunpack.c.h.b16 %v2740
    %v2890 = vunpack.c.l.b16 %v2741
    %v2891 = vunpack.c.h.b16 %v2741
    %v2892 = vunpack.c.l.b16 %v2742
    %v2893 = vunpack.c.h.b16 %v2742
    %v2894 = vunpack.c.l.b16 %v2743
    %v2895 = vunpack.c.h.b16 %v2743
    %v2896 = vunpack.c.l.b16 %v2744
    %v2897 = vunpack.c.h.b16 %v2744
    %v2898 = vunpack.c.l.b16 %v2745
    %v2899 = vunpack.c.h.b16 %v2745
    %v2900 = vunpack.c.l.b16 %v2746
    %v2901 = vunpack.c.h.b16 %v2746
    %v2902 = vunpack.c.l.b16 %v2747
    %v2903 = vunpack.c.h.b16 %v2747
    %v2904 = vunpack.c.l.b16 %v2748
    %v2905 = vunpack.c.h.b16 %v2748
    %v2906 = vunpack.c.l.b16 %v2749
    %v2907 = vunpack.c.h.b16 %v2749
    %v2908 = vunpack.c.l.b16 %v2750
    %v2909 = vunpack.c.h.b16 %v2750
    %v2910 = vunpack.c.l.b16 %v2751
    %v2911 = vunpack.c.h.b16 %v2751
    %v2912 = vunpack.c.l.b16 %v2752
    %v2913 = vunpack.c.h.b16 %v2752
    %v2914 = vunpack.c.l.b16 %v2753
    %v2915 = vunpack.c.h.b16 %v2753
    %v2916 = vunpack.c.l.b16 %v2754
    %v2917 = vunpack.c.h.b16 %v2754
    %v2918 = vunpack.c.l.b16 %v2755
    %v2919 = vunpack.c.h.b16 %v2755
    %v2920 = vunpack.c.l.b16 %v2756
    %v2921 = vunpack.c.h.b16 %v2756
    %v2922 = vunpack.c.l.b16 %v2757
    %v2923 = vunpack.c.h.b16 %v2757
    %v2924 = vunpack.c.l.b16 %v2758
    %v2925 = vunpack.c.h.b16 %v2758
    %v2926 = vunpack.c.l.b16 %v2759
    %v2927 = vunpack.c.h.b16 %v2759
    %v2928 = vunpack.c.l.b16 %v2760
    %v2929 = vunpack.c.h.b16 %v2760
    %v2930 = vunpack.c.l.b16 %v2761
    %v2931 = vunpack.c.h.b16 %v2761
    %v2932 = vunpack.c.l.b16 %v2762
    %v2933 = vunpack.c.h.b16 %v2762
    %v2934 = vunpack.c.l.b16 %v2763
    %v2935 = vunpack.c.h.b16 %v2763
    %v2936 = vunpack.c.l.b16 %v2764
    %v2937 = vunpack.c.h.b16 %v2764
    %v2938 = vunpack.c.l.b16 %v2765
    %v2939 = vunpack.c.h.b16 %v2765
    %v2940 = vunpack.c.l.b16 %v2766
    %v2941 = vunpack.c.h.b16 %v2766
    %v2942 = vunpack.c.l.b16 %v2767
    %v2943 = vunpack.c.h.b16 %v2767
    %v2944 = vunpack.c.l.b16 %v2768
    %v2945 = vunpack.c.h.b16 %v2768
    %v2946 = vunpack.c.l.b16 %v2769
    %v2947 = vunpack.c.h.b16 %v2769
    %v2948 = vunpack.c.l.b16 %v2770
    %v2949 = vunpack.c.h.b16 %v2770
    %v2950 = vunpack.c.l.b16 %v2771
    %v2951 = vunpack.c.h.b16 %v2771
    %v2952 = vunpack.c.l.b16 %v2772
    %v2953 = vunpack.c.h.b16 %v2772
    %v2954 = vunpack.c.l.b16 %v2773
    %v2955 = vunpack.c.h.b16 %v2773
    %v2956 = vunpack.c.l.b16 %v2774
    %v2957 = vunpack.c.h.b16 %v2774
    %v2958 = vunpack.c.l.b16 %v2775
    %v2959 = vunpack.c.h.b16 %v2775
    %v2960 = vunpack.c.l.b16 %v2776
    %v2961 = vunpack.c.h.b16 %v2776
    %v2962 = vunpack.c.l.b16 %v2777
    %v2963 = vunpack.c.h.b16 %v2777
    %v2964 = vunpack.c.l.b16 %v2778
    %v2965 = vunpack.c.h.b16 %v2778
    %v2966 = vunpack.c.l.b16 %v2779
    %v2967 = vunpack.c.h.b16 %v2779
    %v2968 = vunpack.c.l.b16 %v2780
    %v2969 = vunpack.c.h.b16 %v2780
    %v2970 = vunpack.c.l.b16 %v2781
    %v2971 = vunpack.c.h.b16 %v2781
    %v2972 = vunpack.c.l.b16 %v2782
    %v2973 = vunpack.c.h.b16 %v2782
    %v2974 = vunpack.c.l.b16 %v2783
    %v2975 = vunpack.c.h.b16 %v2783
    %v2976 = vunpack.c.l.b16 %v2784
    %v2977 = vunpack.c.h.b16 %v2784
    %v2978 = vunpack.c.l.b16 %v2785
    %v2979 = vunpack.c.h.b16 %v2785
    %v2980 = vunpack.c.l.b16 %v2786
    %v2981 = vunpack.c.h.b16 %v2786
    %v2982 = vunpack.c.l.b16 %v2787
    %v2983 = vunpack.c.h.b16 %v2787
    %v2984 = vunpack.c.l.b16 %v2788
    %v2985 = vunpack.c.h.b16 %v2788
    %v2986 = vunpack.c.l.b16 %v2789
    %v2987 = vunpack.c.h.b16 %v2789
    %v2988 = vunpack.c.l.b16 %v2790
    %v2989 = vunpack.c.h.b16 %v2790
    %v2990 = vunpack.c.l.b16 %v2791
    %v2991 = vunpack.c.h.b16 %v2791
    %v2992 = vunpack.c.l.b16 %v2792
    %v2993 = vunpack.c.h.b16 %v2792
    %v2994 = vunpack.c.l.b16 %v2793
    %v2995 = vunpack.c.h.b16 %v2793
    %v2996 = vunpack.c.l.b16 %v2794
    %v2997 = vunpack.c.h.b16 %v2794
    %v2998 = vunpack.c.l.b16 %v2795
    %v2999 = vunpack.c.h.b16 %v2795
    %v3000 = vpack.c.b16 %v2874, %v2872
    %v3001 = vpack.c.b16 %v2875, %v2873
    %v3002 = vpack.c.b16 %v2878, %v2876
    %v3003 = vpack.c.b16 %v2879, %v2877
    %v3004 = vpack.c.b16 %v2882, %v2880
    %v3005 = vpack.c.b16 %v2883, %v2881
    %v3006 = vpack.c.b16 %v2886, %v2884
    %v3007 = vpack.c.b16 %v2887, %v2885
    %v3008 = vpack.c.b16 %v2890, %v2888
    %v3009 = vpack.c.b16 %v2891, %v2889
    %v3010 = vpack.c.b16 %v2894, %v2892
    %v3011 = vpack.c.b16 %v2895, %v2893
    %v3012 = vpack.c.b16 %v2898, %v2896
    %v3013 = vpack.c.b16 %v2899, %v2897
    %v3014 = vpack.c.b16 %v2902, %v2900
    %v3015 = vpack.c.b16 %v2903, %v2901
    %v3016 = vpack.c.b16 %v2906, %v2904
    %v3017 = vpack.c.b16 %v2907, %v2905
    %v3018 = vpack.c.b16 %v2910, %v2908
    %v3019 = vpack.c.b16 %v2911, %v2909
    %v3020 = vpack.c.b16 %v2914, %v2912
    %v3021 = vpack.c.b16 %v2915, %v2913
    %v3022 = vpack.c.b16 %v2918, %v2916
    %v3023 = vpack.c.b16 %v2919, %v2917
    %v3024 = vpack.c.b16 %v2922, %v2920
    %v3025 = vpack.c.b16 %v2923, %v2921
    %v3026 = vpack.c.b16 %v2926, %v2924
    %v3027 = vpack.c.b16 %v2927, %v2925
    %v3028 = vpack.c.b16 %v2930, %v2928
    %v3029 = vpack.c.b16 %v2931, %v2929
    %v3030 = vpack.c.b16 %v2934, %v2932
    %v3031 = vpack.c.b16 %v2935, %v2933
    %v3032 = vpack.c.b16 %v2938, %v2936
    %v3033 = vpack.c.b16 %v2939, %v2937
    %v3034 = vpack.c.b16 %v2942, %v2940
    %v3035 = vpack.c.b16 %v2943, %v2941
    %v3036 = vpack.c.b16 %v2946, %v2944
    %v3037 = vpack.c.b16 %v2947, %v2945
    %v3038 = vpack.c.b16 %v2950, %v2948
    %v3039 = vpack.c.b16 %v2951, %v2949
    %v3040 = vpack.c.b16 %v2954, %v2952
    %v3041 = vpack.c.b16 %v2955, %v2953
    %v3042 = vpack.c.b16 %v2958, %v2956
    %v3043 = vpack.c.b16 %v2959, %v2957
    %v3044 = vpack.c.b16 %v2962, %v2960
    %v3045 = vpack.c.b16 %v2963, %v2961
    %v3046 = vpack.c.b16 %v2966, %v2964
    %v3047 = vpack.c.b16 %v2967, %v2965
    %v3048 = vpack.c.b16 %v2970, %v2968
    %v3049 = vpack.c.b16 %v2971, %v2969
    %v3050 = vpack.c.b16 %v2974, %v2972
    %v3051 = vpack.c.b16 %v2975, %v2973
    %v3052 = vpack.c.b16 %v2978, %v2976
    %v3053 = vpack.c.b16 %v2979, %v2977
    %v3054 = vpack.c.b16 %v2982, %v2980
    %v3055 = vpack.c.b16 %v2983, %v2981
    %v3056 = vpack.c.b16 %v2986, %v2984
    %v3057 = vpack.c.b16 %v2987, %v2985
    %v3058 = vpack.c.b16 %v2990, %v2988
    %v3059 = vpack.c.b16 %v2991, %v2989
    %v3060 = vpack.c.b16 %v2994, %v2992
    %v3061 = vpack.c.b16 %v2995, %v2993
    %v3062 = vpack.c.b16 %v2998, %v2996
    %v3063 = vpack.c.b16 %v2999, %v2997
    %3128 = vmatprep.subr.bf16.mxu0 %v3015
    %3129 = vmatpush1.bf16.msra.mxu0 %v3014
    %3130 = vmatprep.subr.bf16.mxu0 %v3013
    %3131 = vmatpush1.bf16.msra.mxu0 %v3012
    %3132 = vmatprep.subr.bf16.mxu0 %v3011
    %3133 = vmatpush1.bf16.msra.mxu0 %v3010
    %3134 = vmatprep.subr.bf16.mxu0 %v3009
    %3135 = vmatpush1.bf16.msra.mxu0 %v3008
    %3136 = vmatprep.subr.bf16.mxu0 %v3007
    %3137 = vmatpush1.bf16.msra.mxu0 %v3006
    %3138 = vmatprep.subr.bf16.mxu0 %v3005
    %3139 = vmatpush1.bf16.msra.mxu0 %v3004
    %3140 = vmatprep.subr.bf16.mxu0 %v3003
    %3141 = vmatpush1.bf16.msra.mxu0 %v3002
    %3142 = vmatprep.subr.bf16.mxu0 %v3001
    %3143 = vmatpush1.bf16.msra.mxu0 %v3000
    %3144 = vmatprep.subr.bf16.mxu0 %v3031
    %3145 = vmatpush2.bf16.msra.mxu0 %v3030
    %3146 = vmatprep.subr.bf16.mxu0 %v3029
    %3147 = vmatpush2.bf16.msra.mxu0 %v3028
    %3148 = vmatprep.subr.bf16.mxu0 %v3027
    %3149 = vmatpush2.bf16.msra.mxu0 %v3026
    %3150 = vmatprep.subr.bf16.mxu0 %v3025
    %3151 = vmatpush2.bf16.msra.mxu0 %v3024
    %3152 = vmatprep.subr.bf16.mxu0 %v3023
    %3153 = vmatpush2.bf16.msra.mxu0 %v3022
    %3154 = vmatprep.subr.bf16.mxu0 %v3021
    %3155 = vmatpush2.bf16.msra.mxu0 %v3020
    %3156 = vmatprep.subr.bf16.mxu0 %v3019
    %3157 = vmatpush2.bf16.msra.mxu0 %v3018
    %3158 = vmatprep.subr.bf16.mxu0 %v3017
    %3159 = vmatpush2.bf16.msra.mxu0 %v3016
    %3160 = vmatprep.mubr.bf16.mxu0 %v2701
    %3161 = vmatmul.mubr.bf16.gmra.mxu0 %v2700
    %v3162 = vpop.f32.mrf.mxu0
    %v3163 = vadd.f32 %v2801, %v3162
    %v3164 = vpop.f32.mrf.mxu0
    %v3165 = vadd.f32 %v2805, %v3164
    %v3166 = vpop.f32.mrf.mxu0
    %v3167 = vadd.f32 %v2801, %v3166
    %v3168 = vpop.f32.mrf.mxu0
    %v3169 = vadd.f32 %v2805, %v3168
    %3170 = vmatprep.mubr.bf16.mxu0 %v2705
    %3171 = vmatmul.mubr.bf16.gmra.mxu0 %v2704
    %v3172 = vpop.f32.mrf.mxu0
    %v3173 = vadd.f32 %v2801, %v3172
    %v3174 = vpop.f32.mrf.mxu0
    %v3175 = vadd.f32 %v2805, %v3174
    %v3176 = vpop.f32.mrf.mxu0
    %v3177 = vadd.f32 %v2801, %v3176
    %v3178 = vpop.f32.mrf.mxu0
    %v3179 = vadd.f32 %v2805, %v3178
    %3180 = vmatprep.mubr.bf16.mxu0 %v2709
    %3181 = vmatmul.mubr.bf16.gmra.mxu0 %v2708
    %v3182 = vpop.f32.mrf.mxu0
    %v3183 = vadd.f32 %v2801, %v3182
    %v3184 = vpop.f32.mrf.mxu0
    %v3185 = vadd.f32 %v2805, %v3184
    %v3186 = vpop.f32.mrf.mxu0
    %v3187 = vadd.f32 %v2801, %v3186
    %v3188 = vpop.f32.mrf.mxu0
    %v3189 = vadd.f32 %v2805, %v3188
    %3190 = vmatprep.mubr.bf16.mxu0 %v2713
    %3191 = vmatmul.mubr.bf16.gmra.mxu0 %v2712
    %v3192 = vpop.f32.mrf.mxu0
    %v3193 = vadd.f32 %v2801, %v3192
    %v3194 = vpop.f32.mrf.mxu0
    %v3195 = vadd.f32 %v2805, %v3194
    %v3196 = vpop.f32.mrf.mxu0
    %v3197 = vadd.f32 %v2801, %v3196
    %v3198 = vpop.f32.mrf.mxu0
    %v3199 = vadd.f32 %v2805, %v3198
    %3200 = vmatprep.mubr.bf16.mxu0 %v2717
    %3201 = vmatmul.mubr.bf16.gmra.mxu0 %v2716
    %v3202 = vpop.f32.mrf.mxu0
    %v3203 = vadd.f32 %v2801, %v3202
    %v3204 = vpop.f32.mrf.mxu0
    %v3205 = vadd.f32 %v2805, %v3204
    %v3206 = vpop.f32.mrf.mxu0
    %v3207 = vadd.f32 %v2801, %v3206
    %v3208 = vpop.f32.mrf.mxu0
    %v3209 = vadd.f32 %v2805, %v3208
    %3210 = vmatprep.mubr.bf16.mxu0 %v2721
    %3211 = vmatmul.mubr.bf16.gmra.mxu0 %v2720
    %v3212 = vpop.f32.mrf.mxu0
    %v3213 = vadd.f32 %v2801, %v3212
    %v3214 = vpop.f32.mrf.mxu0
    %v3215 = vadd.f32 %v2805, %v3214
    %v3216 = vpop.f32.mrf.mxu0
    %v3217 = vadd.f32 %v2801, %v3216
    %v3218 = vpop.f32.mrf.mxu0
    %v3219 = vadd.f32 %v2805, %v3218
    %3220 = vmatprep.mubr.bf16.mxu0 %v2725
    %3221 = vmatmul.mubr.bf16.gmra.mxu0 %v2724
    %v3222 = vpop.f32.mrf.mxu0
    %v3223 = vadd.f32 %v2801, %v3222
    %v3224 = vpop.f32.mrf.mxu0
    %v3225 = vadd.f32 %v2805, %v3224
    %v3226 = vpop.f32.mrf.mxu0
    %v3227 = vadd.f32 %v2801, %v3226
    %v3228 = vpop.f32.mrf.mxu0
    %v3229 = vadd.f32 %v2805, %v3228
    %3230 = vmatprep.mubr.bf16.mxu0 %v2729
    %3231 = vmatmul.mubr.bf16.gmra.mxu0 %v2728
    %v3232 = vpop.f32.mrf.mxu0
    %v3233 = vadd.f32 %v2801, %v3232
    %v3234 = vpop.f32.mrf.mxu0
    %v3235 = vadd.f32 %v2805, %v3234
    %v3236 = vpop.f32.mrf.mxu0
    %v3237 = vadd.f32 %v2801, %v3236
    %v3238 = vpop.f32.mrf.mxu0
    %v3239 = vadd.f32 %v2805, %v3238
    %3240 = vdwg.mxu0
    %3241 = vmatprep.subr.bf16.mxu0 %v3047
    %3242 = vmatpush1.bf16.msra.mxu0 %v3046
    %3243 = vmatprep.subr.bf16.mxu0 %v3045
    %3244 = vmatpush1.bf16.msra.mxu0 %v3044
    %3245 = vmatprep.subr.bf16.mxu0 %v3043
    %3246 = vmatpush1.bf16.msra.mxu0 %v3042
    %3247 = vmatprep.subr.bf16.mxu0 %v3041
    %3248 = vmatpush1.bf16.msra.mxu0 %v3040
    %3249 = vmatprep.subr.bf16.mxu0 %v3039
    %3250 = vmatpush1.bf16.msra.mxu0 %v3038
    %3251 = vmatprep.subr.bf16.mxu0 %v3037
    %3252 = vmatpush1.bf16.msra.mxu0 %v3036
    %3253 = vmatprep.subr.bf16.mxu0 %v3035
    %3254 = vmatpush1.bf16.msra.mxu0 %v3034
    %3255 = vmatprep.subr.bf16.mxu0 %v3033
    %3256 = vmatpush1.bf16.msra.mxu0 %v3032
    %3257 = vmatprep.subr.bf16.mxu0 %v3063
    %3258 = vmatpush2.bf16.msra.mxu0 %v3062
    %3259 = vmatprep.subr.bf16.mxu0 %v3061
    %3260 = vmatpush2.bf16.msra.mxu0 %v3060
    %3261 = vmatprep.subr.bf16.mxu0 %v3059
    %3262 = vmatpush2.bf16.msra.mxu0 %v3058
    %3263 = vmatprep.subr.bf16.mxu0 %v3057
    %3264 = vmatpush2.bf16.msra.mxu0 %v3056
    %3265 = vmatprep.subr.bf16.mxu0 %v3055
    %3266 = vmatpush2.bf16.msra.mxu0 %v3054
    %3267 = vmatprep.subr.bf16.mxu0 %v3053
    %3268 = vmatpush2.bf16.msra.mxu0 %v3052
    %3269 = vmatprep.subr.bf16.mxu0 %v3051
    %3270 = vmatpush2.bf16.msra.mxu0 %v3050
    %3271 = vmatprep.subr.bf16.mxu0 %v3049
    %3272 = vmatpush2.bf16.msra.mxu0 %v3048
    %3273 = vmatprep.mubr.bf16.mxu0 %v2703
    %3274 = vmatmul.mubr.bf16.gmra.mxu0 %v2702
    %v3275 = vpop.f32.mrf.mxu0
    %v3276 = vadd.f32 %v3163, %v3275
    %v3277 = vpop.f32.mrf.mxu0
    %v3278 = vadd.f32 %v3165, %v3277
    %v3279 = vpop.f32.mrf.mxu0
    %v3280 = vadd.f32 %v3167, %v3279
    %v3281 = vpop.f32.mrf.mxu0
    %v3282 = vadd.f32 %v3169, %v3281
    %3283 = vmatprep.mubr.bf16.mxu0 %v2707
    %3284 = vmatmul.mubr.bf16.gmra.mxu0 %v2706
    %v3285 = vpop.f32.mrf.mxu0
    %v3286 = vadd.f32 %v3173, %v3285
    %v3287 = vpop.f32.mrf.mxu0
    %v3288 = vadd.f32 %v3175, %v3287
    %v3289 = vpop.f32.mrf.mxu0
    %v3290 = vadd.f32 %v3177, %v3289
    %v3291 = vpop.f32.mrf.mxu0
    %v3292 = vadd.f32 %v3179, %v3291
    %3293 = vmatprep.mubr.bf16.mxu0 %v2711
    %3294 = vmatmul.mubr.bf16.gmra.mxu0 %v2710
    %v3295 = vpop.f32.mrf.mxu0
    %v3296 = vadd.f32 %v3183, %v3295
    %v3297 = vpop.f32.mrf.mxu0
    %v3298 = vadd.f32 %v3185, %v3297
    %v3299 = vpop.f32.mrf.mxu0
    %v3300 = vadd.f32 %v3187, %v3299
    %v3301 = vpop.f32.mrf.mxu0
    %v3302 = vadd.f32 %v3189, %v3301
    %3303 = vmatprep.mubr.bf16.mxu0 %v2715
    %3304 = vmatmul.mubr.bf16.gmra.mxu0 %v2714
    %v3305 = vpop.f32.mrf.mxu0
    %v3306 = vadd.f32 %v3193, %v3305
    %v3307 = vpop.f32.mrf.mxu0
    %v3308 = vadd.f32 %v3195, %v3307
    %v3309 = vpop.f32.mrf.mxu0
    %v3310 = vadd.f32 %v3197, %v3309
    %v3311 = vpop.f32.mrf.mxu0
    %v3312 = vadd.f32 %v3199, %v3311
    %3313 = vmatprep.mubr.bf16.mxu0 %v2719
    %3314 = vmatmul.mubr.bf16.gmra.mxu0 %v2718
    %v3315 = vpop.f32.mrf.mxu0
    %v3316 = vadd.f32 %v3203, %v3315
    %v3317 = vpop.f32.mrf.mxu0
    %v3318 = vadd.f32 %v3205, %v3317
    %v3319 = vpop.f32.mrf.mxu0
    %v3320 = vadd.f32 %v3207, %v3319
    %v3321 = vpop.f32.mrf.mxu0
    %v3322 = vadd.f32 %v3209, %v3321
    %3323 = vmatprep.mubr.bf16.mxu0 %v2723
    %3324 = vmatmul.mubr.bf16.gmra.mxu0 %v2722
    %v3325 = vpop.f32.mrf.mxu0
    %v3326 = vadd.f32 %v3213, %v3325
    %v3327 = vpop.f32.mrf.mxu0
    %v3328 = vadd.f32 %v3215, %v3327
    %v3329 = vpop.f32.mrf.mxu0
    %v3330 = vadd.f32 %v3217, %v3329
    %v3331 = vpop.f32.mrf.mxu0
    %v3332 = vadd.f32 %v3219, %v3331
    %3333 = vmatprep.mubr.bf16.mxu0 %v2727
    %3334 = vmatmul.mubr.bf16.gmra.mxu0 %v2726
    %v3335 = vpop.f32.mrf.mxu0
    %v3336 = vadd.f32 %v3223, %v3335
    %v3337 = vpop.f32.mrf.mxu0
    %v3338 = vadd.f32 %v3225, %v3337
    %v3339 = vpop.f32.mrf.mxu0
    %v3340 = vadd.f32 %v3227, %v3339
    %v3341 = vpop.f32.mrf.mxu0
    %v3342 = vadd.f32 %v3229, %v3341
    %3343 = vmatprep.mubr.bf16.mxu0 %v2731
    %3344 = vmatmul.mubr.bf16.gmra.mxu0 %v2730
    %v3345 = vpop.f32.mrf.mxu0
    %v3346 = vadd.f32 %v3233, %v3345
    %v3347 = vpop.f32.mrf.mxu0
    %v3348 = vadd.f32 %v3235, %v3347
    %v3349 = vpop.f32.mrf.mxu0
    %v3350 = vadd.f32 %v3237, %v3349
    %v3351 = vpop.f32.mrf.mxu0
    %v3352 = vadd.f32 %v3239, %v3351
    %3353 = vdwg.mxu0
    %v3354 = vmax.f32 %v3276, 0.0
    %v3355 = vmax.f32 %v3278, 0.0
    %v3356 = vmax.f32 %v3280, 0.0
    %v3357 = vmax.f32 %v3282, 0.0
    %v3358 = vmax.f32 %v3286, 0.0
    %v3359 = vmax.f32 %v3288, 0.0
    %v3360 = vmax.f32 %v3290, 0.0
    %v3361 = vmax.f32 %v3292, 0.0
    %v3362 = vmax.f32 %v3296, 0.0
    %v3363 = vmax.f32 %v3298, 0.0
    %v3364 = vmax.f32 %v3300, 0.0
    %v3365 = vmax.f32 %v3302, 0.0
    %v3366 = vmax.f32 %v3306, 0.0
    %v3367 = vmax.f32 %v3308, 0.0
    %v3368 = vmax.f32 %v3310, 0.0
    %v3369 = vmax.f32 %v3312, 0.0
    %v3370 = vmax.f32 %v3316, 0.0
    %v3371 = vmax.f32 %v3318, 0.0
    %v3372 = vmax.f32 %v3320, 0.0
    %v3373 = vmax.f32 %v3322, 0.0
    %v3374 = vmax.f32 %v3326, 0.0
    %v3375 = vmax.f32 %v3328, 0.0
    %v3376 = vmax.f32 %v3330, 0.0
    %v3377 = vmax.f32 %v3332, 0.0
    %v3378 = vmax.f32 %v3336, 0.0
    %v3379 = vmax.f32 %v3338, 0.0
    %v3380 = vmax.f32 %v3340, 0.0
    %v3381 = vmax.f32 %v3342, 0.0
    %v3382 = vmax.f32 %v3346, 0.0
    %v3383 = vmax.f32 %v3348, 0.0
    %v3384 = vmax.f32 %v3350, 0.0
    %v3385 = vmax.f32 %v3352, 0.0
    %v3386 = vpack.c.bf16 %v3356, %v3354
    %v3387 = vpack.c.bf16 %v3357, %v3355
    %v3388 = vpack.c.bf16 %v3360, %v3358
    %v3389 = vpack.c.bf16 %v3361, %v3359
    %v3390 = vpack.c.bf16 %v3364, %v3362
    %v3391 = vpack.c.bf16 %v3365, %v3363
    %v3392 = vpack.c.bf16 %v3368, %v3366
    %v3393 = vpack.c.bf16 %v3369, %v3367
    %v3394 = vpack.c.bf16 %v3372, %v3370
    %v3395 = vpack.c.bf16 %v3373, %v3371
    %v3396 = vpack.c.bf16 %v3376, %v3374
    %v3397 = vpack.c.bf16 %v3377, %v3375
    %v3398 = vpack.c.bf16 %v3380, %v3378
    %v3399 = vpack.c.bf16 %v3381, %v3379
    %v3400 = vpack.c.bf16 %v3384, %v3382
    %v3401 = vpack.c.bf16 %v3385, %v3383
    %v3402 = vld [vmem:[#allocation7] sm:$0xff]
    %v3403 = vld [vmem:[#allocation7 + $0x8] sm:$0xf]
    %v3404 = vld [vmem:[#allocation7 + $0xc] sm:$0xff]
    %v3405 = vld [vmem:[#allocation7 + $0x14] sm:$0xf]
    %v3406 = vld [vmem:[#allocation7 + $0x18] sm:$0xff]
    %v3407 = vld [vmem:[#allocation7 + $0x20] sm:$0xf]
    %v3408 = vld [vmem:[#allocation7 + $0x24] sm:$0xff]
    %v3409 = vld [vmem:[#allocation7 + $0x2c] sm:$0xf]
    %v3410 = vld [vmem:[#allocation7 + $0x30] sm:$0xff]
    %v3411 = vld [vmem:[#allocation7 + $0x38] sm:$0xf]
    %v3412 = vld [vmem:[#allocation7 + $0x3c] sm:$0xff]
    %v3413 = vld [vmem:[#allocation7 + $0x44] sm:$0xf]
    %v3414 = vld [vmem:[#allocation7 + $0x48] sm:$0xff]
    %v3415 = vld [vmem:[#allocation7 + $0x50] sm:$0xf]
    %v3416 = vld [vmem:[#allocation7 + $0x54] sm:$0xff]
    %v3417 = vld [vmem:[#allocation7 + $0x5c] sm:$0xf]
    %v3418 = vld [vmem:[#allocation7 + $0x60] sm:$0xff]
    %v3419 = vld [vmem:[#allocation7 + $0x68] sm:$0xf]
    %v3420 = vld [vmem:[#allocation7 + $0x6c] sm:$0xff]
    %v3421 = vld [vmem:[#allocation7 + $0x74] sm:$0xf]
    %v3422 = vld [vmem:[#allocation7 + $0x78] sm:$0xff]
    %v3423 = vld [vmem:[#allocation7 + $0x80] sm:$0xf]
    %v3424 = vld [vmem:[#allocation7 + $0x84] sm:$0xff]
    %v3425 = vld [vmem:[#allocation7 + $0x8c] sm:$0xf]
    %v3426 = vld [vmem:[#allocation7 + $0x90] sm:$0xff]
    %v3427 = vld [vmem:[#allocation7 + $0x98] sm:$0xf]
    %v3428 = vld [vmem:[#allocation7 + $0x9c] sm:$0xff]
    %v3429 = vld [vmem:[#allocation7 + $0xa4] sm:$0xf]
    %v3430 = vld [vmem:[#allocation7 + $0xa8] sm:$0xff]
    %v3431 = vld [vmem:[#allocation7 + $0xb0] sm:$0xf]
    %v3432 = vld [vmem:[#allocation7 + $0xb4] sm:$0xff]
    %v3433 = vld [vmem:[#allocation7 + $0xbc] sm:$0xf]
    %v3434 = vld [vmem:[#allocation7 + $0xc0] sm:$0xff]
    %v3435 = vld [vmem:[#allocation7 + $0xc8] sm:$0xf]
    %v3436 = vld [vmem:[#allocation7 + $0xcc] sm:$0xff]
    %v3437 = vld [vmem:[#allocation7 + $0xd4] sm:$0xf]
    %v3438 = vld [vmem:[#allocation7 + $0xd8] sm:$0xff]
    %v3439 = vld [vmem:[#allocation7 + $0xe0] sm:$0xf]
    %v3440 = vld [vmem:[#allocation7 + $0xe4] sm:$0xff]
    %v3441 = vld [vmem:[#allocation7 + $0xec] sm:$0xf]
    %v3442 = vld [vmem:[#allocation7 + $0xf0] sm:$0xff]
    %v3443 = vld [vmem:[#allocation7 + $0xf8] sm:$0xf]
    %v3444 = vld [vmem:[#allocation7 + $0xfc] sm:$0xff]
    %v3445 = vld [vmem:[#allocation7 + $0x104] sm:$0xf]
    %v3446 = vld [vmem:[#allocation7 + $0x108] sm:$0xff]
    %v3447 = vld [vmem:[#allocation7 + $0x110] sm:$0xf]
    %v3448 = vld [vmem:[#allocation7 + $0x114] sm:$0xff]
    %v3449 = vld [vmem:[#allocation7 + $0x11c] sm:$0xf]
    %v3450 = vld [vmem:[#allocation7 + $0x120] sm:$0xff]
    %v3451 = vld [vmem:[#allocation7 + $0x128] sm:$0xf]
    %v3452 = vld [vmem:[#allocation7 + $0x12c] sm:$0xff]
    %v3453 = vld [vmem:[#allocation7 + $0x134] sm:$0xf]
    %v3454 = vld [vmem:[#allocation7 + $0x138] sm:$0xff]
    %v3455 = vld [vmem:[#allocation7 + $0x140] sm:$0xf]
    %v3456 = vld [vmem:[#allocation7 + $0x144] sm:$0xff]
    %v3457 = vld [vmem:[#allocation7 + $0x14c] sm:$0xf]
    %v3458 = vld [vmem:[#allocation7 + $0x150] sm:$0xff]
    %v3459 = vld [vmem:[#allocation7 + $0x158] sm:$0xf]
    %v3460 = vld [vmem:[#allocation7 + $0x15c] sm:$0xff]
    %v3461 = vld [vmem:[#allocation7 + $0x164] sm:$0xf]
    %v3462 = vld [vmem:[#allocation7 + $0x168] sm:$0xff]
    %v3463 = vld [vmem:[#allocation7 + $0x170] sm:$0xf]
    %v3464 = vld [vmem:[#allocation7 + $0x174] sm:$0xff]
    %v3465 = vld [vmem:[#allocation7 + $0x17c] sm:$0xf]
    %v3466 = vld [vmem:[%s8] sm:$0x7]
    %v3468 = vlaneseq
    %v3469 = vshrl.u32 %v3468, 7
    %v3470 = vsub.s32 0, %v3469
    %v3471 = vrot.slane %v3466, %v3470
    %v3472 = vlaneseq
    %v3473 = vshrl.u32 %v3472, 7
    %v3474 = vsub.s32 1, %v3473
    %v3475 = vrot.slane %v3466, %v3474
    %v3476 = vlaneseq
    %v3477 = vshrl.u32 %v3476, 7
    %v3478 = vsub.s32 2, %v3477
    %v3479 = vrot.slane %v3466, %v3478
    %v3547 = vunpack.c.l.b16 %v3402
    %v3548 = vunpack.c.h.b16 %v3402
    %v3549 = vunpack.c.l.b16 %v3403
    %v3550 = vunpack.c.l.b16 %v3404
    %v3551 = vunpack.c.h.b16 %v3404
    %v3552 = vunpack.c.l.b16 %v3405
    %v3553 = vunpack.c.l.b16 %v3406
    %v3554 = vunpack.c.h.b16 %v3406
    %v3555 = vunpack.c.l.b16 %v3407
    %v3556 = vunpack.c.l.b16 %v3408
    %v3557 = vunpack.c.h.b16 %v3408
    %v3558 = vunpack.c.l.b16 %v3409
    %v3559 = vunpack.c.l.b16 %v3410
    %v3560 = vunpack.c.h.b16 %v3410
    %v3561 = vunpack.c.l.b16 %v3411
    %v3562 = vunpack.c.l.b16 %v3412
    %v3563 = vunpack.c.h.b16 %v3412
    %v3564 = vunpack.c.l.b16 %v3413
    %v3565 = vunpack.c.l.b16 %v3414
    %v3566 = vunpack.c.h.b16 %v3414
    %v3567 = vunpack.c.l.b16 %v3415
    %v3568 = vunpack.c.l.b16 %v3416
    %v3569 = vunpack.c.h.b16 %v3416
    %v3570 = vunpack.c.l.b16 %v3417
    %v3571 = vunpack.c.l.b16 %v3418
    %v3572 = vunpack.c.h.b16 %v3418
    %v3573 = vunpack.c.l.b16 %v3419
    %v3574 = vunpack.c.l.b16 %v3420
    %v3575 = vunpack.c.h.b16 %v3420
    %v3576 = vunpack.c.l.b16 %v3421
    %v3577 = vunpack.c.l.b16 %v3422
    %v3578 = vunpack.c.h.b16 %v3422
    %v3579 = vunpack.c.l.b16 %v3423
    %v3580 = vunpack.c.l.b16 %v3424
    %v3581 = vunpack.c.h.b16 %v3424
    %v3582 = vunpack.c.l.b16 %v3425
    %v3583 = vunpack.c.l.b16 %v3426
    %v3584 = vunpack.c.h.b16 %v3426
    %v3585 = vunpack.c.l.b16 %v3427
    %v3586 = vunpack.c.l.b16 %v3428
    %v3587 = vunpack.c.h.b16 %v3428
    %v3588 = vunpack.c.l.b16 %v3429
    %v3589 = vunpack.c.l.b16 %v3430
    %v3590 = vunpack.c.h.b16 %v3430
    %v3591 = vunpack.c.l.b16 %v3431
    %v3592 = vunpack.c.l.b16 %v3432
    %v3593 = vunpack.c.h.b16 %v3432
    %v3594 = vunpack.c.l.b16 %v3433
    %v3595 = vunpack.c.l.b16 %v3434
    %v3596 = vunpack.c.h.b16 %v3434
    %v3597 = vunpack.c.l.b16 %v3435
    %v3598 = vunpack.c.l.b16 %v3436
    %v3599 = vunpack.c.h.b16 %v3436
    %v3600 = vunpack.c.l.b16 %v3437
    %v3601 = vunpack.c.l.b16 %v3438
    %v3602 = vunpack.c.h.b16 %v3438
    %v3603 = vunpack.c.l.b16 %v3439
    %v3604 = vunpack.c.l.b16 %v3440
    %v3605 = vunpack.c.h.b16 %v3440
    %v3606 = vunpack.c.l.b16 %v3441
    %v3607 = vunpack.c.l.b16 %v3442
    %v3608 = vunpack.c.h.b16 %v3442
    %v3609 = vunpack.c.l.b16 %v3443
    %v3610 = vunpack.c.l.b16 %v3444
    %v3611 = vunpack.c.h.b16 %v3444
    %v3612 = vunpack.c.l.b16 %v3445
    %v3613 = vunpack.c.l.b16 %v3446
    %v3614 = vunpack.c.h.b16 %v3446
    %v3615 = vunpack.c.l.b16 %v3447
    %v3616 = vunpack.c.l.b16 %v3448
    %v3617 = vunpack.c.h.b16 %v3448
    %v3618 = vunpack.c.l.b16 %v3449
    %v3619 = vunpack.c.l.b16 %v3450
    %v3620 = vunpack.c.h.b16 %v3450
    %v3621 = vunpack.c.l.b16 %v3451
    %v3622 = vunpack.c.l.b16 %v3452
    %v3623 = vunpack.c.h.b16 %v3452
    %v3624 = vunpack.c.l.b16 %v3453
    %v3625 = vunpack.c.l.b16 %v3454
    %v3626 = vunpack.c.h.b16 %v3454
    %v3627 = vunpack.c.l.b16 %v3455
    %v3628 = vunpack.c.l.b16 %v3456
    %v3629 = vunpack.c.h.b16 %v3456
    %v3630 = vunpack.c.l.b16 %v3457
    %v3631 = vunpack.c.l.b16 %v3458
    %v3632 = vunpack.c.h.b16 %v3458
    %v3633 = vunpack.c.l.b16 %v3459
    %v3634 = vunpack.c.l.b16 %v3460
    %v3635 = vunpack.c.h.b16 %v3460
    %v3636 = vunpack.c.l.b16 %v3461
    %v3637 = vunpack.c.l.b16 %v3462
    %v3638 = vunpack.c.h.b16 %v3462
    %v3639 = vunpack.c.l.b16 %v3463
    %v3640 = vunpack.c.l.b16 %v3464
    %v3641 = vunpack.c.h.b16 %v3464
    %v3642 = vunpack.c.l.b16 %v3465
    %v3643 = vpack.c.b16 %v3550, %v3547
    %v3644 = vpack.c.b16 %v3551, %v3548
    %v3645 = vpack.c.b16 %v3552, %v3549
    %v3646 = vpack.c.b16 %v3556, %v3553
    %v3647 = vpack.c.b16 %v3557, %v3554
    %v3648 = vpack.c.b16 %v3558, %v3555
    %v3649 = vpack.c.b16 %v3562, %v3559
    %v3650 = vpack.c.b16 %v3563, %v3560
    %v3651 = vpack.c.b16 %v3564, %v3561
    %v3652 = vpack.c.b16 %v3568, %v3565
    %v3653 = vpack.c.b16 %v3569, %v3566
    %v3654 = vpack.c.b16 %v3570, %v3567
    %v3655 = vpack.c.b16 %v3574, %v3571
    %v3656 = vpack.c.b16 %v3575, %v3572
    %v3657 = vpack.c.b16 %v3576, %v3573
    %v3658 = vpack.c.b16 %v3580, %v3577
    %v3659 = vpack.c.b16 %v3581, %v3578
    %v3660 = vpack.c.b16 %v3582, %v3579
    %v3661 = vpack.c.b16 %v3586, %v3583
    %v3662 = vpack.c.b16 %v3587, %v3584
    %v3663 = vpack.c.b16 %v3588, %v3585
    %v3664 = vpack.c.b16 %v3592, %v3589
    %v3665 = vpack.c.b16 %v3593, %v3590
    %v3666 = vpack.c.b16 %v3594, %v3591
    %v3667 = vpack.c.b16 %v3598, %v3595
    %v3668 = vpack.c.b16 %v3599, %v3596
    %v3669 = vpack.c.b16 %v3600, %v3597
    %v3670 = vpack.c.b16 %v3604, %v3601
    %v3671 = vpack.c.b16 %v3605, %v3602
    %v3672 = vpack.c.b16 %v3606, %v3603
    %v3673 = vpack.c.b16 %v3610, %v3607
    %v3674 = vpack.c.b16 %v3611, %v3608
    %v3675 = vpack.c.b16 %v3612, %v3609
    %v3676 = vpack.c.b16 %v3616, %v3613
    %v3677 = vpack.c.b16 %v3617, %v3614
    %v3678 = vpack.c.b16 %v3618, %v3615
    %v3679 = vpack.c.b16 %v3622, %v3619
    %v3680 = vpack.c.b16 %v3623, %v3620
    %v3681 = vpack.c.b16 %v3624, %v3621
    %v3682 = vpack.c.b16 %v3628, %v3625
    %v3683 = vpack.c.b16 %v3629, %v3626
    %v3684 = vpack.c.b16 %v3630, %v3627
    %v3685 = vpack.c.b16 %v3634, %v3631
    %v3686 = vpack.c.b16 %v3635, %v3632
    %v3687 = vpack.c.b16 %v3636, %v3633
    %v3688 = vpack.c.b16 %v3640, %v3637
    %v3689 = vpack.c.b16 %v3641, %v3638
    %v3690 = vpack.c.b16 %v3642, %v3639
    %3739 = vmatprep.subr.bf16.mxu0 %v3665
    %3740 = vmatpush1.bf16.msra.mxu0 %v3664
    %3741 = vmatprep.subr.bf16.mxu0 %v3662
    %3742 = vmatpush1.bf16.msra.mxu0 %v3661
    %3743 = vmatprep.subr.bf16.mxu0 %v3659
    %3744 = vmatpush1.bf16.msra.mxu0 %v3658
    %3745 = vmatprep.subr.bf16.mxu0 %v3656
    %3746 = vmatpush1.bf16.msra.mxu0 %v3655
    %3747 = vmatprep.subr.bf16.mxu0 %v3653
    %3748 = vmatpush1.bf16.msra.mxu0 %v3652
    %3749 = vmatprep.subr.bf16.mxu0 %v3650
    %3750 = vmatpush1.bf16.msra.mxu0 %v3649
    %3751 = vmatprep.subr.bf16.mxu0 %v3647
    %3752 = vmatpush1.bf16.msra.mxu0 %v3646
    %3753 = vmatprep.subr.bf16.mxu0 %v3644
    %3754 = vmatpush1.bf16.msra.mxu0 %v3643
    %3755 = vmatprep.subr.bf16.mxu0 %v3689
    %3756 = vmatpush2.bf16.msra.mxu0 %v3688
    %3757 = vmatprep.subr.bf16.mxu0 %v3686
    %3758 = vmatpush2.bf16.msra.mxu0 %v3685
    %3759 = vmatprep.subr.bf16.mxu0 %v3683
    %3760 = vmatpush2.bf16.msra.mxu0 %v3682
    %3761 = vmatprep.subr.bf16.mxu0 %v3680
    %3762 = vmatpush2.bf16.msra.mxu0 %v3679
    %3763 = vmatprep.subr.bf16.mxu0 %v3677
    %3764 = vmatpush2.bf16.msra.mxu0 %v3676
    %3765 = vmatprep.subr.bf16.mxu0 %v3674
    %3766 = vmatpush2.bf16.msra.mxu0 %v3673
    %3767 = vmatprep.subr.bf16.mxu0 %v3671
    %3768 = vmatpush2.bf16.msra.mxu0 %v3670
    %3769 = vmatprep.subr.bf16.mxu0 %v3668
    %3770 = vmatpush2.bf16.msra.mxu0 %v3667
    %3771 = vmatprep.mubr.bf16.mxu0 %v3387
    %3772 = vmatmul.mubr.bf16.gmra.mxu0 %v3386
    %v3773 = vpop.f32.mrf.mxu0
    %v3774 = vadd.f32 %v3471, %v3773
    %v3775 = vpop.f32.mrf.mxu0
    %v3776 = vadd.f32 %v3475, %v3775
    %v3777 = vpop.f32.mrf.mxu0
    %v3778 = vadd.f32 %v3471, %v3777
    %v3779 = vpop.f32.mrf.mxu0
    %v3780 = vadd.f32 %v3475, %v3779
    %3781 = vmatprep.mubr.bf16.mxu0 %v3389
    %3782 = vmatmul.mubr.bf16.gmra.mxu0 %v3388
    %v3783 = vpop.f32.mrf.mxu0
    %v3784 = vadd.f32 %v3471, %v3783
    %v3785 = vpop.f32.mrf.mxu0
    %v3786 = vadd.f32 %v3475, %v3785
    %v3787 = vpop.f32.mrf.mxu0
    %v3788 = vadd.f32 %v3471, %v3787
    %v3789 = vpop.f32.mrf.mxu0
    %v3790 = vadd.f32 %v3475, %v3789
    %3791 = vmatprep.mubr.bf16.mxu0 %v3391
    %3792 = vmatmul.mubr.bf16.gmra.mxu0 %v3390
    %v3793 = vpop.f32.mrf.mxu0
    %v3794 = vadd.f32 %v3471, %v3793
    %v3795 = vpop.f32.mrf.mxu0
    %v3796 = vadd.f32 %v3475, %v3795
    %v3797 = vpop.f32.mrf.mxu0
    %v3798 = vadd.f32 %v3471, %v3797
    %v3799 = vpop.f32.mrf.mxu0
    %v3800 = vadd.f32 %v3475, %v3799
    %3801 = vmatprep.mubr.bf16.mxu0 %v3393
    %3802 = vmatmul.mubr.bf16.gmra.mxu0 %v3392
    %v3803 = vpop.f32.mrf.mxu0
    %v3804 = vadd.f32 %v3471, %v3803
    %v3805 = vpop.f32.mrf.mxu0
    %v3806 = vadd.f32 %v3475, %v3805
    %v3807 = vpop.f32.mrf.mxu0
    %v3808 = vadd.f32 %v3471, %v3807
    %v3809 = vpop.f32.mrf.mxu0
    %v3810 = vadd.f32 %v3475, %v3809
    %3811 = vmatprep.mubr.bf16.mxu0 %v3395
    %3812 = vmatmul.mubr.bf16.gmra.mxu0 %v3394
    %v3813 = vpop.f32.mrf.mxu0
    %v3814 = vadd.f32 %v3471, %v3813
    %v3815 = vpop.f32.mrf.mxu0
    %v3816 = vadd.f32 %v3475, %v3815
    %v3817 = vpop.f32.mrf.mxu0
    %v3818 = vadd.f32 %v3471, %v3817
    %v3819 = vpop.f32.mrf.mxu0
    %v3820 = vadd.f32 %v3475, %v3819
    %3821 = vmatprep.mubr.bf16.mxu0 %v3397
    %3822 = vmatmul.mubr.bf16.gmra.mxu0 %v3396
    %v3823 = vpop.f32.mrf.mxu0
    %v3824 = vadd.f32 %v3471, %v3823
    %v3825 = vpop.f32.mrf.mxu0
    %v3826 = vadd.f32 %v3475, %v3825
    %v3827 = vpop.f32.mrf.mxu0
    %v3828 = vadd.f32 %v3471, %v3827
    %v3829 = vpop.f32.mrf.mxu0
    %v3830 = vadd.f32 %v3475, %v3829
    %3831 = vmatprep.mubr.bf16.mxu0 %v3399
    %3832 = vmatmul.mubr.bf16.gmra.mxu0 %v3398
    %v3833 = vpop.f32.mrf.mxu0
    %v3834 = vadd.f32 %v3471, %v3833
    %v3835 = vpop.f32.mrf.mxu0
    %v3836 = vadd.f32 %v3475, %v3835
    %v3837 = vpop.f32.mrf.mxu0
    %v3838 = vadd.f32 %v3471, %v3837
    %v3839 = vpop.f32.mrf.mxu0
    %v3840 = vadd.f32 %v3475, %v3839
    %3841 = vmatprep.mubr.bf16.mxu0 %v3401
    %3842 = vmatmul.mubr.bf16.gmra.mxu0 %v3400
    %v3843 = vpop.f32.mrf.mxu0
    %v3844 = vadd.f32 %v3471, %v3843
    %v3845 = vpop.f32.mrf.mxu0
    %v3846 = vadd.f32 %v3475, %v3845
    %v3847 = vpop.f32.mrf.mxu0
    %v3848 = vadd.f32 %v3471, %v3847
    %v3849 = vpop.f32.mrf.mxu0
    %v3850 = vadd.f32 %v3475, %v3849
    %3851 = vdwg.mxu0
    %3852 = vmatprep.subr.bf16.mxu0 0
    %3853 = vmatpush1.bf16.msra.mxu0 %v3666
    %3854 = vmatprep.subr.bf16.mxu0 0
    %3855 = vmatpush1.bf16.msra.mxu0 %v3663
    %3856 = vmatprep.subr.bf16.mxu0 0
    %3857 = vmatpush1.bf16.msra.mxu0 %v3660
    %3858 = vmatprep.subr.bf16.mxu0 0
    %3859 = vmatpush1.bf16.msra.mxu0 %v3657
    %3860 = vmatprep.subr.bf16.mxu0 0
    %3861 = vmatpush1.bf16.msra.mxu0 %v3654
    %3862 = vmatprep.subr.bf16.mxu0 0
    %3863 = vmatpush1.bf16.msra.mxu0 %v3651
    %3864 = vmatprep.subr.bf16.mxu0 0
    %3865 = vmatpush1.bf16.msra.mxu0 %v3648
    %3866 = vmatprep.subr.bf16.mxu0 0
    %3867 = vmatpush1.bf16.msra.mxu0 %v3645
    %3868 = vmatprep.subr.bf16.mxu0 0
    %3869 = vmatpush2.bf16.msra.mxu0 %v3690
    %3870 = vmatprep.subr.bf16.mxu0 0
    %3871 = vmatpush2.bf16.msra.mxu0 %v3687
    %3872 = vmatprep.subr.bf16.mxu0 0
    %3873 = vmatpush2.bf16.msra.mxu0 %v3684
    %3874 = vmatprep.subr.bf16.mxu0 0
    %3875 = vmatpush2.bf16.msra.mxu0 %v3681
    %3876 = vmatprep.subr.bf16.mxu0 0
    %3877 = vmatpush2.bf16.msra.mxu0 %v3678
    %3878 = vmatprep.subr.bf16.mxu0 0
    %3879 = vmatpush2.bf16.msra.mxu0 %v3675
    %3880 = vmatprep.subr.bf16.mxu0 0
    %3881 = vmatpush2.bf16.msra.mxu0 %v3672
    %3882 = vmatprep.subr.bf16.mxu0 0
    %3883 = vmatpush2.bf16.msra.mxu0 %v3669
    %3884 = vmatprep.mubr.bf16.mxu0 %v3387
    %3885 = vmatmul.mubr.bf16.gmra.mxu0 %v3386
    %v3886 = vpop.f32.mrf.mxu0
    %v3887 = vadd.f32 %v3479, %v3886
    %v3888 = vpop.f32.mrf.mxu0
    %v3889 = vpop.f32.mrf.mxu0
    %v3890 = vadd.f32 %v3479, %v3889
    %v3891 = vpop.f32.mrf.mxu0
    %3892 = vmatprep.mubr.bf16.mxu0 %v3389
    %3893 = vmatmul.mubr.bf16.gmra.mxu0 %v3388
    %v3894 = vpop.f32.mrf.mxu0
    %v3895 = vadd.f32 %v3479, %v3894
    %v3896 = vpop.f32.mrf.mxu0
    %v3897 = vpop.f32.mrf.mxu0
    %v3898 = vadd.f32 %v3479, %v3897
    %v3899 = vpop.f32.mrf.mxu0
    %3900 = vmatprep.mubr.bf16.mxu0 %v3391
    %3901 = vmatmul.mubr.bf16.gmra.mxu0 %v3390
    %v3902 = vpop.f32.mrf.mxu0
    %v3903 = vadd.f32 %v3479, %v3902
    %v3904 = vpop.f32.mrf.mxu0
    %v3905 = vpop.f32.mrf.mxu0
    %v3906 = vadd.f32 %v3479, %v3905
    %v3907 = vpop.f32.mrf.mxu0
    %3908 = vmatprep.mubr.bf16.mxu0 %v3393
    %3909 = vmatmul.mubr.bf16.gmra.mxu0 %v3392
    %v3910 = vpop.f32.mrf.mxu0
    %v3911 = vadd.f32 %v3479, %v3910
    %v3912 = vpop.f32.mrf.mxu0
    %v3913 = vpop.f32.mrf.mxu0
    %v3914 = vadd.f32 %v3479, %v3913
    %v3915 = vpop.f32.mrf.mxu0
    %3916 = vmatprep.mubr.bf16.mxu0 %v3395
    %3917 = vmatmul.mubr.bf16.gmra.mxu0 %v3394
    %v3918 = vpop.f32.mrf.mxu0
    %v3919 = vadd.f32 %v3479, %v3918
    %v3920 = vpop.f32.mrf.mxu0
    %v3921 = vpop.f32.mrf.mxu0
    %v3922 = vadd.f32 %v3479, %v3921
    %v3923 = vpop.f32.mrf.mxu0
    %3924 = vmatprep.mubr.bf16.mxu0 %v3397
    %3925 = vmatmul.mubr.bf16.gmra.mxu0 %v3396
    %v3926 = vpop.f32.mrf.mxu0
    %v3927 = vadd.f32 %v3479, %v3926
    %v3928 = vpop.f32.mrf.mxu0
    %v3929 = vpop.f32.mrf.mxu0
    %v3930 = vadd.f32 %v3479, %v3929
    %v3931 = vpop.f32.mrf.mxu0
    %3932 = vmatprep.mubr.bf16.mxu0 %v3399
    %3933 = vmatmul.mubr.bf16.gmra.mxu0 %v3398
    %v3934 = vpop.f32.mrf.mxu0
    %v3935 = vadd.f32 %v3479, %v3934
    %v3936 = vpop.f32.mrf.mxu0
    %v3937 = vpop.f32.mrf.mxu0
    %v3938 = vadd.f32 %v3479, %v3937
    %v3939 = vpop.f32.mrf.mxu0
    %3940 = vmatprep.mubr.bf16.mxu0 %v3401
    %3941 = vmatmul.mubr.bf16.gmra.mxu0 %v3400
    %v3942 = vpop.f32.mrf.mxu0
    %v3943 = vadd.f32 %v3479, %v3942
    %v3944 = vpop.f32.mrf.mxu0
    %v3945 = vpop.f32.mrf.mxu0
    %v3946 = vadd.f32 %v3479, %v3945
    %v3947 = vpop.f32.mrf.mxu0
    %3948 = vdwg.mxu0
    %v3949 = vmax.f32 %v3774, %v3776
    %3950 = vmax.xlane.f32.xlu0 %v3949
    %v3951 = vpop.xlane.xlu0 %3950
    %v3952 = vmax.f32 %v3778, %v3780
    %3953 = vmax.xlane.f32.xlu0 %v3952
    %v3954 = vpop.xlane.xlu0 %3953
    %v3955 = vmax.f32 %v3784, %v3786
    %3956 = vmax.xlane.f32.xlu0 %v3955
    %v3957 = vpop.xlane.xlu0 %3956
    %v3958 = vmax.f32 %v3788, %v3790
    %3959 = vmax.xlane.f32.xlu0 %v3958
    %v3960 = vpop.xlane.xlu0 %3959
    %v3961 = vmax.f32 %v3794, %v3796
    %3962 = vmax.xlane.f32.xlu0 %v3961
    %v3963 = vpop.xlane.xlu0 %3962
    %v3964 = vmax.f32 %v3798, %v3800
    %3965 = vmax.xlane.f32.xlu0 %v3964
    %v3966 = vpop.xlane.xlu0 %3965
    %v3967 = vmax.f32 %v3804, %v3806
    %3968 = vmax.xlane.f32.xlu0 %v3967
    %v3969 = vpop.xlane.xlu0 %3968
    %v3970 = vmax.f32 %v3808, %v3810
    %3971 = vmax.xlane.f32.xlu0 %v3970
    %v3972 = vpop.xlane.xlu0 %3971
    %v3973 = vmax.f32 %v3814, %v3816
    %3974 = vmax.xlane.f32.xlu0 %v3973
    %v3975 = vpop.xlane.xlu0 %3974
    %v3976 = vmax.f32 %v3818, %v3820
    %3977 = vmax.xlane.f32.xlu0 %v3976
    %v3978 = vpop.xlane.xlu0 %3977
    %v3979 = vmax.f32 %v3824, %v3826
    %3980 = vmax.xlane.f32.xlu0 %v3979
    %v3981 = vpop.xlane.xlu0 %3980
    %v3982 = vmax.f32 %v3828, %v3830
    %3983 = vmax.xlane.f32.xlu0 %v3982
    %v3984 = vpop.xlane.xlu0 %3983
    %v3985 = vmax.f32 %v3834, %v3836
    %3986 = vmax.xlane.f32.xlu0 %v3985
    %v3987 = vpop.xlane.xlu0 %3986
    %v3988 = vmax.f32 %v3838, %v3840
    %3989 = vmax.xlane.f32.xlu0 %v3988
    %v3990 = vpop.xlane.xlu0 %3989
    %v3991 = vmax.f32 %v3844, %v3846
    %3992 = vmax.xlane.f32.xlu0 %v3991
    %v3993 = vpop.xlane.xlu0 %3992
    %v3994 = vmax.f32 %v3848, %v3850
    %3995 = vmax.xlane.f32.xlu0 %v3994
    %v3996 = vpop.xlane.xlu0 %3995
    %v3997 = vsub.f32 %v3774, %v3951
    %v3998 = vsub.f32 %v3776, %v3951
    %v3999 = vsub.f32 %v3778, %v3954
    %v4000 = vsub.f32 %v3780, %v3954
    %v4001 = vsub.f32 %v3784, %v3957
    %v4002 = vsub.f32 %v3786, %v3957
    %v4003 = vsub.f32 %v3788, %v3960
    %v4004 = vsub.f32 %v3790, %v3960
    %v4005 = vsub.f32 %v3794, %v3963
    %v4006 = vsub.f32 %v3796, %v3963
    %v4007 = vsub.f32 %v3798, %v3966
    %v4008 = vsub.f32 %v3800, %v3966
    %v4009 = vsub.f32 %v3804, %v3969
    %v4010 = vsub.f32 %v3806, %v3969
    %v4011 = vsub.f32 %v3808, %v3972
    %v4012 = vsub.f32 %v3810, %v3972
    %v4013 = vsub.f32 %v3814, %v3975
    %v4014 = vsub.f32 %v3816, %v3975
    %v4015 = vsub.f32 %v3818, %v3978
    %v4016 = vsub.f32 %v3820, %v3978
    %v4017 = vsub.f32 %v3824, %v3981
    %v4018 = vsub.f32 %v3826, %v3981
    %v4019 = vsub.f32 %v3828, %v3984
    %v4020 = vsub.f32 %v3830, %v3984
    %v4021 = vsub.f32 %v3834, %v3987
    %v4022 = vsub.f32 %v3836, %v3987
    %v4023 = vsub.f32 %v3838, %v3990
    %v4024 = vsub.f32 %v3840, %v3990
    %v4025 = vsub.f32 %v3844, %v3993
    %v4026 = vsub.f32 %v3846, %v3993
    %v4027 = vsub.f32 %v3848, %v3996
    %v4028 = vsub.f32 %v3850, %v3996
    %v4029 = vmul.f32 %v3997, 1.442695
    %v4030 = vpow.pop %v4029
    %v4031 = vmul.f32 %v3998, 1.442695
    %v4032 = vpow.pop %v4031
    %v4033 = vmul.f32 %v3999, 1.442695
    %v4034 = vpow.pop %v4033
    %v4035 = vmul.f32 %v4000, 1.442695
    %v4036 = vpow.pop %v4035
    %v4037 = vmul.f32 %v4001, 1.442695
    %v4038 = vpow.pop %v4037
    %v4039 = vmul.f32 %v4002, 1.442695
    %v4040 = vpow.pop %v4039
    %v4041 = vmul.f32 %v4003, 1.442695
    %v4042 = vpow.pop %v4041
    %v4043 = vmul.f32 %v4004, 1.442695
    %v4044 = vpow.pop %v4043
    %v4045 = vmul.f32 %v4005, 1.442695
    %v4046 = vpow.pop %v4045
    %v4047 = vmul.f32 %v4006, 1.442695
    %v4048 = vpow.pop %v4047
    %v4049 = vmul.f32 %v4007, 1.442695
    %v4050 = vpow.pop %v4049
    %v4051 = vmul.f32 %v4008, 1.442695
    %v4052 = vpow.pop %v4051
    %v4053 = vmul.f32 %v4009, 1.442695
    %v4054 = vpow.pop %v4053
    %v4055 = vmul.f32 %v4010, 1.442695
    %v4056 = vpow.pop %v4055
    %v4057 = vmul.f32 %v4011, 1.442695
    %v4058 = vpow.pop %v4057
    %v4059 = vmul.f32 %v4012, 1.442695
    %v4060 = vpow.pop %v4059
    %v4061 = vmul.f32 %v4013, 1.442695
    %v4062 = vpow.pop %v4061
    %v4063 = vmul.f32 %v4014, 1.442695
    %v4064 = vpow.pop %v4063
    %v4065 = vmul.f32 %v4015, 1.442695
    %v4066 = vpow.pop %v4065
    %v4067 = vmul.f32 %v4016, 1.442695
    %v4068 = vpow.pop %v4067
    %v4069 = vmul.f32 %v4017, 1.442695
    %v4070 = vpow.pop %v4069
    %v4071 = vmul.f32 %v4018, 1.442695
    %v4072 = vpow.pop %v4071
    %v4073 = vmul.f32 %v4019, 1.442695
    %v4074 = vpow.pop %v4073
    %v4075 = vmul.f32 %v4020, 1.442695
    %v4076 = vpow.pop %v4075
    %v4077 = vmul.f32 %v4021, 1.442695
    %v4078 = vpow.pop %v4077
    %v4079 = vmul.f32 %v4022, 1.442695
    %v4080 = vpow.pop %v4079
    %v4081 = vmul.f32 %v4023, 1.442695
    %v4082 = vpow.pop %v4081
    %v4083 = vmul.f32 %v4024, 1.442695
    %v4084 = vpow.pop %v4083
    %v4085 = vmul.f32 %v4025, 1.442695
    %v4086 = vpow.pop %v4085
    %v4087 = vmul.f32 %v4026, 1.442695
    %v4088 = vpow.pop %v4087
    %v4089 = vmul.f32 %v4027, 1.442695
    %v4090 = vpow.pop %v4089
    %v4091 = vmul.f32 %v4028, 1.442695
    %v4092 = vpow.pop %v4091
    %v4093 = vadd.f32 %v4030, %v4032
    %4094 = vadd.xlane.f32.xlu0 %v4093
    %v4095 = vpop.xlane.xlu0 %4094
    %v4096 = vadd.f32 %v4034, %v4036
    %4097 = vadd.xlane.f32.xlu0 %v4096
    %v4098 = vpop.xlane.xlu0 %4097
    %v4099 = vadd.f32 %v4038, %v4040
    %4100 = vadd.xlane.f32.xlu0 %v4099
    %v4101 = vpop.xlane.xlu0 %4100
    %v4102 = vadd.f32 %v4042, %v4044
    %4103 = vadd.xlane.f32.xlu0 %v4102
    %v4104 = vpop.xlane.xlu0 %4103
    %v4105 = vadd.f32 %v4046, %v4048
    %4106 = vadd.xlane.f32.xlu0 %v4105
    %v4107 = vpop.xlane.xlu0 %4106
    %v4108 = vadd.f32 %v4050, %v4052
    %4109 = vadd.xlane.f32.xlu0 %v4108
    %v4110 = vpop.xlane.xlu0 %4109
    %v4111 = vadd.f32 %v4054, %v4056
    %4112 = vadd.xlane.f32.xlu0 %v4111
    %v4113 = vpop.xlane.xlu0 %4112
    %v4114 = vadd.f32 %v4058, %v4060
    %4115 = vadd.xlane.f32.xlu0 %v4114
    %v4116 = vpop.xlane.xlu0 %4115
    %v4117 = vadd.f32 %v4062, %v4064
    %4118 = vadd.xlane.f32.xlu0 %v4117
    %v4119 = vpop.xlane.xlu0 %4118
    %v4120 = vadd.f32 %v4066, %v4068
    %4121 = vadd.xlane.f32.xlu0 %v4120
    %v4122 = vpop.xlane.xlu0 %4121
    %v4123 = vadd.f32 %v4070, %v4072
    %4124 = vadd.xlane.f32.xlu0 %v4123
    %v4125 = vpop.xlane.xlu0 %4124
    %v4126 = vadd.f32 %v4074, %v4076
    %4127 = vadd.xlane.f32.xlu0 %v4126
    %v4128 = vpop.xlane.xlu0 %4127
    %v4129 = vadd.f32 %v4078, %v4080
    %4130 = vadd.xlane.f32.xlu0 %v4129
    %v4131 = vpop.xlane.xlu0 %4130
    %v4132 = vadd.f32 %v4082, %v4084
    %4133 = vadd.xlane.f32.xlu0 %v4132
    %v4134 = vpop.xlane.xlu0 %4133
    %v4135 = vadd.f32 %v4086, %v4088
    %4136 = vadd.xlane.f32.xlu0 %v4135
    %v4137 = vpop.xlane.xlu0 %4136
    %v4138 = vadd.f32 %v4090, %v4092
    %4139 = vadd.xlane.f32.xlu0 %v4138
    %v4140 = vpop.xlane.xlu0 %4139
    %v4141 = vrcp.pop %v4095
    %v4142 = vrcp.pop %v4098
    %v4143 = vrcp.pop %v4101
    %v4144 = vrcp.pop %v4104
    %v4145 = vrcp.pop %v4107
    %v4146 = vrcp.pop %v4110
    %v4147 = vrcp.pop %v4113
    %v4148 = vrcp.pop %v4116
    %v4149 = vrcp.pop %v4119
    %v4150 = vrcp.pop %v4122
    %v4151 = vrcp.pop %v4125
    %v4152 = vrcp.pop %v4128
    %v4153 = vrcp.pop %v4131
    %v4154 = vrcp.pop %v4134
    %v4155 = vrcp.pop %v4137
    %v4156 = vrcp.pop %v4140
    %v4157 = vmul.f32 %v4030, %v4141
    %v4158 = vmul.f32 %v4032, %v4141
    %v4159 = vmul.f32 %v4034, %v4142
    %v4160 = vmul.f32 %v4036, %v4142
    %v4161 = vmul.f32 %v4038, %v4143
    %v4162 = vmul.f32 %v4040, %v4143
    %v4163 = vmul.f32 %v4042, %v4144
    %v4164 = vmul.f32 %v4044, %v4144
    %v4165 = vmul.f32 %v4046, %v4145
    %v4166 = vmul.f32 %v4048, %v4145
    %v4167 = vmul.f32 %v4050, %v4146
    %v4168 = vmul.f32 %v4052, %v4146
    %v4169 = vmul.f32 %v4054, %v4147
    %v4170 = vmul.f32 %v4056, %v4147
    %v4171 = vmul.f32 %v4058, %v4148
    %v4172 = vmul.f32 %v4060, %v4148
    %v4173 = vmul.f32 %v4062, %v4149
    %v4174 = vmul.f32 %v4064, %v4149
    %v4175 = vmul.f32 %v4066, %v4150
    %v4176 = vmul.f32 %v4068, %v4150
    %v4177 = vmul.f32 %v4070, %v4151
    %v4178 = vmul.f32 %v4072, %v4151
    %v4179 = vmul.f32 %v4074, %v4152
    %v4180 = vmul.f32 %v4076, %v4152
    %v4181 = vmul.f32 %v4078, %v4153
    %v4182 = vmul.f32 %v4080, %v4153
    %v4183 = vmul.f32 %v4082, %v4154
    %v4184 = vmul.f32 %v4084, %v4154
    %v4185 = vmul.f32 %v4086, %v4155
    %v4186 = vmul.f32 %v4088, %v4155
    %v4187 = vmul.f32 %v4090, %v4156
    %v4188 = vmul.f32 %v4092, %v4156
    %4189 = vst [vmem:[%s9] sm:$0xff] %v4157
    %4190 = vst [vmem:[%s9 + $0x8] sm:$0xff] %v4158
    %4191 = vst [vmem:[%s9 + $0x18] sm:$0xff] %v4159
    %4192 = vst [vmem:[%s9 + $0x20] sm:$0xff] %v4160
    %4193 = vst [vmem:[%s9 + $0x30] sm:$0xff] %v4161
    %4194 = vst [vmem:[%s9 + $0x38] sm:$0xff] %v4162
    %4195 = vst [vmem:[%s9 + $0x48] sm:$0xff] %v4163
    %4196 = vst [vmem:[%s9 + $0x50] sm:$0xff] %v4164
    %4197 = vst [vmem:[%s9 + $0x60] sm:$0xff] %v4165
    %4198 = vst [vmem:[%s9 + $0x68] sm:$0xff] %v4166
    %4199 = vst [vmem:[%s9 + $0x78] sm:$0xff] %v4167
    %4200 = vst [vmem:[%s9 + $0x80] sm:$0xff] %v4168
    %4201 = vst [vmem:[%s9 + $0x90] sm:$0xff] %v4169
    %4202 = vst [vmem:[%s9 + $0x98] sm:$0xff] %v4170
    %4203 = vst [vmem:[%s9 + $0xa8] sm:$0xff] %v4171
    %4204 = vst [vmem:[%s9 + $0xb0] sm:$0xff] %v4172
    %4205 = vst [vmem:[%s9 + $0xc0] sm:$0xff] %v4173
    %4206 = vst [vmem:[%s9 + $0xc8] sm:$0xff] %v4174
    %4207 = vst [vmem:[%s9 + $0xd8] sm:$0xff] %v4175
    %4208 = vst [vmem:[%s9 + $0xe0] sm:$0xff] %v4176
    %4209 = vst [vmem:[%s9 + $0xf0] sm:$0xff] %v4177
    %4210 = vst [vmem:[%s9 + $0xf8] sm:$0xff] %v4178
    %4211 = vst [vmem:[%s9 + $0x108] sm:$0xff] %v4179
    %4212 = vst [vmem:[%s9 + $0x110] sm:$0xff] %v4180
    %4213 = vst [vmem:[%s9 + $0x120] sm:$0xff] %v4181
    %4214 = vst [vmem:[%s9 + $0x128] sm:$0xff] %v4182
    %4215 = vst [vmem:[%s9 + $0x138] sm:$0xff] %v4183
    %4216 = vst [vmem:[%s9 + $0x140] sm:$0xff] %v4184
    %4217 = vst [vmem:[%s9 + $0x150] sm:$0xff] %v4185
    %4218 = vst [vmem:[%s9 + $0x158] sm:$0xff] %v4186
    %4219 = vst [vmem:[%s9 + $0x168] sm:$0xff] %v4187
    %4220 = vst [vmem:[%s9 + $0x170] sm:$0xff] %v4188
    %v4221 = vtanh.pop %v3887
    %v4222 = vtanh.pop %v3890
    %v4223 = vtanh.pop %v3895
    %v4224 = vtanh.pop %v3898
    %v4225 = vtanh.pop %v3903
    %v4226 = vtanh.pop %v3906
    %v4227 = vtanh.pop %v3911
    %v4228 = vtanh.pop %v3914
    %v4229 = vtanh.pop %v3919
    %v4230 = vtanh.pop %v3922
    %v4231 = vtanh.pop %v3927
    %v4232 = vtanh.pop %v3930
    %v4233 = vtanh.pop %v3935
    %v4234 = vtanh.pop %v3938
    %v4235 = vtanh.pop %v3943
    %v4236 = vtanh.pop %v3946
    %4237 = vst [vmem:[%s9 + $0x10] sm:$0xff] %v4221
    %4238 = vst [vmem:[%s9 + $0x28] sm:$0xff] %v4222
    %4239 = vst [vmem:[%s9 + $0x40] sm:$0xff] %v4223
    %4240 = vst [vmem:[%s9 + $0x58] sm:$0xff] %v4224
    %4241 = vst [vmem:[%s9 + $0x70] sm:$0xff] %v4225
    %4242 = vst [vmem:[%s9 + $0x88] sm:$0xff] %v4226
    %4243 = vst [vmem:[%s9 + $0xa0] sm:$0xff] %v4227
    %4244 = vst [vmem:[%s9 + $0xb8] sm:$0xff] %v4228
    %4245 = vst [vmem:[%s9 + $0xd0] sm:$0xff] %v4229
    %4246 = vst [vmem:[%s9 + $0xe8] sm:$0xff] %v4230
    %4247 = vst [vmem:[%s9 + $0x100] sm:$0xff] %v4231
    %4248 = vst [vmem:[%s9 + $0x118] sm:$0xff] %v4232
    %4249 = vst [vmem:[%s9 + $0x130] sm:$0xff] %v4233
    %4250 = vst [vmem:[%s9 + $0x148] sm:$0xff] %v4234
    %4251 = vst [vmem:[%s9 + $0x160] sm:$0xff] %v4235
    %4252 = vst [vmem:[%s9 + $0x178] sm:$0xff] %v4236
    // Predicated region
    $region54: #{giraffe_forward.1} parent=1 // pred_check
      _
    $region55: #{giraffe_forward.1} parent=1 // pred_check_branch
      %4254 = sbr.rel (0) target = $region57
    $region56: #{giraffe_forward.1} parent=1 // pred_region
      _
    $region57: #{giraffe_forward.1} parent=1 // pred_fallthru
      _
    // Predicated region
    $region58: #{giraffe_forward.1} parent=1 // pred_check
      _
    $region59: #{giraffe_forward.1} parent=1 // pred_check_branch
      %4256 = sbr.rel (0) target = $region61
    $region60: #{giraffe_forward.1} parent=1 // pred_region
      _
    $region61: #{giraffe_forward.1} parent=1 // pred_fallthru
      _
    %4257 = vsyncpa [#allocation3], 1
    %4258 = vsyncpa [#allocation5], 1
    %4259 = vsyncpa [#allocation8], 1

</llo_original>
